<compile_context>
chip_gen: v7x
topology: tpu7x:2x2x1
jax: 0.10.0
libtpu: 0.0.40
codegen_flags: <defaults>
</compile_context>

<pallas_src>
import jax
import jax.numpy as jnp
from jax.experimental import pallas as pl
from jax.experimental.pallas import tpu as pltpu


def final_conv_kernel(x_ref, w1_ref, b1_ref, w2_ref, b2_ref, o_ref):
    # x_ref: (1, C, tl) input tile.  w*_ref: (C, C) resident weights (bf16/f32).
    # b*_ref: (C, 1) f32.  o_ref: (1, C, tl).
    # relu + cast in the MXU input dtype (exact: rounding commutes with max-vs-0).
    x = jnp.maximum(x_ref[0].astype(w1_ref.dtype), 0)
    h = jnp.dot(w1_ref[...], x, preferred_element_type=jnp.float32)      # conv1
    h = jnp.maximum(h + b1_ref[...], 0.0).astype(w2_ref.dtype)           # bias+relu
    y = jnp.dot(w2_ref[...], h, preferred_element_type=jnp.float32)      # conv2
    y = y + b2_ref[...]
    # Softmax over channels == sublane axis (axis 0 of the (C, tl) tile).
    y = y - jnp.max(y, axis=0, keepdims=True)
    e = jnp.exp(y)
    inv = 1.0 / jnp.sum(e, axis=0, keepdims=True)   # exact divide: cols sum to 1
    o_ref[0] = (e * inv).astype(o_ref.dtype)


def final_conv(x_ncl, w1, b1, w2, b2, *, tl=None, use_bf16=True, out_dtype=None):
    """x_ncl: (N, C, L).  w1,w2: (C_out, C_in) Conv1d(k=1) weights.  b1,b2: (C,)."""
    N, C, L = x_ncl.shape
    if tl is None:
        # Largest lane tile (multiple of 128, <= 1024) not exceeding L; if L is
        # tiny just take the full extent as a single block.
        tl = min(1024, (L // 128) * 128) if L >= 128 else L
    out_dtype = x_ncl.dtype if out_dtype is None else out_dtype

    wdt = jnp.bfloat16 if use_bf16 else jnp.float32
    w1p = w1.astype(wdt)
    w2p = w2.astype(wdt)
    b1r = b1.reshape(C, 1).astype(jnp.float32)
    b2r = b2.reshape(C, 1).astype(jnp.float32)

    wbytes = 2 if use_bf16 else 4
    obytes = jnp.dtype(out_dtype).itemsize
    cost = pl.CostEstimate(
        flops=4 * N * L * C * C,                       # two (C,C)x(C,tl) matmuls
        transcendentals=N * L * C,                     # exp in the softmax
        bytes_accessed=N * L * C * (4 + obytes) + 2 * C * C * wbytes + 2 * C * 4,
    )

    # Generous scoped-VMEM budget (double-buffered in/out tiles + intermediates
    # + resident weights), floored at 32 MiB, capped at 64 MiB (v7x physical).
    tile_bytes = C * tl * 4
    vmem_est = 12 * tile_bytes + 4 * C * C * wbytes + (1 << 20)
    vmem_limit = min(max(vmem_est, 32 * 1024 * 1024), 64 * 1024 * 1024)

    return pl.pallas_call(
        final_conv_kernel,
        out_shape=jax.ShapeDtypeStruct((N, C, L), out_dtype),
        grid_spec=pltpu.PrefetchScalarGridSpec(
            num_scalar_prefetch=0,
            grid=(N, pl.cdiv(L, tl)),                  # ragged last tile is masked
            in_specs=[
                pl.BlockSpec((1, C, tl), lambda n, l: (n, 0, l)),   # x tile
                pl.BlockSpec((C, C), lambda n, l: (0, 0)),          # W1 (resident)
                pl.BlockSpec((C, 1), lambda n, l: (0, 0)),          # b1
                pl.BlockSpec((C, C), lambda n, l: (0, 0)),          # W2 (resident)
                pl.BlockSpec((C, 1), lambda n, l: (0, 0)),          # b2
            ],
            out_specs=pl.BlockSpec((1, C, tl), lambda n, l: (n, 0, l)),
        ),
        compiler_params=pltpu.CompilerParams(
            dimension_semantics=("parallel", "parallel"),
            vmem_limit_bytes=vmem_limit,
        ),
        cost_estimate=cost,
    )(x_ncl, w1p, b1r, w2p, b2r)


def _reference(x_ncl, w1, b1, w2, b2):
    x = jnp.maximum(x_ncl, 0.0)
    h = jnp.einsum("oc,ncl->nol", w1, x) + b1[None, :, None]
    h = jnp.maximum(h, 0.0)
    y = jnp.einsum("oc,ncl->nol", w2, h) + b2[None, :, None]
    return jax.nn.softmax(y, axis=1)


if __name__ == "__main__":
    key = jax.random.PRNGKey(0)
    k_x, k_w1, k_b1, k_w2, k_b2 = jax.random.split(key, 5)

    # Small shapes consistent with FinalConv(channels=C) on (N, C, L).
    # L deliberately NOT a multiple of the lane tile -> exercises the masked
    # ragged edge block (no wrapper pad/slice).
    N, C, L = 2, 128, 600
    x = jax.random.normal(k_x, (N, C, L), dtype=jnp.float32)

    # Conv1d(channels, channels, 1) params: weight (C_out, C_in), bias (C,).
    bound = 1.0 / jnp.sqrt(C)
    w1 = jax.random.uniform(k_w1, (C, C), minval=-bound, maxval=bound, dtype=jnp.float32)
    b1 = jax.random.uniform(k_b1, (C,), minval=-bound, maxval=bound, dtype=jnp.float32)
    w2 = jax.random.uniform(k_w2, (C, C), minval=-bound, maxval=bound, dtype=jnp.float32)
    b2 = jax.random.uniform(k_b2, (C,), minval=-bound, maxval=bound, dtype=jnp.float32)

    out = final_conv(x, w1, b1, w2, b2, use_bf16=True)   # tl auto-picked (512 here)
    out = jax.block_until_ready(out)

    ref = _reference(x, w1, b1, w2, b2)
    assert out.shape == (N, C, L)
    # bf16 MXU inputs loosen tolerance vs the f32 reference.
    assert jnp.allclose(out, ref, atol=2e-3, rtol=2e-3)
    # Sanity: softmax columns sum to 1 (exact divide -> tight).
    assert jnp.allclose(jnp.sum(out, axis=1), 1.0, atol=1e-3)
    print("KERNEL_OK")
</pallas_src>

<mosaic_0001>
module attributes {stable_mosaic.version = 11 : i64} {
  func.func @final_conv_kernel(%arg0: i32, %arg1: i32, %arg2: memref<1x128x512xf32, #tpu.memory_space<vmem>>, %arg3: memref<128x128xbf16, #tpu.memory_space<vmem>>, %arg4: memref<128x1xf32, #tpu.memory_space<vmem>>, %arg5: memref<128x128xbf16, #tpu.memory_space<vmem>>, %arg6: memref<128x1xf32, #tpu.memory_space<vmem>>, %arg7: memref<1x128x512xf32, #tpu.memory_space<vmem>>) attributes {dimension_semantics = [#tpu.dimension_semantics<parallel>, #tpu.dimension_semantics<parallel>], iteration_bounds = array<i64: 2, 2>, scalar_prefetch = 0 : i64, scratch_operands = 0 : i64, tpu.core_type = #tpu.core_type<tc>, window_params = [{transform_indices = @transform_0, window_bounds = array<i64: 1, 128, 512>}, {pipeline_mode = #tpu.pipeline_mode<synchronous>, transform_indices = @transform_1, window_bounds = array<i64: 128, 128>}, {pipeline_mode = #tpu.pipeline_mode<synchronous>, transform_indices = @transform_2, window_bounds = array<i64: 128, 1>}, {pipeline_mode = #tpu.pipeline_mode<synchronous>, transform_indices = @transform_3, window_bounds = array<i64: 128, 128>}, {pipeline_mode = #tpu.pipeline_mode<synchronous>, transform_indices = @transform_4, window_bounds = array<i64: 128, 1>}, {transform_indices = @transform_5, window_bounds = array<i64: 1, 128, 512>}]} {
    %c0 = arith.constant 0 : index
    %c0_0 = arith.constant 0 : index
    %c0_1 = arith.constant 0 : index
    %0 = vector.load %arg2[%c0, %c0_0, %c0_1] : memref<1x128x512xf32, #tpu.memory_space<vmem>>, vector<1x128x512xf32>
    %1 = vector.shape_cast %0 : vector<1x128x512xf32> to vector<128x512xf32>
    %2 = arith.truncf %1 : vector<128x512xf32> to vector<128x512xbf16>
    %cst = arith.constant 0.000000e+00 : bf16
    %3 = vector.broadcast %cst : bf16 to vector<128x512xbf16>
    %4 = arith.maximumf %2, %3 : vector<128x512xbf16>
    %c0_2 = arith.constant 0 : index
    %c0_3 = arith.constant 0 : index
    %5 = vector.load %arg3[%c0_2, %c0_3] : memref<128x128xbf16, #tpu.memory_space<vmem>>, vector<128x128xbf16>
    %cst_4 = arith.constant dense<0.000000e+00> : vector<128x512xf32>
    %6 = tpu.matmul %5, %4, %cst_4 {dimension_numbers = #tpu.dot_dimension_numbers<[1], [0], [0], [1], [0, 0, 1, 1], [], []>} : vector<128x128xbf16>, vector<128x512xbf16>, vector<128x512xf32> -> vector<128x512xf32>
    %c0_5 = arith.constant 0 : index
    %c0_6 = arith.constant 0 : index
    %7 = vector.load %arg4[%c0_5, %c0_6] : memref<128x1xf32, #tpu.memory_space<vmem>>, vector<128x1xf32>
    %8 = vector.broadcast %7 : vector<128x1xf32> to vector<128x512xf32>
    %9 = arith.addf %6, %8 : vector<128x512xf32>
    %cst_7 = arith.constant 0.000000e+00 : f32
    %10 = vector.broadcast %cst_7 : f32 to vector<128x512xf32>
    %11 = arith.maximumf %9, %10 : vector<128x512xf32>
    %12 = arith.truncf %11 : vector<128x512xf32> to vector<128x512xbf16>
    %c0_8 = arith.constant 0 : index
    %c0_9 = arith.constant 0 : index
    %13 = vector.load %arg5[%c0_8, %c0_9] : memref<128x128xbf16, #tpu.memory_space<vmem>>, vector<128x128xbf16>
    %cst_10 = arith.constant dense<0.000000e+00> : vector<128x512xf32>
    %14 = tpu.matmul %13, %12, %cst_10 {dimension_numbers = #tpu.dot_dimension_numbers<[1], [0], [0], [1], [0, 0, 1, 1], [], []>} : vector<128x128xbf16>, vector<128x512xbf16>, vector<128x512xf32> -> vector<128x512xf32>
    %c0_11 = arith.constant 0 : index
    %c0_12 = arith.constant 0 : index
    %15 = vector.load %arg6[%c0_11, %c0_12] : memref<128x1xf32, #tpu.memory_space<vmem>>, vector<128x1xf32>
    %16 = vector.broadcast %15 : vector<128x1xf32> to vector<128x512xf32>
    %17 = arith.addf %14, %16 : vector<128x512xf32>
    %cst_13 = arith.constant dense<0xFF800000> : vector<512xf32>
    %18 = vector.multi_reduction <maximumf>, %17, %cst_13 [0] : vector<128x512xf32> to vector<512xf32>
    %19 = vector.shape_cast %18 : vector<512xf32> to vector<1x512xf32>
    %20 = vector.broadcast %19 : vector<1x512xf32> to vector<128x512xf32>
    %21 = arith.subf %17, %20 : vector<128x512xf32>
    %22 = math.exp %21 : vector<128x512xf32>
    %cst_14 = arith.constant dense<0.000000e+00> : vector<512xf32>
    %23 = vector.multi_reduction <add>, %22, %cst_14 [0] : vector<128x512xf32> to vector<512xf32>
    %24 = vector.shape_cast %23 : vector<512xf32> to vector<1x512xf32>
    %cst_15 = arith.constant 1.000000e+00 : f32
    %25 = vector.broadcast %cst_15 : f32 to vector<1x512xf32>
    %26 = arith.divf %25, %24 : vector<1x512xf32>
    %27 = vector.broadcast %26 : vector<1x512xf32> to vector<128x512xf32>
    %28 = arith.mulf %22, %27 : vector<128x512xf32>
    %c0_16 = arith.constant 0 : index
    %c0_17 = arith.constant 0 : index
    %c0_18 = arith.constant 0 : index
    %29 = vector.load %arg7[%c0_16, %c0_17, %c0_18] : memref<1x128x512xf32, #tpu.memory_space<vmem>>, vector<1x128x512xf32>
    %30 = vector.shape_cast %29 : vector<1x128x512xf32> to vector<128x512xf32>
    %31 = vector.shape_cast %28 : vector<128x512xf32> to vector<1x128x512xf32>
    tpu.vector_store %arg7[%c0_16, %c0_17, %c0_18], %31 {strides = array<i32>} : memref<1x128x512xf32, #tpu.memory_space<vmem>>, vector<1x128x512xf32>,
    return
  }
  func.func @transform_0(%arg0: i32, %arg1: i32) -> (i32, i32, i32) {
    %c0_i32 = arith.constant 0 : i32
    %c0_i32_0 = arith.constant 0 : i32
    return %arg0, %c0_i32, %arg1 : i32, i32, i32
  }
  func.func @transform_1(%arg0: i32, %arg1: i32) -> (i32, i32) {
    %c0_i32 = arith.constant 0 : i32
    %c0_i32_0 = arith.constant 0 : i32
    %c0_i32_1 = arith.constant 0 : i32
    return %c0_i32, %c0_i32_0 : i32, i32
  }
  func.func @transform_2(%arg0: i32, %arg1: i32) -> (i32, i32) {
    %c0_i32 = arith.constant 0 : i32
    %c0_i32_0 = arith.constant 0 : i32
    %c0_i32_1 = arith.constant 0 : i32
    return %c0_i32, %c0_i32_0 : i32, i32
  }
  func.func @transform_3(%arg0: i32, %arg1: i32) -> (i32, i32) {
    %c0_i32 = arith.constant 0 : i32
    %c0_i32_0 = arith.constant 0 : i32
    %c0_i32_1 = arith.constant 0 : i32
    return %c0_i32, %c0_i32_0 : i32, i32
  }
  func.func @transform_4(%arg0: i32, %arg1: i32) -> (i32, i32) {
    %c0_i32 = arith.constant 0 : i32
    %c0_i32_0 = arith.constant 0 : i32
    %c0_i32_1 = arith.constant 0 : i32
    return %c0_i32, %c0_i32_0 : i32, i32
  }
  func.func @transform_5(%arg0: i32, %arg1: i32) -> (i32, i32, i32) {
    %c0_i32 = arith.constant 0 : i32
    %c0_i32_0 = arith.constant 0 : i32
    return %arg0, %c0_i32, %arg1 : i32, i32, i32
  }
}

</mosaic_0001>

<llo_original>
// kernel: tpu_custom_call.1
$region0: #{tpu_custom_call.1}
  #allocation0 [shape = 'u32[]', space=smem, size = 0x4, offset = 0x4, fixed_abs, tag = 'smem constant byte address 0x4 - core index']
  #allocation1 [shape = 'u32[144,128]{1,0:T(1,128)}', space=vmem, size = 0x12000, scoped, tag = 'internal scratch']
  %s0 = inlined_call_operand.vmem [shape: f32[2,128,600], index: 0, kind: input, shape index: {}]
  %s1 = inlined_call_operand.vmem [shape: bf16[128,128], index: 1, kind: input, shape index: {}]
  %s2 = inlined_call_operand.vmem [shape: f32[128,1], index: 2, kind: input, shape index: {}]
  %s3 = inlined_call_operand.vmem [shape: bf16[128,128], index: 3, kind: input, shape index: {}]
  %s4 = inlined_call_operand.vmem [shape: f32[128,1], index: 4, kind: input, shape index: {}]
  %s5 = inlined_call_operand.vmem [shape: f32[2,128,600], index: 5, kind: output, shape index: {}]
  %s6 = sld [smem:[#allocation0]]
  $region181: #{tpu_custom_call.1} parent=0
    _
  %s8 = ssub.s32 1, %s6
  %s9 = scalar_select 0, %s8, %s6
  $region1: #{tpu_custom_call.1} parent=0
    #allocation2 [shape = 'u8[524288]{0}', space=vmem, size = 0x80000, scoped, tag = 'input window, operand 0']
    #allocation3 [shape = 'u8[524288]{0}', space=vmem, size = 0x80000, scoped, tag = 'output window, operand 0']
    loop: start=0, step=1, limit=6
    $region2: #{tpu_custom_call.1} parent=1 // loop_pre_header
      _
    $region3: #{tpu_custom_call.1} parent=1 // loop_header
      %s11 = sphi 0, %s15
      %p12 = scmp.ge.s32.totalorder %s11, 6
      %s18 = sphi 0, %s30
      %s19 = sphi 0, %s26
      %s20 = sphi 0, %s18
      %s21 = sphi 0, %s19
      %s22 = sphi 0, %s20
      %s23 = sphi 0, %s21
      %s35 = sphi 0, %s37
      %s38 = sphi 0, %s35
      %s39 = sphi 0, %s38
      %s55 = sphi 0, %s39
      %s59 = sphi 0, %s59
      %s61 = sphi 0, %s59
      %s62 = sphi 0, %s61
      %s76 = sphi 0, %s62
      %s80 = sphi 0, %s80
      %s82 = sphi 0, %s80
      %s83 = sphi 0, %s82
      %s97 = sphi 0, %s83
      %s101 = sphi 0, %s101
      %s103 = sphi 0, %s101
      %s104 = sphi 0, %s103
      %s118 = sphi 0, %s104
      %s122 = sphi 0, %s122
      %s124 = sphi 0, %s122
      %s125 = sphi 0, %s124
      %s139 = sphi 0, %s125
      %s147 = sphi 0, %s149
      %s150 = sphi 0, %s147
      %s151 = sphi 0, %s150
      %s167 = sphi 0, %s151
    $region4: #{tpu_custom_call.1} parent=1 // loop_header_branch
      %14 = sbr.rel (%p12) target = $region8
    $region5: #{tpu_custom_call.1} parent=1 // loop_body
      %s16 = ssub.s32 %s11, 1
      %s17 = ssub.s32 %s11, 2
      %s24 = sadd.s32 1, %s19
      %p25 = scmp.ge.s32.totalorder %s24, 2
      %s26 = scalar_select %p25, 0, %s24
      %s27 = sadd.s32 1, %s18
      %s28 = scalar_select %p25, %s27, %s18
      %p29 = scmp.ge.s32.totalorder %s28, 2
      %s30 = scalar_select %p29, 0, %s28
      %s31 = ssub.s32 %s18, %s30
      %s32 = ssub.s32 %s19, %s26
      %s33 = sor.u32 %s31, %s32
      %p34 = scmp.eq.s32.totalorder %s33, 0
      %s36 = sadd.s32 %s35, 1
      %s37 = scalar_select %p34, %s35, %s36
      %p40 = pneg %p34
      %p41 = scmp.eq.s32.totalorder %s11, 3
      %p42 = por %p40, %p41
      %p43 = scmp.ne.s32.totalorder %s35, %s38
      %p44 = scmp.eq.s32.totalorder %s11, 0
      %p45 = por %p43, %p44
      %p46 = scmp.ne.s32.totalorder %s35, %s38
      %p47 = scmp.eq.s32.totalorder %s16, 3
      %p48 = por %p46, %p47
      %p49 = scmp.ne.s32.totalorder %s38, %s39
      %p50 = scmp.eq.s32.totalorder %s16, 0
      %p51 = por %p49, %p50
      %p52 = scmp.ne.s32.totalorder %s38, %s39
      %p53 = scmp.eq.s32.totalorder %s17, 3
      %p54 = por %p52, %p53
      %p56 = scmp.ne.s32.totalorder %s39, %s55
      %p57 = scmp.eq.s32.totalorder %s17, 0
      %p58 = por %p56, %p57
      %s60 = sadd.s32 %s59, 1
      %p63 = scmp.eq.s32.totalorder %s11, 3
      %p64 = scmp.ne.s32.totalorder %s59, %s61
      %p65 = scmp.eq.s32.totalorder %s11, 0
      %p66 = por %p64, %p65
      %p67 = scmp.ne.s32.totalorder %s59, %s61
      %p68 = scmp.eq.s32.totalorder %s16, 3
      %p69 = por %p67, %p68
      %p70 = scmp.ne.s32.totalorder %s61, %s62
      %p71 = scmp.eq.s32.totalorder %s16, 0
      %p72 = por %p70, %p71
      %p73 = scmp.ne.s32.totalorder %s61, %s62
      %p74 = scmp.eq.s32.totalorder %s17, 3
      %p75 = por %p73, %p74
      %p77 = scmp.ne.s32.totalorder %s62, %s76
      %p78 = scmp.eq.s32.totalorder %s17, 0
      %p79 = por %p77, %p78
      %s81 = sadd.s32 %s80, 1
      %p84 = scmp.eq.s32.totalorder %s11, 3
      %p85 = scmp.ne.s32.totalorder %s80, %s82
      %p86 = scmp.eq.s32.totalorder %s11, 0
      %p87 = por %p85, %p86
      %p88 = scmp.ne.s32.totalorder %s80, %s82
      %p89 = scmp.eq.s32.totalorder %s16, 3
      %p90 = por %p88, %p89
      %p91 = scmp.ne.s32.totalorder %s82, %s83
      %p92 = scmp.eq.s32.totalorder %s16, 0
      %p93 = por %p91, %p92
      %p94 = scmp.ne.s32.totalorder %s82, %s83
      %p95 = scmp.eq.s32.totalorder %s17, 3
      %p96 = por %p94, %p95
      %p98 = scmp.ne.s32.totalorder %s83, %s97
      %p99 = scmp.eq.s32.totalorder %s17, 0
      %p100 = por %p98, %p99
      %s102 = sadd.s32 %s101, 1
      %p105 = scmp.eq.s32.totalorder %s11, 3
      %p106 = scmp.ne.s32.totalorder %s101, %s103
      %p107 = scmp.eq.s32.totalorder %s11, 0
      %p108 = por %p106, %p107
      %p109 = scmp.ne.s32.totalorder %s101, %s103
      %p110 = scmp.eq.s32.totalorder %s16, 3
      %p111 = por %p109, %p110
      %p112 = scmp.ne.s32.totalorder %s103, %s104
      %p113 = scmp.eq.s32.totalorder %s16, 0
      %p114 = por %p112, %p113
      %p115 = scmp.ne.s32.totalorder %s103, %s104
      %p116 = scmp.eq.s32.totalorder %s17, 3
      %p117 = por %p115, %p116
      %p119 = scmp.ne.s32.totalorder %s104, %s118
      %p120 = scmp.eq.s32.totalorder %s17, 0
      %p121 = por %p119, %p120
      %s123 = sadd.s32 %s122, 1
      %p126 = scmp.eq.s32.totalorder %s11, 3
      %p127 = scmp.ne.s32.totalorder %s122, %s124
      %p128 = scmp.eq.s32.totalorder %s11, 0
      %p129 = por %p127, %p128
      %p130 = scmp.ne.s32.totalorder %s122, %s124
      %p131 = scmp.eq.s32.totalorder %s16, 3
      %p132 = por %p130, %p131
      %p133 = scmp.ne.s32.totalorder %s124, %s125
      %p134 = scmp.eq.s32.totalorder %s16, 0
      %p135 = por %p133, %p134
      %p136 = scmp.ne.s32.totalorder %s124, %s125
      %p137 = scmp.eq.s32.totalorder %s17, 3
      %p138 = por %p136, %p137
      %p140 = scmp.ne.s32.totalorder %s125, %s139
      %p141 = scmp.eq.s32.totalorder %s17, 0
      %p142 = por %p140, %p141
      %s143 = ssub.s32 %s18, %s30
      %s144 = ssub.s32 %s19, %s26
      %s145 = sor.u32 %s143, %s144
      %p146 = scmp.eq.s32.totalorder %s145, 0
      %s148 = sadd.s32 %s147, 1
      %s149 = scalar_select %p146, %s147, %s148
      %p152 = pneg %p146
      %p153 = scmp.eq.s32.totalorder %s11, 3
      %p154 = por %p152, %p153
      %p155 = scmp.ne.s32.totalorder %s147, %s150
      %p156 = scmp.eq.s32.totalorder %s11, 0
      %p157 = por %p155, %p156
      %p158 = scmp.ne.s32.totalorder %s147, %s150
      %p159 = scmp.eq.s32.totalorder %s16, 3
      %p160 = por %p158, %p159
      %p161 = scmp.ne.s32.totalorder %s150, %s151
      %p162 = scmp.eq.s32.totalorder %s16, 0
      %p163 = por %p161, %p162
      %p164 = scmp.ne.s32.totalorder %s150, %s151
      %p165 = scmp.eq.s32.totalorder %s17, 3
      %p166 = por %p164, %p165
      %p168 = scmp.ne.s32.totalorder %s151, %s167
      %p169 = scmp.eq.s32.totalorder %s17, 0
      %p170 = por %p168, %p169
      %p171 = scmp.le.s32.totalorder 1, %s11
      %p172 = scmp.lt.s32.totalorder %s11, 5
      %p173 = pnand %p171, %p172
      %p174 = pneg %p173
      // Predicated region
      $region9: #{tpu_custom_call.1} parent=5 // pred_check
        _
      $region10: #{tpu_custom_call.1} parent=5 // pred_check_branch
        %176 = sbr.rel (%p173) target = $region12
      $region11: #{tpu_custom_call.1} parent=5 // pred_region
        %s177 = ssub.s32 %s11, 1
        // Predicated region
        $region13: #{tpu_custom_call.1} parent=11 // pred_check
          %p178 = pneg %p72
        $region14: #{tpu_custom_call.1} parent=11 // pred_check_branch
          %180 = sbr.rel (%p178) target = $region16
        $region15: #{tpu_custom_call.1} parent=11 // pred_region
          _
        $region16: #{tpu_custom_call.1} parent=11 // pred_fallthru
          _
        // Predicated region
        $region17: #{tpu_custom_call.1} parent=11 // pred_check
          %p181 = pneg %p93
        $region18: #{tpu_custom_call.1} parent=11 // pred_check_branch
          %183 = sbr.rel (%p181) target = $region20
        $region19: #{tpu_custom_call.1} parent=11 // pred_region
          _
        $region20: #{tpu_custom_call.1} parent=11 // pred_fallthru
          _
        // Predicated region
        $region21: #{tpu_custom_call.1} parent=11 // pred_check
          %p184 = pneg %p114
        $region22: #{tpu_custom_call.1} parent=11 // pred_check_branch
          %186 = sbr.rel (%p184) target = $region24
        $region23: #{tpu_custom_call.1} parent=11 // pred_region
          _
        $region24: #{tpu_custom_call.1} parent=11 // pred_fallthru
          _
        // Predicated region
        $region25: #{tpu_custom_call.1} parent=11 // pred_check
          %p187 = pneg %p135
        $region26: #{tpu_custom_call.1} parent=11 // pred_check_branch
          %189 = sbr.rel (%p187) target = $region28
        $region27: #{tpu_custom_call.1} parent=11 // pred_region
          _
        $region28: #{tpu_custom_call.1} parent=11 // pred_fallthru
          _
      $region12: #{tpu_custom_call.1} parent=5 // pred_fallthru
        _
      %p190 = scmp.lt.s32.totalorder %s11, 4
      // Predicated region
      $region29: #{tpu_custom_call.1} parent=5 // pred_check
        %p191 = pneg %p190
      $region30: #{tpu_custom_call.1} parent=5 // pred_check_branch
        %193 = sbr.rel (%p191) target = $region32
      $region31: #{tpu_custom_call.1} parent=5 // pred_region
        // Predicated region
        $region33: #{tpu_custom_call.1} parent=31 // pred_check
          %p194 = pneg %p45
        $region34: #{tpu_custom_call.1} parent=31 // pred_check_branch
          %196 = sbr.rel (%p194) target = $region36
        $region35: #{tpu_custom_call.1} parent=31 // pred_region
          %s197 = sand.u32 %s35, 1
          %s198 = sand.u32 %s35, 1
          %s199 = smul.addr %s198, 512
          %s200 = scalar_lea.vmem [#allocation2], %s199
          %s201 = smul.u32 4, %s19
          %s202 = ssub.s32 5, %s201
          %p203 = scmp.lt.s32.totalorder %s202, 4
          %s204 = scalar_select %p203, %s202, 4
          %s205 = smul.u32 2048, %s204
          %p206 = scmp.ne.s32.totalorder 0, %s205
          %s207 = smul.addr %s18, 80
          %s208 = sadd.s32 %s201, %s207
          %s209 = smul.addr %s208, 8
          %s210 = scalar_lea.vmem %s0, %s209
          %s211 = smul.u32 %s204, 8
          // Predicated region
          $region37: #{tpu_custom_call.1} parent=35 // pred_check
            %p212 = pneg %p206
          $region38: #{tpu_custom_call.1} parent=35 // pred_check_branch
            %214 = sbr.rel (%p212) target = $region40
          $region39: #{tpu_custom_call.1} parent=35 // pred_region
            %p215 = scmp.lt.u32.totalorder %s211, 8
            %p216 = pneg %p215
            // Predicated region
            $region41: #{tpu_custom_call.1} parent=39 // pred_check
              _
            $region42: #{tpu_custom_call.1} parent=39 // pred_check_branch
              %218 = sbr.rel (%p215) target = $region44
            $region43: #{tpu_custom_call.1} parent=39 // pred_region
              %s263 = sand.u32 %s211, 7
              %p264 = scmp.eq.s32.totalorder %s263, 0
              // Predicated region
              $region56: #{tpu_custom_call.1} parent=43 // pred_check
                %p265 = pneg %p264
              $region57: #{tpu_custom_call.1} parent=43 // pred_check_branch
                %267 = sbr.rel (%p265) target = $region59
              $region58: #{tpu_custom_call.1} parent=43 // pred_region
                %s268 = sshrl.u32 %s211, 3
                %s269 = sshrl.u32 %s268, 2
                // While loop
                $region60: #{tpu_custom_call.1} parent=58 // loop_pre_header
                  _
                $region61: #{tpu_custom_call.1} parent=58 // loop_header
                  %s273 = sphi 0, %s275
                  %p274 = scmp.ge.s32.totalorder %s273, %s269
                  %s278 = sphi 0, %s411
                  %s279 = sphi %s210, %s414
                  %s280 = sphi %s200, %s415
                $region62: #{tpu_custom_call.1} parent=58 // loop_header_branch
                  %277 = sbr.rel (%p274) target = $region66
                $region63: #{tpu_custom_call.1} parent=58 // loop_body
                  %v281 = vld [vmem:[%s279] sm:$0xff]
                  %282 = vst [vmem:[%s280] sm:$0xff] %v281
                  %v283 = vld [vmem:[%s279 + $0x8] sm:$0xff]
                  %284 = vst [vmem:[%s280 + $0x8] sm:$0xff] %v283
                  %v285 = vld [vmem:[%s279 + $0x10] sm:$0xff]
                  %286 = vst [vmem:[%s280 + $0x10] sm:$0xff] %v285
                  %v287 = vld [vmem:[%s279 + $0x18] sm:$0xff]
                  %288 = vst [vmem:[%s280 + $0x18] sm:$0xff] %v287
                  %v289 = vld [vmem:[%s279 + $0x28] sm:$0xff]
                  %290 = vst [vmem:[%s280 + $0x20] sm:$0xff] %v289
                  %v291 = vld [vmem:[%s279 + $0x30] sm:$0xff]
                  %292 = vst [vmem:[%s280 + $0x28] sm:$0xff] %v291
                  %v293 = vld [vmem:[%s279 + $0x38] sm:$0xff]
                  %294 = vst [vmem:[%s280 + $0x30] sm:$0xff] %v293
                  %v295 = vld [vmem:[%s279 + $0x40] sm:$0xff]
                  %296 = vst [vmem:[%s280 + $0x38] sm:$0xff] %v295
                  %v297 = vld [vmem:[%s279 + $0x50] sm:$0xff]
                  %298 = vst [vmem:[%s280 + $0x40] sm:$0xff] %v297
                  %v299 = vld [vmem:[%s279 + $0x58] sm:$0xff]
                  %300 = vst [vmem:[%s280 + $0x48] sm:$0xff] %v299
                  %v301 = vld [vmem:[%s279 + $0x60] sm:$0xff]
                  %302 = vst [vmem:[%s280 + $0x50] sm:$0xff] %v301
                  %v303 = vld [vmem:[%s279 + $0x68] sm:$0xff]
                  %304 = vst [vmem:[%s280 + $0x58] sm:$0xff] %v303
                  %v305 = vld [vmem:[%s279 + $0x78] sm:$0xff]
                  %306 = vst [vmem:[%s280 + $0x60] sm:$0xff] %v305
                  %v307 = vld [vmem:[%s279 + $0x80] sm:$0xff]
                  %308 = vst [vmem:[%s280 + $0x68] sm:$0xff] %v307
                  %v309 = vld [vmem:[%s279 + $0x88] sm:$0xff]
                  %310 = vst [vmem:[%s280 + $0x70] sm:$0xff] %v309
                  %v311 = vld [vmem:[%s279 + $0x90] sm:$0xff]
                  %312 = vst [vmem:[%s280 + $0x78] sm:$0xff] %v311
                  %v313 = vld [vmem:[%s279 + $0xa0] sm:$0xff]
                  %314 = vst [vmem:[%s280 + $0x80] sm:$0xff] %v313
                  %v315 = vld [vmem:[%s279 + $0xa8] sm:$0xff]
                  %316 = vst [vmem:[%s280 + $0x88] sm:$0xff] %v315
                  %v317 = vld [vmem:[%s279 + $0xb0] sm:$0xff]
                  %318 = vst [vmem:[%s280 + $0x90] sm:$0xff] %v317
                  %v319 = vld [vmem:[%s279 + $0xb8] sm:$0xff]
                  %320 = vst [vmem:[%s280 + $0x98] sm:$0xff] %v319
                  %v321 = vld [vmem:[%s279 + $0xc8] sm:$0xff]
                  %322 = vst [vmem:[%s280 + $0xa0] sm:$0xff] %v321
                  %v323 = vld [vmem:[%s279 + $0xd0] sm:$0xff]
                  %324 = vst [vmem:[%s280 + $0xa8] sm:$0xff] %v323
                  %v325 = vld [vmem:[%s279 + $0xd8] sm:$0xff]
                  %326 = vst [vmem:[%s280 + $0xb0] sm:$0xff] %v325
                  %v327 = vld [vmem:[%s279 + $0xe0] sm:$0xff]
                  %328 = vst [vmem:[%s280 + $0xb8] sm:$0xff] %v327
                  %v329 = vld [vmem:[%s279 + $0xf0] sm:$0xff]
                  %330 = vst [vmem:[%s280 + $0xc0] sm:$0xff] %v329
                  %v331 = vld [vmem:[%s279 + $0xf8] sm:$0xff]
                  %332 = vst [vmem:[%s280 + $0xc8] sm:$0xff] %v331
                  %v333 = vld [vmem:[%s279 + $0x100] sm:$0xff]
                  %334 = vst [vmem:[%s280 + $0xd0] sm:$0xff] %v333
                  %v335 = vld [vmem:[%s279 + $0x108] sm:$0xff]
                  %336 = vst [vmem:[%s280 + $0xd8] sm:$0xff] %v335
                  %v337 = vld [vmem:[%s279 + $0x118] sm:$0xff]
                  %338 = vst [vmem:[%s280 + $0xe0] sm:$0xff] %v337
                  %v339 = vld [vmem:[%s279 + $0x120] sm:$0xff]
                  %340 = vst [vmem:[%s280 + $0xe8] sm:$0xff] %v339
                  %v341 = vld [vmem:[%s279 + $0x128] sm:$0xff]
                  %342 = vst [vmem:[%s280 + $0xf0] sm:$0xff] %v341
                  %v343 = vld [vmem:[%s279 + $0x130] sm:$0xff]
                  %344 = vst [vmem:[%s280 + $0xf8] sm:$0xff] %v343
                  %v345 = vld [vmem:[%s279 + $0x140] sm:$0xff]
                  %346 = vst [vmem:[%s280 + $0x100] sm:$0xff] %v345
                  %v347 = vld [vmem:[%s279 + $0x148] sm:$0xff]
                  %348 = vst [vmem:[%s280 + $0x108] sm:$0xff] %v347
                  %v349 = vld [vmem:[%s279 + $0x150] sm:$0xff]
                  %350 = vst [vmem:[%s280 + $0x110] sm:$0xff] %v349
                  %v351 = vld [vmem:[%s279 + $0x158] sm:$0xff]
                  %352 = vst [vmem:[%s280 + $0x118] sm:$0xff] %v351
                  %v353 = vld [vmem:[%s279 + $0x168] sm:$0xff]
                  %354 = vst [vmem:[%s280 + $0x120] sm:$0xff] %v353
                  %v355 = vld [vmem:[%s279 + $0x170] sm:$0xff]
                  %356 = vst [vmem:[%s280 + $0x128] sm:$0xff] %v355
                  %v357 = vld [vmem:[%s279 + $0x178] sm:$0xff]
                  %358 = vst [vmem:[%s280 + $0x130] sm:$0xff] %v357
                  %v359 = vld [vmem:[%s279 + $0x180] sm:$0xff]
                  %360 = vst [vmem:[%s280 + $0x138] sm:$0xff] %v359
                  %v361 = vld [vmem:[%s279 + $0x190] sm:$0xff]
                  %362 = vst [vmem:[%s280 + $0x140] sm:$0xff] %v361
                  %v363 = vld [vmem:[%s279 + $0x198] sm:$0xff]
                  %364 = vst [vmem:[%s280 + $0x148] sm:$0xff] %v363
                  %v365 = vld [vmem:[%s279 + $0x1a0] sm:$0xff]
                  %366 = vst [vmem:[%s280 + $0x150] sm:$0xff] %v365
                  %v367 = vld [vmem:[%s279 + $0x1a8] sm:$0xff]
                  %368 = vst [vmem:[%s280 + $0x158] sm:$0xff] %v367
                  %v369 = vld [vmem:[%s279 + $0x1b8] sm:$0xff]
                  %370 = vst [vmem:[%s280 + $0x160] sm:$0xff] %v369
                  %v371 = vld [vmem:[%s279 + $0x1c0] sm:$0xff]
                  %372 = vst [vmem:[%s280 + $0x168] sm:$0xff] %v371
                  %v373 = vld [vmem:[%s279 + $0x1c8] sm:$0xff]
                  %374 = vst [vmem:[%s280 + $0x170] sm:$0xff] %v373
                  %v375 = vld [vmem:[%s279 + $0x1d0] sm:$0xff]
                  %376 = vst [vmem:[%s280 + $0x178] sm:$0xff] %v375
                  %v377 = vld [vmem:[%s279 + $0x1e0] sm:$0xff]
                  %378 = vst [vmem:[%s280 + $0x180] sm:$0xff] %v377
                  %v379 = vld [vmem:[%s279 + $0x1e8] sm:$0xff]
                  %380 = vst [vmem:[%s280 + $0x188] sm:$0xff] %v379
                  %v381 = vld [vmem:[%s279 + $0x1f0] sm:$0xff]
                  %382 = vst [vmem:[%s280 + $0x190] sm:$0xff] %v381
                  %v383 = vld [vmem:[%s279 + $0x1f8] sm:$0xff]
                  %384 = vst [vmem:[%s280 + $0x198] sm:$0xff] %v383
                  %v385 = vld [vmem:[%s279 + $0x208] sm:$0xff]
                  %386 = vst [vmem:[%s280 + $0x1a0] sm:$0xff] %v385
                  %v387 = vld [vmem:[%s279 + $0x210] sm:$0xff]
                  %388 = vst [vmem:[%s280 + $0x1a8] sm:$0xff] %v387
                  %v389 = vld [vmem:[%s279 + $0x218] sm:$0xff]
                  %390 = vst [vmem:[%s280 + $0x1b0] sm:$0xff] %v389
                  %v391 = vld [vmem:[%s279 + $0x220] sm:$0xff]
                  %392 = vst [vmem:[%s280 + $0x1b8] sm:$0xff] %v391
                  %v393 = vld [vmem:[%s279 + $0x230] sm:$0xff]
                  %394 = vst [vmem:[%s280 + $0x1c0] sm:$0xff] %v393
                  %v395 = vld [vmem:[%s279 + $0x238] sm:$0xff]
                  %396 = vst [vmem:[%s280 + $0x1c8] sm:$0xff] %v395
                  %v397 = vld [vmem:[%s279 + $0x240] sm:$0xff]
                  %398 = vst [vmem:[%s280 + $0x1d0] sm:$0xff] %v397
                  %v399 = vld [vmem:[%s279 + $0x248] sm:$0xff]
                  %400 = vst [vmem:[%s280 + $0x1d8] sm:$0xff] %v399
                  %v401 = vld [vmem:[%s279 + $0x258] sm:$0xff]
                  %402 = vst [vmem:[%s280 + $0x1e0] sm:$0xff] %v401
                  %v403 = vld [vmem:[%s279 + $0x260] sm:$0xff]
                  %404 = vst [vmem:[%s280 + $0x1e8] sm:$0xff] %v403
                  %v405 = vld [vmem:[%s279 + $0x268] sm:$0xff]
                  %406 = vst [vmem:[%s280 + $0x1f0] sm:$0xff] %v405
                  %v407 = vld [vmem:[%s279 + $0x270] sm:$0xff]
                  %408 = vst [vmem:[%s280 + $0x1f8] sm:$0xff] %v407
                  %s409 = sadd.s32 1, %s278
                  %p410 = scmp.ge.s32.totalorder %s409, %s269
                  %s411 = scalar_select %p410, 0, %s409
                  %s412 = smul.u32 %s411, 32
                  %s413 = smul.u32 %s411, 32
                  %s414 = scalar_lea.vmem %s210, %s412
                  %s415 = scalar_lea.vmem %s200, %s413 [#allocation2]
                $region64: #{tpu_custom_call.1} parent=58 // loop_footer
                  %s275 = sadd.s32 %s273, 1
                $region65: #{tpu_custom_call.1} parent=58 // loop_footer_branch
                  %272 = sbr.rel target = $region61
                $region66: #{tpu_custom_call.1} parent=58 // loop_exit
                  _
                %s416 = sshrl.u32 %s268, 2
                %s417 = sand.u32 %s268, 3
                %s418 = smul.u32 %s416, 4
                %s419 = smul.u32 128, %s418
                %s420 = sshra.s32 %s419, 4
                %s421 = scalar_lea.vmem %s210, %s420
                %s422 = smul.u32 128, %s418
                %s423 = sshra.s32 %s422, 4
                %s424 = scalar_lea.vmem %s200, %s423 [#allocation2]
                // While loop
                $region67: #{tpu_custom_call.1} parent=58 // loop_pre_header
                  _
                $region68: #{tpu_custom_call.1} parent=58 // loop_header
                  %s428 = sphi 0, %s430
                  %p429 = scmp.ge.s32.totalorder %s428, %s417
                  %s433 = sphi 0, %s470
                  %s434 = sphi %s421, %s473
                  %s435 = sphi %s424, %s474
                $region69: #{tpu_custom_call.1} parent=58 // loop_header_branch
                  %432 = sbr.rel (%p429) target = $region73
                $region70: #{tpu_custom_call.1} parent=58 // loop_body
                  %v436 = vld [vmem:[%s434] sm:$0xff]
                  %437 = vst [vmem:[%s435] sm:$0xff] %v436
                  %v438 = vld [vmem:[%s434 + $0x28] sm:$0xff]
                  %439 = vst [vmem:[%s435 + $0x20] sm:$0xff] %v438
                  %v440 = vld [vmem:[%s434 + $0x50] sm:$0xff]
                  %441 = vst [vmem:[%s435 + $0x40] sm:$0xff] %v440
                  %v442 = vld [vmem:[%s434 + $0x78] sm:$0xff]
                  %443 = vst [vmem:[%s435 + $0x60] sm:$0xff] %v442
                  %v444 = vld [vmem:[%s434 + $0xa0] sm:$0xff]
                  %445 = vst [vmem:[%s435 + $0x80] sm:$0xff] %v444
                  %v446 = vld [vmem:[%s434 + $0xc8] sm:$0xff]
                  %447 = vst [vmem:[%s435 + $0xa0] sm:$0xff] %v446
                  %v448 = vld [vmem:[%s434 + $0xf0] sm:$0xff]
                  %449 = vst [vmem:[%s435 + $0xc0] sm:$0xff] %v448
                  %v450 = vld [vmem:[%s434 + $0x118] sm:$0xff]
                  %451 = vst [vmem:[%s435 + $0xe0] sm:$0xff] %v450
                  %v452 = vld [vmem:[%s434 + $0x140] sm:$0xff]
                  %453 = vst [vmem:[%s435 + $0x100] sm:$0xff] %v452
                  %v454 = vld [vmem:[%s434 + $0x168] sm:$0xff]
                  %455 = vst [vmem:[%s435 + $0x120] sm:$0xff] %v454
                  %v456 = vld [vmem:[%s434 + $0x190] sm:$0xff]
                  %457 = vst [vmem:[%s435 + $0x140] sm:$0xff] %v456
                  %v458 = vld [vmem:[%s434 + $0x1b8] sm:$0xff]
                  %459 = vst [vmem:[%s435 + $0x160] sm:$0xff] %v458
                  %v460 = vld [vmem:[%s434 + $0x1e0] sm:$0xff]
                  %461 = vst [vmem:[%s435 + $0x180] sm:$0xff] %v460
                  %v462 = vld [vmem:[%s434 + $0x208] sm:$0xff]
                  %463 = vst [vmem:[%s435 + $0x1a0] sm:$0xff] %v462
                  %v464 = vld [vmem:[%s434 + $0x230] sm:$0xff]
                  %465 = vst [vmem:[%s435 + $0x1c0] sm:$0xff] %v464
                  %v466 = vld [vmem:[%s434 + $0x258] sm:$0xff]
                  %467 = vst [vmem:[%s435 + $0x1e0] sm:$0xff] %v466
                  %s468 = sadd.s32 1, %s433
                  %p469 = scmp.ge.s32.totalorder %s468, %s417
                  %s470 = scalar_select %p469, 0, %s468
                  %s471 = smul.u32 %s470, 8
                  %s472 = smul.u32 %s470, 8
                  %s473 = scalar_lea.vmem %s421, %s471
                  %s474 = scalar_lea.vmem %s424, %s472 [#allocation2]
                $region71: #{tpu_custom_call.1} parent=58 // loop_footer
                  %s430 = sadd.s32 %s428, 1
                $region72: #{tpu_custom_call.1} parent=58 // loop_footer_branch
                  %427 = sbr.rel target = $region68
                $region73: #{tpu_custom_call.1} parent=58 // loop_exit
                  _
              $region59: #{tpu_custom_call.1} parent=43 // pred_fallthru
                _
              %p475 = pneg %p264
              // Predicated region
              $region74: #{tpu_custom_call.1} parent=43 // pred_check
                _
              $region75: #{tpu_custom_call.1} parent=43 // pred_check_branch
                %477 = sbr.rel (%p264) target = $region77
              $region76: #{tpu_custom_call.1} parent=43 // pred_region
                %s478 = sand.u32 %s211, 7
                %s479 = ssub.s32 %s211, %s478
                %s480 = scalar_lea.vmem %s210, %s479
                %s481 = ssub.s32 %s211, %s478
                %s482 = scalar_lea.vmem %s200, %s481 [#allocation2]
                %s483 = sshrl.u32 %s211, 3
                %s484 = sshrl.u32 %s483, 2
                // While loop
                $region78: #{tpu_custom_call.1} parent=76 // loop_pre_header
                  _
                $region79: #{tpu_custom_call.1} parent=76 // loop_header
                  %s488 = sphi 0, %s490
                  %p489 = scmp.ge.s32.totalorder %s488, %s484
                  %s493 = sphi 0, %s626
                  %s494 = sphi %s210, %s629
                  %s495 = sphi %s200, %s630
                $region80: #{tpu_custom_call.1} parent=76 // loop_header_branch
                  %492 = sbr.rel (%p489) target = $region84
                $region81: #{tpu_custom_call.1} parent=76 // loop_body
                  %v496 = vld [vmem:[%s494] sm:$0xff]
                  %497 = vst [vmem:[%s495] sm:$0xff] %v496
                  %v498 = vld [vmem:[%s494 + $0x8] sm:$0xff]
                  %499 = vst [vmem:[%s495 + $0x8] sm:$0xff] %v498
                  %v500 = vld [vmem:[%s494 + $0x10] sm:$0xff]
                  %501 = vst [vmem:[%s495 + $0x10] sm:$0xff] %v500
                  %v502 = vld [vmem:[%s494 + $0x18] sm:$0xff]
                  %503 = vst [vmem:[%s495 + $0x18] sm:$0xff] %v502
                  %v504 = vld [vmem:[%s494 + $0x28] sm:$0xff]
                  %505 = vst [vmem:[%s495 + $0x20] sm:$0xff] %v504
                  %v506 = vld [vmem:[%s494 + $0x30] sm:$0xff]
                  %507 = vst [vmem:[%s495 + $0x28] sm:$0xff] %v506
                  %v508 = vld [vmem:[%s494 + $0x38] sm:$0xff]
                  %509 = vst [vmem:[%s495 + $0x30] sm:$0xff] %v508
                  %v510 = vld [vmem:[%s494 + $0x40] sm:$0xff]
                  %511 = vst [vmem:[%s495 + $0x38] sm:$0xff] %v510
                  %v512 = vld [vmem:[%s494 + $0x50] sm:$0xff]
                  %513 = vst [vmem:[%s495 + $0x40] sm:$0xff] %v512
                  %v514 = vld [vmem:[%s494 + $0x58] sm:$0xff]
                  %515 = vst [vmem:[%s495 + $0x48] sm:$0xff] %v514
                  %v516 = vld [vmem:[%s494 + $0x60] sm:$0xff]
                  %517 = vst [vmem:[%s495 + $0x50] sm:$0xff] %v516
                  %v518 = vld [vmem:[%s494 + $0x68] sm:$0xff]
                  %519 = vst [vmem:[%s495 + $0x58] sm:$0xff] %v518
                  %v520 = vld [vmem:[%s494 + $0x78] sm:$0xff]
                  %521 = vst [vmem:[%s495 + $0x60] sm:$0xff] %v520
                  %v522 = vld [vmem:[%s494 + $0x80] sm:$0xff]
                  %523 = vst [vmem:[%s495 + $0x68] sm:$0xff] %v522
                  %v524 = vld [vmem:[%s494 + $0x88] sm:$0xff]
                  %525 = vst [vmem:[%s495 + $0x70] sm:$0xff] %v524
                  %v526 = vld [vmem:[%s494 + $0x90] sm:$0xff]
                  %527 = vst [vmem:[%s495 + $0x78] sm:$0xff] %v526
                  %v528 = vld [vmem:[%s494 + $0xa0] sm:$0xff]
                  %529 = vst [vmem:[%s495 + $0x80] sm:$0xff] %v528
                  %v530 = vld [vmem:[%s494 + $0xa8] sm:$0xff]
                  %531 = vst [vmem:[%s495 + $0x88] sm:$0xff] %v530
                  %v532 = vld [vmem:[%s494 + $0xb0] sm:$0xff]
                  %533 = vst [vmem:[%s495 + $0x90] sm:$0xff] %v532
                  %v534 = vld [vmem:[%s494 + $0xb8] sm:$0xff]
                  %535 = vst [vmem:[%s495 + $0x98] sm:$0xff] %v534
                  %v536 = vld [vmem:[%s494 + $0xc8] sm:$0xff]
                  %537 = vst [vmem:[%s495 + $0xa0] sm:$0xff] %v536
                  %v538 = vld [vmem:[%s494 + $0xd0] sm:$0xff]
                  %539 = vst [vmem:[%s495 + $0xa8] sm:$0xff] %v538
                  %v540 = vld [vmem:[%s494 + $0xd8] sm:$0xff]
                  %541 = vst [vmem:[%s495 + $0xb0] sm:$0xff] %v540
                  %v542 = vld [vmem:[%s494 + $0xe0] sm:$0xff]
                  %543 = vst [vmem:[%s495 + $0xb8] sm:$0xff] %v542
                  %v544 = vld [vmem:[%s494 + $0xf0] sm:$0xff]
                  %545 = vst [vmem:[%s495 + $0xc0] sm:$0xff] %v544
                  %v546 = vld [vmem:[%s494 + $0xf8] sm:$0xff]
                  %547 = vst [vmem:[%s495 + $0xc8] sm:$0xff] %v546
                  %v548 = vld [vmem:[%s494 + $0x100] sm:$0xff]
                  %549 = vst [vmem:[%s495 + $0xd0] sm:$0xff] %v548
                  %v550 = vld [vmem:[%s494 + $0x108] sm:$0xff]
                  %551 = vst [vmem:[%s495 + $0xd8] sm:$0xff] %v550
                  %v552 = vld [vmem:[%s494 + $0x118] sm:$0xff]
                  %553 = vst [vmem:[%s495 + $0xe0] sm:$0xff] %v552
                  %v554 = vld [vmem:[%s494 + $0x120] sm:$0xff]
                  %555 = vst [vmem:[%s495 + $0xe8] sm:$0xff] %v554
                  %v556 = vld [vmem:[%s494 + $0x128] sm:$0xff]
                  %557 = vst [vmem:[%s495 + $0xf0] sm:$0xff] %v556
                  %v558 = vld [vmem:[%s494 + $0x130] sm:$0xff]
                  %559 = vst [vmem:[%s495 + $0xf8] sm:$0xff] %v558
                  %v560 = vld [vmem:[%s494 + $0x140] sm:$0xff]
                  %561 = vst [vmem:[%s495 + $0x100] sm:$0xff] %v560
                  %v562 = vld [vmem:[%s494 + $0x148] sm:$0xff]
                  %563 = vst [vmem:[%s495 + $0x108] sm:$0xff] %v562
                  %v564 = vld [vmem:[%s494 + $0x150] sm:$0xff]
                  %565 = vst [vmem:[%s495 + $0x110] sm:$0xff] %v564
                  %v566 = vld [vmem:[%s494 + $0x158] sm:$0xff]
                  %567 = vst [vmem:[%s495 + $0x118] sm:$0xff] %v566
                  %v568 = vld [vmem:[%s494 + $0x168] sm:$0xff]
                  %569 = vst [vmem:[%s495 + $0x120] sm:$0xff] %v568
                  %v570 = vld [vmem:[%s494 + $0x170] sm:$0xff]
                  %571 = vst [vmem:[%s495 + $0x128] sm:$0xff] %v570
                  %v572 = vld [vmem:[%s494 + $0x178] sm:$0xff]
                  %573 = vst [vmem:[%s495 + $0x130] sm:$0xff] %v572
                  %v574 = vld [vmem:[%s494 + $0x180] sm:$0xff]
                  %575 = vst [vmem:[%s495 + $0x138] sm:$0xff] %v574
                  %v576 = vld [vmem:[%s494 + $0x190] sm:$0xff]
                  %577 = vst [vmem:[%s495 + $0x140] sm:$0xff] %v576
                  %v578 = vld [vmem:[%s494 + $0x198] sm:$0xff]
                  %579 = vst [vmem:[%s495 + $0x148] sm:$0xff] %v578
                  %v580 = vld [vmem:[%s494 + $0x1a0] sm:$0xff]
                  %581 = vst [vmem:[%s495 + $0x150] sm:$0xff] %v580
                  %v582 = vld [vmem:[%s494 + $0x1a8] sm:$0xff]
                  %583 = vst [vmem:[%s495 + $0x158] sm:$0xff] %v582
                  %v584 = vld [vmem:[%s494 + $0x1b8] sm:$0xff]
                  %585 = vst [vmem:[%s495 + $0x160] sm:$0xff] %v584
                  %v586 = vld [vmem:[%s494 + $0x1c0] sm:$0xff]
                  %587 = vst [vmem:[%s495 + $0x168] sm:$0xff] %v586
                  %v588 = vld [vmem:[%s494 + $0x1c8] sm:$0xff]
                  %589 = vst [vmem:[%s495 + $0x170] sm:$0xff] %v588
                  %v590 = vld [vmem:[%s494 + $0x1d0] sm:$0xff]
                  %591 = vst [vmem:[%s495 + $0x178] sm:$0xff] %v590
                  %v592 = vld [vmem:[%s494 + $0x1e0] sm:$0xff]
                  %593 = vst [vmem:[%s495 + $0x180] sm:$0xff] %v592
                  %v594 = vld [vmem:[%s494 + $0x1e8] sm:$0xff]
                  %595 = vst [vmem:[%s495 + $0x188] sm:$0xff] %v594
                  %v596 = vld [vmem:[%s494 + $0x1f0] sm:$0xff]
                  %597 = vst [vmem:[%s495 + $0x190] sm:$0xff] %v596
                  %v598 = vld [vmem:[%s494 + $0x1f8] sm:$0xff]
                  %599 = vst [vmem:[%s495 + $0x198] sm:$0xff] %v598
                  %v600 = vld [vmem:[%s494 + $0x208] sm:$0xff]
                  %601 = vst [vmem:[%s495 + $0x1a0] sm:$0xff] %v600
                  %v602 = vld [vmem:[%s494 + $0x210] sm:$0xff]
                  %603 = vst [vmem:[%s495 + $0x1a8] sm:$0xff] %v602
                  %v604 = vld [vmem:[%s494 + $0x218] sm:$0xff]
                  %605 = vst [vmem:[%s495 + $0x1b0] sm:$0xff] %v604
                  %v606 = vld [vmem:[%s494 + $0x220] sm:$0xff]
                  %607 = vst [vmem:[%s495 + $0x1b8] sm:$0xff] %v606
                  %v608 = vld [vmem:[%s494 + $0x230] sm:$0xff]
                  %609 = vst [vmem:[%s495 + $0x1c0] sm:$0xff] %v608
                  %v610 = vld [vmem:[%s494 + $0x238] sm:$0xff]
                  %611 = vst [vmem:[%s495 + $0x1c8] sm:$0xff] %v610
                  %v612 = vld [vmem:[%s494 + $0x240] sm:$0xff]
                  %613 = vst [vmem:[%s495 + $0x1d0] sm:$0xff] %v612
                  %v614 = vld [vmem:[%s494 + $0x248] sm:$0xff]
                  %615 = vst [vmem:[%s495 + $0x1d8] sm:$0xff] %v614
                  %v616 = vld [vmem:[%s494 + $0x258] sm:$0xff]
                  %617 = vst [vmem:[%s495 + $0x1e0] sm:$0xff] %v616
                  %v618 = vld [vmem:[%s494 + $0x260] sm:$0xff]
                  %619 = vst [vmem:[%s495 + $0x1e8] sm:$0xff] %v618
                  %v620 = vld [vmem:[%s494 + $0x268] sm:$0xff]
                  %621 = vst [vmem:[%s495 + $0x1f0] sm:$0xff] %v620
                  %v622 = vld [vmem:[%s494 + $0x270] sm:$0xff]
                  %623 = vst [vmem:[%s495 + $0x1f8] sm:$0xff] %v622
                  %s624 = sadd.s32 1, %s493
                  %p625 = scmp.ge.s32.totalorder %s624, %s484
                  %s626 = scalar_select %p625, 0, %s624
                  %s627 = smul.u32 %s626, 32
                  %s628 = smul.u32 %s626, 32
                  %s629 = scalar_lea.vmem %s210, %s627
                  %s630 = scalar_lea.vmem %s200, %s628 [#allocation2]
                $region82: #{tpu_custom_call.1} parent=76 // loop_footer
                  %s490 = sadd.s32 %s488, 1
                $region83: #{tpu_custom_call.1} parent=76 // loop_footer_branch
                  %487 = sbr.rel target = $region79
                $region84: #{tpu_custom_call.1} parent=76 // loop_exit
                  _
                %s631 = sshrl.u32 %s483, 2
                %s632 = sand.u32 %s483, 3
                %s633 = smul.u32 %s631, 4
                %s634 = smul.u32 128, %s633
                %s635 = sshra.s32 %s634, 4
                %s636 = scalar_lea.vmem %s210, %s635
                %s637 = smul.u32 128, %s633
                %s638 = sshra.s32 %s637, 4
                %s639 = scalar_lea.vmem %s200, %s638 [#allocation2]
                // While loop
                $region85: #{tpu_custom_call.1} parent=76 // loop_pre_header
                  _
                $region86: #{tpu_custom_call.1} parent=76 // loop_header
                  %s643 = sphi 0, %s645
                  %p644 = scmp.ge.s32.totalorder %s643, %s632
                  %s648 = sphi 0, %s685
                  %s649 = sphi %s636, %s688
                  %s650 = sphi %s639, %s689
                $region87: #{tpu_custom_call.1} parent=76 // loop_header_branch
                  %647 = sbr.rel (%p644) target = $region91
                $region88: #{tpu_custom_call.1} parent=76 // loop_body
                  %v651 = vld [vmem:[%s649] sm:$0xff]
                  %652 = vst [vmem:[%s650] sm:$0xff] %v651
                  %v653 = vld [vmem:[%s649 + $0x28] sm:$0xff]
                  %654 = vst [vmem:[%s650 + $0x20] sm:$0xff] %v653
                  %v655 = vld [vmem:[%s649 + $0x50] sm:$0xff]
                  %656 = vst [vmem:[%s650 + $0x40] sm:$0xff] %v655
                  %v657 = vld [vmem:[%s649 + $0x78] sm:$0xff]
                  %658 = vst [vmem:[%s650 + $0x60] sm:$0xff] %v657
                  %v659 = vld [vmem:[%s649 + $0xa0] sm:$0xff]
                  %660 = vst [vmem:[%s650 + $0x80] sm:$0xff] %v659
                  %v661 = vld [vmem:[%s649 + $0xc8] sm:$0xff]
                  %662 = vst [vmem:[%s650 + $0xa0] sm:$0xff] %v661
                  %v663 = vld [vmem:[%s649 + $0xf0] sm:$0xff]
                  %664 = vst [vmem:[%s650 + $0xc0] sm:$0xff] %v663
                  %v665 = vld [vmem:[%s649 + $0x118] sm:$0xff]
                  %666 = vst [vmem:[%s650 + $0xe0] sm:$0xff] %v665
                  %v667 = vld [vmem:[%s649 + $0x140] sm:$0xff]
                  %668 = vst [vmem:[%s650 + $0x100] sm:$0xff] %v667
                  %v669 = vld [vmem:[%s649 + $0x168] sm:$0xff]
                  %670 = vst [vmem:[%s650 + $0x120] sm:$0xff] %v669
                  %v671 = vld [vmem:[%s649 + $0x190] sm:$0xff]
                  %672 = vst [vmem:[%s650 + $0x140] sm:$0xff] %v671
                  %v673 = vld [vmem:[%s649 + $0x1b8] sm:$0xff]
                  %674 = vst [vmem:[%s650 + $0x160] sm:$0xff] %v673
                  %v675 = vld [vmem:[%s649 + $0x1e0] sm:$0xff]
                  %676 = vst [vmem:[%s650 + $0x180] sm:$0xff] %v675
                  %v677 = vld [vmem:[%s649 + $0x208] sm:$0xff]
                  %678 = vst [vmem:[%s650 + $0x1a0] sm:$0xff] %v677
                  %v679 = vld [vmem:[%s649 + $0x230] sm:$0xff]
                  %680 = vst [vmem:[%s650 + $0x1c0] sm:$0xff] %v679
                  %v681 = vld [vmem:[%s649 + $0x258] sm:$0xff]
                  %682 = vst [vmem:[%s650 + $0x1e0] sm:$0xff] %v681
                  %s683 = sadd.s32 1, %s648
                  %p684 = scmp.ge.s32.totalorder %s683, %s632
                  %s685 = scalar_select %p684, 0, %s683
                  %s686 = smul.u32 %s685, 8
                  %s687 = smul.u32 %s685, 8
                  %s688 = scalar_lea.vmem %s636, %s686
                  %s689 = scalar_lea.vmem %s639, %s687 [#allocation2]
                $region89: #{tpu_custom_call.1} parent=76 // loop_footer
                  %s645 = sadd.s32 %s643, 1
                $region90: #{tpu_custom_call.1} parent=76 // loop_footer_branch
                  %642 = sbr.rel target = $region86
                $region91: #{tpu_custom_call.1} parent=76 // loop_exit
                  _
                %s690 = sshllo.u32 0, %s478
                loop: start=0, step=1, limit=1
                $region92: #{tpu_custom_call.1} parent=76 // loop_pre_header
                  _
                $region93: #{tpu_custom_call.1} parent=76 // loop_header
                  %s692 = sphi 0, %s696
                  %p693 = scmp.ge.s32.totalorder %s692, 1
                  %s697 = sphi %s480, %s480
                  %s698 = sphi %s482, %s482
                $region94: #{tpu_custom_call.1} parent=76 // loop_header_branch
                  %695 = sbr.rel (%p693) target = $region98
                $region95: #{tpu_custom_call.1} parent=76 // loop_body
                  %v699 = vld [vmem:[%s697] sm:%s690]
                  %700 = vst [vmem:[%s698] sm:%s690] %v699
                  %v701 = vld [vmem:[%s697 + $0x28] sm:%s690]
                  %702 = vst [vmem:[%s698 + $0x20] sm:%s690] %v701
                  %v703 = vld [vmem:[%s697 + $0x50] sm:%s690]
                  %704 = vst [vmem:[%s698 + $0x40] sm:%s690] %v703
                  %v705 = vld [vmem:[%s697 + $0x78] sm:%s690]
                  %706 = vst [vmem:[%s698 + $0x60] sm:%s690] %v705
                  %v707 = vld [vmem:[%s697 + $0xa0] sm:%s690]
                  %708 = vst [vmem:[%s698 + $0x80] sm:%s690] %v707
                  %v709 = vld [vmem:[%s697 + $0xc8] sm:%s690]
                  %710 = vst [vmem:[%s698 + $0xa0] sm:%s690] %v709
                  %v711 = vld [vmem:[%s697 + $0xf0] sm:%s690]
                  %712 = vst [vmem:[%s698 + $0xc0] sm:%s690] %v711
                  %v713 = vld [vmem:[%s697 + $0x118] sm:%s690]
                  %714 = vst [vmem:[%s698 + $0xe0] sm:%s690] %v713
                  %v715 = vld [vmem:[%s697 + $0x140] sm:%s690]
                  %716 = vst [vmem:[%s698 + $0x100] sm:%s690] %v715
                  %v717 = vld [vmem:[%s697 + $0x168] sm:%s690]
                  %718 = vst [vmem:[%s698 + $0x120] sm:%s690] %v717
                  %v719 = vld [vmem:[%s697 + $0x190] sm:%s690]
                  %720 = vst [vmem:[%s698 + $0x140] sm:%s690] %v719
                  %v721 = vld [vmem:[%s697 + $0x1b8] sm:%s690]
                  %722 = vst [vmem:[%s698 + $0x160] sm:%s690] %v721
                  %v723 = vld [vmem:[%s697 + $0x1e0] sm:%s690]
                  %724 = vst [vmem:[%s698 + $0x180] sm:%s690] %v723
                  %v725 = vld [vmem:[%s697 + $0x208] sm:%s690]
                  %726 = vst [vmem:[%s698 + $0x1a0] sm:%s690] %v725
                  %v727 = vld [vmem:[%s697 + $0x230] sm:%s690]
                  %728 = vst [vmem:[%s698 + $0x1c0] sm:%s690] %v727
                  %v729 = vld [vmem:[%s697 + $0x258] sm:%s690]
                  %730 = vst [vmem:[%s698 + $0x1e0] sm:%s690] %v729
                $region96: #{tpu_custom_call.1} parent=76 // loop_footer
                  %s696 = sadd.s32 1, %s692
                $region97: #{tpu_custom_call.1} parent=76 // loop_footer_branch
                  %691 = sbr.rel target = $region93
                $region98: #{tpu_custom_call.1} parent=76 // loop_exit
                  _
              $region77: #{tpu_custom_call.1} parent=43 // pred_fallthru
                _
            $region44: #{tpu_custom_call.1} parent=39 // pred_fallthru
              _
            // Predicated region
            $region45: #{tpu_custom_call.1} parent=39 // pred_check
              %p219 = pneg %p215
            $region46: #{tpu_custom_call.1} parent=39 // pred_check_branch
              %221 = sbr.rel (%p219) target = $region48
            $region47: #{tpu_custom_call.1} parent=39 // pred_region
              %s222 = sshllo.u32 0, %s211
              loop: start=0, step=1, limit=1
              $region49: #{tpu_custom_call.1} parent=47 // loop_pre_header
                _
              $region50: #{tpu_custom_call.1} parent=47 // loop_header
                %s224 = sphi 0, %s228
                %p225 = scmp.ge.s32.totalorder %s224, 1
                %s229 = sphi %s210, %s210
                %s230 = sphi %s200, %s200
              $region51: #{tpu_custom_call.1} parent=47 // loop_header_branch
                %227 = sbr.rel (%p225) target = $region55
              $region52: #{tpu_custom_call.1} parent=47 // loop_body
                %v231 = vld [vmem:[%s229] sm:%s222]
                %232 = vst [vmem:[%s230] sm:%s222] %v231
                %v233 = vld [vmem:[%s229 + $0x28] sm:%s222]
                %234 = vst [vmem:[%s230 + $0x20] sm:%s222] %v233
                %v235 = vld [vmem:[%s229 + $0x50] sm:%s222]
                %236 = vst [vmem:[%s230 + $0x40] sm:%s222] %v235
                %v237 = vld [vmem:[%s229 + $0x78] sm:%s222]
                %238 = vst [vmem:[%s230 + $0x60] sm:%s222] %v237
                %v239 = vld [vmem:[%s229 + $0xa0] sm:%s222]
                %240 = vst [vmem:[%s230 + $0x80] sm:%s222] %v239
                %v241 = vld [vmem:[%s229 + $0xc8] sm:%s222]
                %242 = vst [vmem:[%s230 + $0xa0] sm:%s222] %v241
                %v243 = vld [vmem:[%s229 + $0xf0] sm:%s222]
                %244 = vst [vmem:[%s230 + $0xc0] sm:%s222] %v243
                %v245 = vld [vmem:[%s229 + $0x118] sm:%s222]
                %246 = vst [vmem:[%s230 + $0xe0] sm:%s222] %v245
                %v247 = vld [vmem:[%s229 + $0x140] sm:%s222]
                %248 = vst [vmem:[%s230 + $0x100] sm:%s222] %v247
                %v249 = vld [vmem:[%s229 + $0x168] sm:%s222]
                %250 = vst [vmem:[%s230 + $0x120] sm:%s222] %v249
                %v251 = vld [vmem:[%s229 + $0x190] sm:%s222]
                %252 = vst [vmem:[%s230 + $0x140] sm:%s222] %v251
                %v253 = vld [vmem:[%s229 + $0x1b8] sm:%s222]
                %254 = vst [vmem:[%s230 + $0x160] sm:%s222] %v253
                %v255 = vld [vmem:[%s229 + $0x1e0] sm:%s222]
                %256 = vst [vmem:[%s230 + $0x180] sm:%s222] %v255
                %v257 = vld [vmem:[%s229 + $0x208] sm:%s222]
                %258 = vst [vmem:[%s230 + $0x1a0] sm:%s222] %v257
                %v259 = vld [vmem:[%s229 + $0x230] sm:%s222]
                %260 = vst [vmem:[%s230 + $0x1c0] sm:%s222] %v259
                %v261 = vld [vmem:[%s229 + $0x258] sm:%s222]
                %262 = vst [vmem:[%s230 + $0x1e0] sm:%s222] %v261
              $region53: #{tpu_custom_call.1} parent=47 // loop_footer
                %s228 = sadd.s32 1, %s224
              $region54: #{tpu_custom_call.1} parent=47 // loop_footer_branch
                %223 = sbr.rel target = $region50
              $region55: #{tpu_custom_call.1} parent=47 // loop_exit
                _
            $region48: #{tpu_custom_call.1} parent=39 // pred_fallthru
              _
          $region40: #{tpu_custom_call.1} parent=35 // pred_fallthru
            _
          %731 = vnop
        $region36: #{tpu_custom_call.1} parent=31 // pred_fallthru
          _
      $region32: #{tpu_custom_call.1} parent=5 // pred_fallthru
        _
      %p732 = scmp.le.s32.totalorder 1, %s11
      %p733 = scmp.lt.s32.totalorder %s11, 5
      %p734 = pnand %p732, %p733
      %p735 = pneg %p734
      // Predicated region
      $region99: #{tpu_custom_call.1} parent=5 // pred_check
        _
      $region100: #{tpu_custom_call.1} parent=5 // pred_check_branch
        %737 = sbr.rel (%p734) target = $region102
      $region101: #{tpu_custom_call.1} parent=5 // pred_region
        %s738 = ssub.s32 %s11, 1
        %s739 = sand.u32 %s38, 1
        %s740 = sand.u32 %s38, 1
        %s741 = smul.addr %s740, 512
        %s742 = scalar_lea.vmem [#allocation2], %s741
        // Predicated region
        $region103: #{tpu_custom_call.1} parent=101 // pred_check
          %p743 = pneg %p51
        $region104: #{tpu_custom_call.1} parent=101 // pred_check_branch
          %745 = sbr.rel (%p743) target = $region106
        $region105: #{tpu_custom_call.1} parent=101 // pred_region
          _
        $region106: #{tpu_custom_call.1} parent=101 // pred_fallthru
          _
        %s746 = sand.u32 %s38, 1
        %s747 = sand.u32 %s38, 1
        %s748 = smul.addr %s747, 512
        %s749 = scalar_lea.vmem [#allocation2], %s748
        %p750 = pneg %p51
        %p751 = pneg %p48
        %p752 = pneg %p72
        %p753 = pneg %p69
        %p754 = pneg %p93
        %p755 = pneg %p90
        %p756 = pneg %p114
        %p757 = pneg %p111
        %p758 = pneg %p135
        %p759 = pneg %p132
        %p760 = pneg %p163
        %p761 = pneg %p160
        %s762 = sand.u32 %s150, 1
        %s763 = sand.u32 %s150, 1
        %s764 = smul.addr %s763, 512
        %s765 = scalar_lea.vmem [#allocation3], %s764
        %s766 = smul.u32 4, %s21
        %s767 = ssub.s32 5, %s766
        %p768 = scmp.lt.s32.totalorder %s767, 4
        %s769 = scalar_select %p768, %s767, 4
        %s770 = smul.u32 2048, %s769
        %s771 = smul.u32 4, %s21
        %s772 = ssub.s32 5, %s771
        %p773 = scmp.lt.s32.totalorder %s772, 4
        %s774 = scalar_select %p773, %s772, 4
        %s775 = smul.u32 2048, %s774
        %v777 = vld [vmem:[%s742] sm:$0xff]
        %v778 = vld [vmem:[%s742 + $0x8] sm:$0xff]
        %v779 = vld [vmem:[%s742 + $0x10] sm:$0xff]
        %v780 = vld [vmem:[%s742 + $0x18] sm:$0xff]
        %v781 = vld [vmem:[%s742 + $0x20] sm:$0xff]
        %v782 = vld [vmem:[%s742 + $0x28] sm:$0xff]
        %v783 = vld [vmem:[%s742 + $0x30] sm:$0xff]
        %v784 = vld [vmem:[%s742 + $0x38] sm:$0xff]
        %v785 = vld [vmem:[%s742 + $0x40] sm:$0xff]
        %v786 = vld [vmem:[%s742 + $0x48] sm:$0xff]
        %v787 = vld [vmem:[%s742 + $0x50] sm:$0xff]
        %v788 = vld [vmem:[%s742 + $0x58] sm:$0xff]
        %v789 = vld [vmem:[%s742 + $0x60] sm:$0xff]
        %v790 = vld [vmem:[%s742 + $0x68] sm:$0xff]
        %v791 = vld [vmem:[%s742 + $0x70] sm:$0xff]
        %v792 = vld [vmem:[%s742 + $0x78] sm:$0xff]
        %v793 = vld [vmem:[%s742 + $0x80] sm:$0xff]
        %v794 = vld [vmem:[%s742 + $0x88] sm:$0xff]
        %v795 = vld [vmem:[%s742 + $0x90] sm:$0xff]
        %v796 = vld [vmem:[%s742 + $0x98] sm:$0xff]
        %v797 = vld [vmem:[%s742 + $0xa0] sm:$0xff]
        %v798 = vld [vmem:[%s742 + $0xa8] sm:$0xff]
        %v799 = vld [vmem:[%s742 + $0xb0] sm:$0xff]
        %v800 = vld [vmem:[%s742 + $0xb8] sm:$0xff]
        %v801 = vld [vmem:[%s742 + $0xc0] sm:$0xff]
        %v802 = vld [vmem:[%s742 + $0xc8] sm:$0xff]
        %v803 = vld [vmem:[%s742 + $0xd0] sm:$0xff]
        %v804 = vld [vmem:[%s742 + $0xd8] sm:$0xff]
        %v805 = vld [vmem:[%s742 + $0xe0] sm:$0xff]
        %v806 = vld [vmem:[%s742 + $0xe8] sm:$0xff]
        %v807 = vld [vmem:[%s742 + $0xf0] sm:$0xff]
        %v808 = vld [vmem:[%s742 + $0xf8] sm:$0xff]
        %v809 = vld [vmem:[%s742 + $0x100] sm:$0xff]
        %v810 = vld [vmem:[%s742 + $0x108] sm:$0xff]
        %v811 = vld [vmem:[%s742 + $0x110] sm:$0xff]
        %v812 = vld [vmem:[%s742 + $0x118] sm:$0xff]
        %v813 = vld [vmem:[%s742 + $0x120] sm:$0xff]
        %v814 = vld [vmem:[%s742 + $0x128] sm:$0xff]
        %v815 = vld [vmem:[%s742 + $0x130] sm:$0xff]
        %v816 = vld [vmem:[%s742 + $0x138] sm:$0xff]
        %v817 = vld [vmem:[%s742 + $0x140] sm:$0xff]
        %v818 = vld [vmem:[%s742 + $0x148] sm:$0xff]
        %v819 = vld [vmem:[%s742 + $0x150] sm:$0xff]
        %v820 = vld [vmem:[%s742 + $0x158] sm:$0xff]
        %v821 = vld [vmem:[%s742 + $0x160] sm:$0xff]
        %v822 = vld [vmem:[%s742 + $0x168] sm:$0xff]
        %v823 = vld [vmem:[%s742 + $0x170] sm:$0xff]
        %v824 = vld [vmem:[%s742 + $0x178] sm:$0xff]
        %v825 = vld [vmem:[%s742 + $0x180] sm:$0xff]
        %v826 = vld [vmem:[%s742 + $0x188] sm:$0xff]
        %v827 = vld [vmem:[%s742 + $0x190] sm:$0xff]
        %v828 = vld [vmem:[%s742 + $0x198] sm:$0xff]
        %v829 = vld [vmem:[%s742 + $0x1a0] sm:$0xff]
        %v830 = vld [vmem:[%s742 + $0x1a8] sm:$0xff]
        %v831 = vld [vmem:[%s742 + $0x1b0] sm:$0xff]
        %v832 = vld [vmem:[%s742 + $0x1b8] sm:$0xff]
        %v833 = vld [vmem:[%s742 + $0x1c0] sm:$0xff]
        %v834 = vld [vmem:[%s742 + $0x1c8] sm:$0xff]
        %v835 = vld [vmem:[%s742 + $0x1d0] sm:$0xff]
        %v836 = vld [vmem:[%s742 + $0x1d8] sm:$0xff]
        %v837 = vld [vmem:[%s742 + $0x1e0] sm:$0xff]
        %v838 = vld [vmem:[%s742 + $0x1e8] sm:$0xff]
        %v839 = vld [vmem:[%s742 + $0x1f0] sm:$0xff]
        %v840 = vld [vmem:[%s742 + $0x1f8] sm:$0xff]
        %v841 = vpack.c.bf16 %v781, %v777
        %v842 = vpack.c.bf16 %v782, %v778
        %v843 = vpack.c.bf16 %v783, %v779
        %v844 = vpack.c.bf16 %v784, %v780
        %v845 = vpack.c.bf16 %v789, %v785
        %v846 = vpack.c.bf16 %v790, %v786
        %v847 = vpack.c.bf16 %v791, %v787
        %v848 = vpack.c.bf16 %v792, %v788
        %v849 = vpack.c.bf16 %v797, %v793
        %v850 = vpack.c.bf16 %v798, %v794
        %v851 = vpack.c.bf16 %v799, %v795
        %v852 = vpack.c.bf16 %v800, %v796
        %v853 = vpack.c.bf16 %v805, %v801
        %v854 = vpack.c.bf16 %v806, %v802
        %v855 = vpack.c.bf16 %v807, %v803
        %v856 = vpack.c.bf16 %v808, %v804
        %v857 = vpack.c.bf16 %v813, %v809
        %v858 = vpack.c.bf16 %v814, %v810
        %v859 = vpack.c.bf16 %v815, %v811
        %v860 = vpack.c.bf16 %v816, %v812
        %v861 = vpack.c.bf16 %v821, %v817
        %v862 = vpack.c.bf16 %v822, %v818
        %v863 = vpack.c.bf16 %v823, %v819
        %v864 = vpack.c.bf16 %v824, %v820
        %v865 = vpack.c.bf16 %v829, %v825
        %v866 = vpack.c.bf16 %v830, %v826
        %v867 = vpack.c.bf16 %v831, %v827
        %v868 = vpack.c.bf16 %v832, %v828
        %v869 = vpack.c.bf16 %v837, %v833
        %v870 = vpack.c.bf16 %v838, %v834
        %v871 = vpack.c.bf16 %v839, %v835
        %v872 = vpack.c.bf16 %v840, %v836
        %v873 = vmax.bf16 %v841, 0
        %v874 = vmax.bf16 %v842, 0
        %v875 = vmax.bf16 %v843, 0
        %v876 = vmax.bf16 %v844, 0
        %v877 = vmax.bf16 %v845, 0
        %v878 = vmax.bf16 %v846, 0
        %v879 = vmax.bf16 %v847, 0
        %v880 = vmax.bf16 %v848, 0
        %v881 = vmax.bf16 %v849, 0
        %v882 = vmax.bf16 %v850, 0
        %v883 = vmax.bf16 %v851, 0
        %v884 = vmax.bf16 %v852, 0
        %v885 = vmax.bf16 %v853, 0
        %v886 = vmax.bf16 %v854, 0
        %v887 = vmax.bf16 %v855, 0
        %v888 = vmax.bf16 %v856, 0
        %v889 = vmax.bf16 %v857, 0
        %v890 = vmax.bf16 %v858, 0
        %v891 = vmax.bf16 %v859, 0
        %v892 = vmax.bf16 %v860, 0
        %v893 = vmax.bf16 %v861, 0
        %v894 = vmax.bf16 %v862, 0
        %v895 = vmax.bf16 %v863, 0
        %v896 = vmax.bf16 %v864, 0
        %v897 = vmax.bf16 %v865, 0
        %v898 = vmax.bf16 %v866, 0
        %v899 = vmax.bf16 %v867, 0
        %v900 = vmax.bf16 %v868, 0
        %v901 = vmax.bf16 %v869, 0
        %v902 = vmax.bf16 %v870, 0
        %v903 = vmax.bf16 %v871, 0
        %v904 = vmax.bf16 %v872, 0
        %v905 = vld [vmem:[%s1] sm:$0xf]
        %v906 = vld [vmem:[%s1 + $0x4] sm:$0xf]
        %v907 = vld [vmem:[%s1 + $0x8] sm:$0xf]
        %v908 = vld [vmem:[%s1 + $0xc] sm:$0xf]
        %v909 = vld [vmem:[%s1 + $0x10] sm:$0xf]
        %v910 = vld [vmem:[%s1 + $0x14] sm:$0xf]
        %v911 = vld [vmem:[%s1 + $0x18] sm:$0xf]
        %v912 = vld [vmem:[%s1 + $0x1c] sm:$0xf]
        %v913 = vld [vmem:[%s1 + $0x20] sm:$0xf]
        %v914 = vld [vmem:[%s1 + $0x24] sm:$0xf]
        %v915 = vld [vmem:[%s1 + $0x28] sm:$0xf]
        %v916 = vld [vmem:[%s1 + $0x2c] sm:$0xf]
        %v917 = vld [vmem:[%s1 + $0x30] sm:$0xf]
        %v918 = vld [vmem:[%s1 + $0x34] sm:$0xf]
        %v919 = vld [vmem:[%s1 + $0x38] sm:$0xf]
        %v920 = vld [vmem:[%s1 + $0x3c] sm:$0xf]
        %v921 = vld [vmem:[%s2] sm:$0xff]
        %v922 = vld [vmem:[%s2 + $0x8] sm:$0xff]
        %v923 = vld [vmem:[%s2 + $0x10] sm:$0xff]
        %v924 = vld [vmem:[%s2 + $0x18] sm:$0xff]
        %v925 = vld [vmem:[%s2 + $0x20] sm:$0xff]
        %v926 = vld [vmem:[%s2 + $0x28] sm:$0xff]
        %v927 = vld [vmem:[%s2 + $0x30] sm:$0xff]
        %v928 = vld [vmem:[%s2 + $0x38] sm:$0xff]
        %v929 = vld [vmem:[%s2 + $0x40] sm:$0xff]
        %v930 = vld [vmem:[%s2 + $0x48] sm:$0xff]
        %v931 = vld [vmem:[%s2 + $0x50] sm:$0xff]
        %v932 = vld [vmem:[%s2 + $0x58] sm:$0xff]
        %v933 = vld [vmem:[%s2 + $0x60] sm:$0xff]
        %v934 = vld [vmem:[%s2 + $0x68] sm:$0xff]
        %v935 = vld [vmem:[%s2 + $0x70] sm:$0xff]
        %v936 = vld [vmem:[%s2 + $0x78] sm:$0xff]
        %938 = vset.pattern.permute.xlu0 0
        %939 = vperm.xlu0 %938, %v921
        %v940 = vpop.permute.xlu0 %939
        %943 = vset.pattern.permute.xlu0 0
        %944 = vperm.xlu0 %943, %v922
        %v945 = vpop.permute.xlu0 %944
        %948 = vset.pattern.permute.xlu0 0
        %949 = vperm.xlu0 %948, %v923
        %v950 = vpop.permute.xlu0 %949
        %953 = vset.pattern.permute.xlu0 0
        %954 = vperm.xlu0 %953, %v924
        %v955 = vpop.permute.xlu0 %954
        %958 = vset.pattern.permute.xlu0 0
        %959 = vperm.xlu0 %958, %v925
        %v960 = vpop.permute.xlu0 %959
        %963 = vset.pattern.permute.xlu0 0
        %964 = vperm.xlu0 %963, %v926
        %v965 = vpop.permute.xlu0 %964
        %968 = vset.pattern.permute.xlu0 0
        %969 = vperm.xlu0 %968, %v927
        %v970 = vpop.permute.xlu0 %969
        %973 = vset.pattern.permute.xlu0 0
        %974 = vperm.xlu0 %973, %v928
        %v975 = vpop.permute.xlu0 %974
        %978 = vset.pattern.permute.xlu0 0
        %979 = vperm.xlu0 %978, %v929
        %v980 = vpop.permute.xlu0 %979
        %983 = vset.pattern.permute.xlu0 0
        %984 = vperm.xlu0 %983, %v930
        %v985 = vpop.permute.xlu0 %984
        %988 = vset.pattern.permute.xlu0 0
        %989 = vperm.xlu0 %988, %v931
        %v990 = vpop.permute.xlu0 %989
        %993 = vset.pattern.permute.xlu0 0
        %994 = vperm.xlu0 %993, %v932
        %v995 = vpop.permute.xlu0 %994
        %998 = vset.pattern.permute.xlu0 0
        %999 = vperm.xlu0 %998, %v933
        %v1000 = vpop.permute.xlu0 %999
        %1003 = vset.pattern.permute.xlu0 0
        %1004 = vperm.xlu0 %1003, %v934
        %v1005 = vpop.permute.xlu0 %1004
        %1008 = vset.pattern.permute.xlu0 0
        %1009 = vperm.xlu0 %1008, %v935
        %v1010 = vpop.permute.xlu0 %1009
        %1013 = vset.pattern.permute.xlu0 0
        %1014 = vperm.xlu0 %1013, %v936
        %v1015 = vpop.permute.xlu0 %1014
        %v1033 = vunpack.c.l.b16 %v905
        %v1034 = vunpack.c.l.b16 %v906
        %v1035 = vunpack.c.l.b16 %v907
        %v1036 = vunpack.c.l.b16 %v908
        %v1037 = vunpack.c.l.b16 %v909
        %v1038 = vunpack.c.l.b16 %v910
        %v1039 = vunpack.c.l.b16 %v911
        %v1040 = vunpack.c.l.b16 %v912
        %v1041 = vunpack.c.l.b16 %v913
        %v1042 = vunpack.c.l.b16 %v914
        %v1043 = vunpack.c.l.b16 %v915
        %v1044 = vunpack.c.l.b16 %v916
        %v1045 = vunpack.c.l.b16 %v917
        %v1046 = vunpack.c.l.b16 %v918
        %v1047 = vunpack.c.l.b16 %v919
        %v1048 = vunpack.c.l.b16 %v920
        %v1049 = vpack.c.b16 %v1034, %v1033
        %v1050 = vpack.c.b16 %v1036, %v1035
        %v1051 = vpack.c.b16 %v1038, %v1037
        %v1052 = vpack.c.b16 %v1040, %v1039
        %v1053 = vpack.c.b16 %v1042, %v1041
        %v1054 = vpack.c.b16 %v1044, %v1043
        %v1055 = vpack.c.b16 %v1046, %v1045
        %v1056 = vpack.c.b16 %v1048, %v1047
        %1065 = vmatprep.subr.bf16.mxu0 %v874
        %1066 = vmatpush1.bf16.msra.mxu0 %v873
        %1067 = vmatprep.subr.bf16.mxu0 %v878
        %1068 = vmatpush1.bf16.msra.mxu0 %v877
        %1069 = vmatprep.subr.bf16.mxu0 %v882
        %1070 = vmatpush1.bf16.msra.mxu0 %v881
        %1071 = vmatprep.subr.bf16.mxu0 %v886
        %1072 = vmatpush1.bf16.msra.mxu0 %v885
        %1073 = vmatprep.subr.bf16.mxu0 %v890
        %1074 = vmatpush1.bf16.msra.mxu0 %v889
        %1075 = vmatprep.subr.bf16.mxu0 %v894
        %1076 = vmatpush1.bf16.msra.mxu0 %v893
        %1077 = vmatprep.subr.bf16.mxu0 %v898
        %1078 = vmatpush1.bf16.msra.mxu0 %v897
        %1079 = vmatprep.subr.bf16.mxu0 %v902
        %1080 = vmatpush1.bf16.msra.mxu0 %v901
        %1081 = vmatprep.subr.bf16.mxu0 0
        %1082 = vmatpush1.bf16.msra.mxu0 0
        %1083 = vmatprep.subr.bf16.mxu0 0
        %1084 = vmatpush1.bf16.msra.mxu0 0
        %1085 = vmatprep.subr.bf16.mxu0 0
        %1086 = vmatpush1.bf16.msra.mxu0 0
        %1087 = vmatprep.subr.bf16.mxu0 0
        %1088 = vmatpush1.bf16.msra.mxu0 0
        %1089 = vmatprep.subr.bf16.mxu0 0
        %1090 = vmatpush1.bf16.msra.mxu0 0
        %1091 = vmatprep.subr.bf16.mxu0 0
        %1092 = vmatpush1.bf16.msra.mxu0 0
        %1093 = vmatprep.subr.bf16.mxu0 0
        %1094 = vmatpush1.bf16.msra.mxu0 0
        %1095 = vmatprep.subr.bf16.mxu0 0
        %1096 = vmatpush1.bf16.msra.mxu0 0
        %1097 = vmatprep.mubr.bf16.mxu0 0
        %1098 = vmatmul.mubr.bf16.gmra.mrb[0].mxu0 %v1049
        %v1099 = vpop.f32.mrb[0].mxu0
        %v1100 = vadd.f32 %v940, %v1099
        %v1101 = vpop.f32.mrb[0].mxu0
        %v1102 = vadd.f32 %v940, %v1101
        %v1103 = vpop.f32.mrb[0].mxu0
        %v1104 = vadd.f32 %v945, %v1103
        %v1105 = vpop.f32.mrb[0].mxu0
        %v1106 = vadd.f32 %v945, %v1105
        %1107 = vmatprep.mubr.bf16.mxu0 0
        %1108 = vmatmul.mubr.bf16.gmra.mrb[0].mxu0 %v1050
        %v1109 = vpop.f32.mrb[0].mxu0
        %v1110 = vadd.f32 %v950, %v1109
        %v1111 = vpop.f32.mrb[0].mxu0
        %v1112 = vadd.f32 %v950, %v1111
        %v1113 = vpop.f32.mrb[0].mxu0
        %v1114 = vadd.f32 %v955, %v1113
        %v1115 = vpop.f32.mrb[0].mxu0
        %v1116 = vadd.f32 %v955, %v1115
        %1117 = vmatprep.mubr.bf16.mxu0 0
        %1118 = vmatmul.mubr.bf16.gmra.mrb[0].mxu0 %v1051
        %v1119 = vpop.f32.mrb[0].mxu0
        %v1120 = vadd.f32 %v960, %v1119
        %v1121 = vpop.f32.mrb[0].mxu0
        %v1122 = vadd.f32 %v960, %v1121
        %v1123 = vpop.f32.mrb[0].mxu0
        %v1124 = vadd.f32 %v965, %v1123
        %v1125 = vpop.f32.mrb[0].mxu0
        %v1126 = vadd.f32 %v965, %v1125
        %1127 = vmatprep.mubr.bf16.mxu0 0
        %1128 = vmatmul.mubr.bf16.gmra.mrb[0].mxu0 %v1052
        %v1129 = vpop.f32.mrb[0].mxu0
        %v1130 = vadd.f32 %v970, %v1129
        %v1131 = vpop.f32.mrb[0].mxu0
        %v1132 = vadd.f32 %v970, %v1131
        %v1133 = vpop.f32.mrb[0].mxu0
        %v1134 = vadd.f32 %v975, %v1133
        %v1135 = vpop.f32.mrb[0].mxu0
        %v1136 = vadd.f32 %v975, %v1135
        %1137 = vmatprep.mubr.bf16.mxu0 0
        %1138 = vmatmul.mubr.bf16.gmra.mrb[0].mxu0 %v1053
        %v1139 = vpop.f32.mrb[0].mxu0
        %v1140 = vadd.f32 %v980, %v1139
        %v1141 = vpop.f32.mrb[0].mxu0
        %v1142 = vadd.f32 %v980, %v1141
        %v1143 = vpop.f32.mrb[0].mxu0
        %v1144 = vadd.f32 %v985, %v1143
        %v1145 = vpop.f32.mrb[0].mxu0
        %v1146 = vadd.f32 %v985, %v1145
        %1147 = vmatprep.mubr.bf16.mxu0 0
        %1148 = vmatmul.mubr.bf16.gmra.mrb[0].mxu0 %v1054
        %v1149 = vpop.f32.mrb[0].mxu0
        %v1150 = vadd.f32 %v990, %v1149
        %v1151 = vpop.f32.mrb[0].mxu0
        %v1152 = vadd.f32 %v990, %v1151
        %v1153 = vpop.f32.mrb[0].mxu0
        %v1154 = vadd.f32 %v995, %v1153
        %v1155 = vpop.f32.mrb[0].mxu0
        %v1156 = vadd.f32 %v995, %v1155
        %1157 = vmatprep.mubr.bf16.mxu0 0
        %1158 = vmatmul.mubr.bf16.gmra.mrb[0].mxu0 %v1055
        %v1159 = vpop.f32.mrb[0].mxu0
        %v1160 = vadd.f32 %v1000, %v1159
        %v1161 = vpop.f32.mrb[0].mxu0
        %v1162 = vadd.f32 %v1000, %v1161
        %v1163 = vpop.f32.mrb[0].mxu0
        %v1164 = vadd.f32 %v1005, %v1163
        %v1165 = vpop.f32.mrb[0].mxu0
        %v1166 = vadd.f32 %v1005, %v1165
        %1167 = vmatprep.mubr.bf16.mxu0 0
        %1168 = vmatmul.mubr.bf16.gmra.mrb[0].mxu0 %v1056
        %v1169 = vpop.f32.mrb[0].mxu0
        %v1170 = vadd.f32 %v1010, %v1169
        %v1171 = vpop.f32.mrb[0].mxu0
        %v1172 = vadd.f32 %v1010, %v1171
        %v1173 = vpop.f32.mrb[0].mxu0
        %v1174 = vadd.f32 %v1015, %v1173
        %v1175 = vpop.f32.mrb[0].mxu0
        %v1176 = vadd.f32 %v1015, %v1175
        %1177 = vdwg.mxu0
        %1178 = vmatprep.subr.bf16.mxu0 %v876
        %1179 = vmatpush1.bf16.msra.mxu0 %v875
        %1180 = vmatprep.subr.bf16.mxu0 %v880
        %1181 = vmatpush1.bf16.msra.mxu0 %v879
        %1182 = vmatprep.subr.bf16.mxu0 %v884
        %1183 = vmatpush1.bf16.msra.mxu0 %v883
        %1184 = vmatprep.subr.bf16.mxu0 %v888
        %1185 = vmatpush1.bf16.msra.mxu0 %v887
        %1186 = vmatprep.subr.bf16.mxu0 %v892
        %1187 = vmatpush1.bf16.msra.mxu0 %v891
        %1188 = vmatprep.subr.bf16.mxu0 %v896
        %1189 = vmatpush1.bf16.msra.mxu0 %v895
        %1190 = vmatprep.subr.bf16.mxu0 %v900
        %1191 = vmatpush1.bf16.msra.mxu0 %v899
        %1192 = vmatprep.subr.bf16.mxu0 %v904
        %1193 = vmatpush1.bf16.msra.mxu0 %v903
        %1194 = vmatprep.subr.bf16.mxu0 0
        %1195 = vmatpush1.bf16.msra.mxu0 0
        %1196 = vmatprep.subr.bf16.mxu0 0
        %1197 = vmatpush1.bf16.msra.mxu0 0
        %1198 = vmatprep.subr.bf16.mxu0 0
        %1199 = vmatpush1.bf16.msra.mxu0 0
        %1200 = vmatprep.subr.bf16.mxu0 0
        %1201 = vmatpush1.bf16.msra.mxu0 0
        %1202 = vmatprep.subr.bf16.mxu0 0
        %1203 = vmatpush1.bf16.msra.mxu0 0
        %1204 = vmatprep.subr.bf16.mxu0 0
        %1205 = vmatpush1.bf16.msra.mxu0 0
        %1206 = vmatprep.subr.bf16.mxu0 0
        %1207 = vmatpush1.bf16.msra.mxu0 0
        %1208 = vmatprep.subr.bf16.mxu0 0
        %1209 = vmatpush1.bf16.msra.mxu0 0
        %1210 = vmatprep.mubr.bf16.mxu0 0
        %1211 = vmatmul.mubr.bf16.gmra.mrb[0].mxu0 %v1049
        %v1212 = vpop.f32.mrb[0].mxu0
        %v1213 = vadd.f32 %v940, %v1212
        %v1214 = vpop.f32.mrb[0].mxu0
        %v1215 = vadd.f32 %v940, %v1214
        %v1216 = vpop.f32.mrb[0].mxu0
        %v1217 = vadd.f32 %v945, %v1216
        %v1218 = vpop.f32.mrb[0].mxu0
        %v1219 = vadd.f32 %v945, %v1218
        %1220 = vmatprep.mubr.bf16.mxu0 0
        %1221 = vmatmul.mubr.bf16.gmra.mrb[0].mxu0 %v1050
        %v1222 = vpop.f32.mrb[0].mxu0
        %v1223 = vadd.f32 %v950, %v1222
        %v1224 = vpop.f32.mrb[0].mxu0
        %v1225 = vadd.f32 %v950, %v1224
        %v1226 = vpop.f32.mrb[0].mxu0
        %v1227 = vadd.f32 %v955, %v1226
        %v1228 = vpop.f32.mrb[0].mxu0
        %v1229 = vadd.f32 %v955, %v1228
        %1230 = vmatprep.mubr.bf16.mxu0 0
        %1231 = vmatmul.mubr.bf16.gmra.mrb[0].mxu0 %v1051
        %v1232 = vpop.f32.mrb[0].mxu0
        %v1233 = vadd.f32 %v960, %v1232
        %v1234 = vpop.f32.mrb[0].mxu0
        %v1235 = vadd.f32 %v960, %v1234
        %v1236 = vpop.f32.mrb[0].mxu0
        %v1237 = vadd.f32 %v965, %v1236
        %v1238 = vpop.f32.mrb[0].mxu0
        %v1239 = vadd.f32 %v965, %v1238
        %1240 = vmatprep.mubr.bf16.mxu0 0
        %1241 = vmatmul.mubr.bf16.gmra.mrb[0].mxu0 %v1052
        %v1242 = vpop.f32.mrb[0].mxu0
        %v1243 = vadd.f32 %v970, %v1242
        %v1244 = vpop.f32.mrb[0].mxu0
        %v1245 = vadd.f32 %v970, %v1244
        %v1246 = vpop.f32.mrb[0].mxu0
        %v1247 = vadd.f32 %v975, %v1246
        %v1248 = vpop.f32.mrb[0].mxu0
        %v1249 = vadd.f32 %v975, %v1248
        %1250 = vmatprep.mubr.bf16.mxu0 0
        %1251 = vmatmul.mubr.bf16.gmra.mrb[0].mxu0 %v1053
        %v1252 = vpop.f32.mrb[0].mxu0
        %v1253 = vadd.f32 %v980, %v1252
        %v1254 = vpop.f32.mrb[0].mxu0
        %v1255 = vadd.f32 %v980, %v1254
        %v1256 = vpop.f32.mrb[0].mxu0
        %v1257 = vadd.f32 %v985, %v1256
        %v1258 = vpop.f32.mrb[0].mxu0
        %v1259 = vadd.f32 %v985, %v1258
        %1260 = vmatprep.mubr.bf16.mxu0 0
        %1261 = vmatmul.mubr.bf16.gmra.mrb[0].mxu0 %v1054
        %v1262 = vpop.f32.mrb[0].mxu0
        %v1263 = vadd.f32 %v990, %v1262
        %v1264 = vpop.f32.mrb[0].mxu0
        %v1265 = vadd.f32 %v990, %v1264
        %v1266 = vpop.f32.mrb[0].mxu0
        %v1267 = vadd.f32 %v995, %v1266
        %v1268 = vpop.f32.mrb[0].mxu0
        %v1269 = vadd.f32 %v995, %v1268
        %1270 = vmatprep.mubr.bf16.mxu0 0
        %1271 = vmatmul.mubr.bf16.gmra.mrb[0].mxu0 %v1055
        %v1272 = vpop.f32.mrb[0].mxu0
        %v1273 = vadd.f32 %v1000, %v1272
        %v1274 = vpop.f32.mrb[0].mxu0
        %v1275 = vadd.f32 %v1000, %v1274
        %v1276 = vpop.f32.mrb[0].mxu0
        %v1277 = vadd.f32 %v1005, %v1276
        %v1278 = vpop.f32.mrb[0].mxu0
        %v1279 = vadd.f32 %v1005, %v1278
        %1280 = vmatprep.mubr.bf16.mxu0 0
        %1281 = vmatmul.mubr.bf16.gmra.mrb[0].mxu0 %v1056
        %v1282 = vpop.f32.mrb[0].mxu0
        %v1283 = vadd.f32 %v1010, %v1282
        %v1284 = vpop.f32.mrb[0].mxu0
        %v1285 = vadd.f32 %v1010, %v1284
        %v1286 = vpop.f32.mrb[0].mxu0
        %v1287 = vadd.f32 %v1015, %v1286
        %v1288 = vpop.f32.mrb[0].mxu0
        %v1289 = vadd.f32 %v1015, %v1288
        %1290 = vdwg.mxu0
        %v1291 = vmax.f32 %v1100, 0.0
        %v1292 = vmax.f32 %v1102, 0.0
        %v1293 = vmax.f32 %v1213, 0.0
        %v1294 = vmax.f32 %v1215, 0.0
        %v1295 = vmax.f32 %v1104, 0.0
        %v1296 = vmax.f32 %v1106, 0.0
        %v1297 = vmax.f32 %v1217, 0.0
        %v1298 = vmax.f32 %v1219, 0.0
        %v1299 = vmax.f32 %v1110, 0.0
        %v1300 = vmax.f32 %v1112, 0.0
        %v1301 = vmax.f32 %v1223, 0.0
        %v1302 = vmax.f32 %v1225, 0.0
        %v1303 = vmax.f32 %v1114, 0.0
        %v1304 = vmax.f32 %v1116, 0.0
        %v1305 = vmax.f32 %v1227, 0.0
        %v1306 = vmax.f32 %v1229, 0.0
        %v1307 = vmax.f32 %v1120, 0.0
        %v1308 = vmax.f32 %v1122, 0.0
        %v1309 = vmax.f32 %v1233, 0.0
        %v1310 = vmax.f32 %v1235, 0.0
        %v1311 = vmax.f32 %v1124, 0.0
        %v1312 = vmax.f32 %v1126, 0.0
        %v1313 = vmax.f32 %v1237, 0.0
        %v1314 = vmax.f32 %v1239, 0.0
        %v1315 = vmax.f32 %v1130, 0.0
        %v1316 = vmax.f32 %v1132, 0.0
        %v1317 = vmax.f32 %v1243, 0.0
        %v1318 = vmax.f32 %v1245, 0.0
        %v1319 = vmax.f32 %v1134, 0.0
        %v1320 = vmax.f32 %v1136, 0.0
        %v1321 = vmax.f32 %v1247, 0.0
        %v1322 = vmax.f32 %v1249, 0.0
        %v1323 = vmax.f32 %v1140, 0.0
        %v1324 = vmax.f32 %v1142, 0.0
        %v1325 = vmax.f32 %v1253, 0.0
        %v1326 = vmax.f32 %v1255, 0.0
        %v1327 = vmax.f32 %v1144, 0.0
        %v1328 = vmax.f32 %v1146, 0.0
        %v1329 = vmax.f32 %v1257, 0.0
        %v1330 = vmax.f32 %v1259, 0.0
        %v1331 = vmax.f32 %v1150, 0.0
        %v1332 = vmax.f32 %v1152, 0.0
        %v1333 = vmax.f32 %v1263, 0.0
        %v1334 = vmax.f32 %v1265, 0.0
        %v1335 = vmax.f32 %v1154, 0.0
        %v1336 = vmax.f32 %v1156, 0.0
        %v1337 = vmax.f32 %v1267, 0.0
        %v1338 = vmax.f32 %v1269, 0.0
        %v1339 = vmax.f32 %v1160, 0.0
        %v1340 = vmax.f32 %v1162, 0.0
        %v1341 = vmax.f32 %v1273, 0.0
        %v1342 = vmax.f32 %v1275, 0.0
        %v1343 = vmax.f32 %v1164, 0.0
        %v1344 = vmax.f32 %v1166, 0.0
        %v1345 = vmax.f32 %v1277, 0.0
        %v1346 = vmax.f32 %v1279, 0.0
        %v1347 = vmax.f32 %v1170, 0.0
        %v1348 = vmax.f32 %v1172, 0.0
        %v1349 = vmax.f32 %v1283, 0.0
        %v1350 = vmax.f32 %v1285, 0.0
        %v1351 = vmax.f32 %v1174, 0.0
        %v1352 = vmax.f32 %v1176, 0.0
        %v1353 = vmax.f32 %v1287, 0.0
        %v1354 = vmax.f32 %v1289, 0.0
        %v1355 = vpack.c.bf16 %v1295, %v1291
        %v1356 = vpack.c.bf16 %v1296, %v1292
        %v1357 = vpack.c.bf16 %v1297, %v1293
        %v1358 = vpack.c.bf16 %v1298, %v1294
        %v1359 = vpack.c.bf16 %v1303, %v1299
        %v1360 = vpack.c.bf16 %v1304, %v1300
        %v1361 = vpack.c.bf16 %v1305, %v1301
        %v1362 = vpack.c.bf16 %v1306, %v1302
        %v1363 = vpack.c.bf16 %v1311, %v1307
        %v1364 = vpack.c.bf16 %v1312, %v1308
        %v1365 = vpack.c.bf16 %v1313, %v1309
        %v1366 = vpack.c.bf16 %v1314, %v1310
        %v1367 = vpack.c.bf16 %v1319, %v1315
        %v1368 = vpack.c.bf16 %v1320, %v1316
        %v1369 = vpack.c.bf16 %v1321, %v1317
        %v1370 = vpack.c.bf16 %v1322, %v1318
        %v1371 = vpack.c.bf16 %v1327, %v1323
        %v1372 = vpack.c.bf16 %v1328, %v1324
        %v1373 = vpack.c.bf16 %v1329, %v1325
        %v1374 = vpack.c.bf16 %v1330, %v1326
        %v1375 = vpack.c.bf16 %v1335, %v1331
        %v1376 = vpack.c.bf16 %v1336, %v1332
        %v1377 = vpack.c.bf16 %v1337, %v1333
        %v1378 = vpack.c.bf16 %v1338, %v1334
        %v1379 = vpack.c.bf16 %v1343, %v1339
        %v1380 = vpack.c.bf16 %v1344, %v1340
        %v1381 = vpack.c.bf16 %v1345, %v1341
        %v1382 = vpack.c.bf16 %v1346, %v1342
        %v1383 = vpack.c.bf16 %v1351, %v1347
        %v1384 = vpack.c.bf16 %v1352, %v1348
        %v1385 = vpack.c.bf16 %v1353, %v1349
        %v1386 = vpack.c.bf16 %v1354, %v1350
        %v1387 = vld [vmem:[%s3] sm:$0xf]
        %v1388 = vld [vmem:[%s3 + $0x4] sm:$0xf]
        %v1389 = vld [vmem:[%s3 + $0x8] sm:$0xf]
        %v1390 = vld [vmem:[%s3 + $0xc] sm:$0xf]
        %v1391 = vld [vmem:[%s3 + $0x10] sm:$0xf]
        %v1392 = vld [vmem:[%s3 + $0x14] sm:$0xf]
        %v1393 = vld [vmem:[%s3 + $0x18] sm:$0xf]
        %v1394 = vld [vmem:[%s3 + $0x1c] sm:$0xf]
        %v1395 = vld [vmem:[%s3 + $0x20] sm:$0xf]
        %v1396 = vld [vmem:[%s3 + $0x24] sm:$0xf]
        %v1397 = vld [vmem:[%s3 + $0x28] sm:$0xf]
        %v1398 = vld [vmem:[%s3 + $0x2c] sm:$0xf]
        %v1399 = vld [vmem:[%s3 + $0x30] sm:$0xf]
        %v1400 = vld [vmem:[%s3 + $0x34] sm:$0xf]
        %v1401 = vld [vmem:[%s3 + $0x38] sm:$0xf]
        %v1402 = vld [vmem:[%s3 + $0x3c] sm:$0xf]
        %v1403 = vld [vmem:[%s4] sm:$0xff]
        %v1404 = vld [vmem:[%s4 + $0x8] sm:$0xff]
        %v1405 = vld [vmem:[%s4 + $0x10] sm:$0xff]
        %v1406 = vld [vmem:[%s4 + $0x18] sm:$0xff]
        %v1407 = vld [vmem:[%s4 + $0x20] sm:$0xff]
        %v1408 = vld [vmem:[%s4 + $0x28] sm:$0xff]
        %v1409 = vld [vmem:[%s4 + $0x30] sm:$0xff]
        %v1410 = vld [vmem:[%s4 + $0x38] sm:$0xff]
        %v1411 = vld [vmem:[%s4 + $0x40] sm:$0xff]
        %v1412 = vld [vmem:[%s4 + $0x48] sm:$0xff]
        %v1413 = vld [vmem:[%s4 + $0x50] sm:$0xff]
        %v1414 = vld [vmem:[%s4 + $0x58] sm:$0xff]
        %v1415 = vld [vmem:[%s4 + $0x60] sm:$0xff]
        %v1416 = vld [vmem:[%s4 + $0x68] sm:$0xff]
        %v1417 = vld [vmem:[%s4 + $0x70] sm:$0xff]
        %v1418 = vld [vmem:[%s4 + $0x78] sm:$0xff]
        %1420 = vset.pattern.permute.xlu0 0
        %1421 = vperm.xlu0 %1420, %v1403
        %v1422 = vpop.permute.xlu0 %1421
        %1425 = vset.pattern.permute.xlu0 0
        %1426 = vperm.xlu0 %1425, %v1404
        %v1427 = vpop.permute.xlu0 %1426
        %1430 = vset.pattern.permute.xlu0 0
        %1431 = vperm.xlu0 %1430, %v1405
        %v1432 = vpop.permute.xlu0 %1431
        %1435 = vset.pattern.permute.xlu0 0
        %1436 = vperm.xlu0 %1435, %v1406
        %v1437 = vpop.permute.xlu0 %1436
        %1440 = vset.pattern.permute.xlu0 0
        %1441 = vperm.xlu0 %1440, %v1407
        %v1442 = vpop.permute.xlu0 %1441
        %1445 = vset.pattern.permute.xlu0 0
        %1446 = vperm.xlu0 %1445, %v1408
        %v1447 = vpop.permute.xlu0 %1446
        %1450 = vset.pattern.permute.xlu0 0
        %1451 = vperm.xlu0 %1450, %v1409
        %v1452 = vpop.permute.xlu0 %1451
        %1455 = vset.pattern.permute.xlu0 0
        %1456 = vperm.xlu0 %1455, %v1410
        %v1457 = vpop.permute.xlu0 %1456
        %1460 = vset.pattern.permute.xlu0 0
        %1461 = vperm.xlu0 %1460, %v1411
        %v1462 = vpop.permute.xlu0 %1461
        %1465 = vset.pattern.permute.xlu0 0
        %1466 = vperm.xlu0 %1465, %v1412
        %v1467 = vpop.permute.xlu0 %1466
        %1470 = vset.pattern.permute.xlu0 0
        %1471 = vperm.xlu0 %1470, %v1413
        %v1472 = vpop.permute.xlu0 %1471
        %1475 = vset.pattern.permute.xlu0 0
        %1476 = vperm.xlu0 %1475, %v1414
        %v1477 = vpop.permute.xlu0 %1476
        %1480 = vset.pattern.permute.xlu0 0
        %1481 = vperm.xlu0 %1480, %v1415
        %v1482 = vpop.permute.xlu0 %1481
        %1485 = vset.pattern.permute.xlu0 0
        %1486 = vperm.xlu0 %1485, %v1416
        %v1487 = vpop.permute.xlu0 %1486
        %1490 = vset.pattern.permute.xlu0 0
        %1491 = vperm.xlu0 %1490, %v1417
        %v1492 = vpop.permute.xlu0 %1491
        %1495 = vset.pattern.permute.xlu0 0
        %1496 = vperm.xlu0 %1495, %v1418
        %v1497 = vpop.permute.xlu0 %1496
        %v1515 = vunpack.c.l.b16 %v1387
        %v1516 = vunpack.c.l.b16 %v1388
        %v1517 = vunpack.c.l.b16 %v1389
        %v1518 = vunpack.c.l.b16 %v1390
        %v1519 = vunpack.c.l.b16 %v1391
        %v1520 = vunpack.c.l.b16 %v1392
        %v1521 = vunpack.c.l.b16 %v1393
        %v1522 = vunpack.c.l.b16 %v1394
        %v1523 = vunpack.c.l.b16 %v1395
        %v1524 = vunpack.c.l.b16 %v1396
        %v1525 = vunpack.c.l.b16 %v1397
        %v1526 = vunpack.c.l.b16 %v1398
        %v1527 = vunpack.c.l.b16 %v1399
        %v1528 = vunpack.c.l.b16 %v1400
        %v1529 = vunpack.c.l.b16 %v1401
        %v1530 = vunpack.c.l.b16 %v1402
        %v1531 = vpack.c.b16 %v1516, %v1515
        %v1532 = vpack.c.b16 %v1518, %v1517
        %v1533 = vpack.c.b16 %v1520, %v1519
        %v1534 = vpack.c.b16 %v1522, %v1521
        %v1535 = vpack.c.b16 %v1524, %v1523
        %v1536 = vpack.c.b16 %v1526, %v1525
        %v1537 = vpack.c.b16 %v1528, %v1527
        %v1538 = vpack.c.b16 %v1530, %v1529
        %1547 = vmatprep.subr.bf16.mxu0 %v1356
        %1548 = vmatpush1.bf16.msra.mxu0 %v1355
        %1549 = vmatprep.subr.bf16.mxu0 %v1360
        %1550 = vmatpush1.bf16.msra.mxu0 %v1359
        %1551 = vmatprep.subr.bf16.mxu0 %v1364
        %1552 = vmatpush1.bf16.msra.mxu0 %v1363
        %1553 = vmatprep.subr.bf16.mxu0 %v1368
        %1554 = vmatpush1.bf16.msra.mxu0 %v1367
        %1555 = vmatprep.subr.bf16.mxu0 %v1372
        %1556 = vmatpush1.bf16.msra.mxu0 %v1371
        %1557 = vmatprep.subr.bf16.mxu0 %v1376
        %1558 = vmatpush1.bf16.msra.mxu0 %v1375
        %1559 = vmatprep.subr.bf16.mxu0 %v1380
        %1560 = vmatpush1.bf16.msra.mxu0 %v1379
        %1561 = vmatprep.subr.bf16.mxu0 %v1384
        %1562 = vmatpush1.bf16.msra.mxu0 %v1383
        %1563 = vmatprep.subr.bf16.mxu0 0
        %1564 = vmatpush1.bf16.msra.mxu0 0
        %1565 = vmatprep.subr.bf16.mxu0 0
        %1566 = vmatpush1.bf16.msra.mxu0 0
        %1567 = vmatprep.subr.bf16.mxu0 0
        %1568 = vmatpush1.bf16.msra.mxu0 0
        %1569 = vmatprep.subr.bf16.mxu0 0
        %1570 = vmatpush1.bf16.msra.mxu0 0
        %1571 = vmatprep.subr.bf16.mxu0 0
        %1572 = vmatpush1.bf16.msra.mxu0 0
        %1573 = vmatprep.subr.bf16.mxu0 0
        %1574 = vmatpush1.bf16.msra.mxu0 0
        %1575 = vmatprep.subr.bf16.mxu0 0
        %1576 = vmatpush1.bf16.msra.mxu0 0
        %1577 = vmatprep.subr.bf16.mxu0 0
        %1578 = vmatpush1.bf16.msra.mxu0 0
        %1579 = vmatprep.mubr.bf16.mxu0 0
        %1580 = vmatmul.mubr.bf16.gmra.mrb[0].mxu0 %v1531
        %v1581 = vpop.f32.mrb[0].mxu0
        %v1582 = vadd.f32 %v1422, %v1581
        %v1583 = vpop.f32.mrb[0].mxu0
        %v1584 = vadd.f32 %v1422, %v1583
        %v1585 = vpop.f32.mrb[0].mxu0
        %v1586 = vadd.f32 %v1427, %v1585
        %v1587 = vpop.f32.mrb[0].mxu0
        %v1588 = vadd.f32 %v1427, %v1587
        %1589 = vmatprep.mubr.bf16.mxu0 0
        %1590 = vmatmul.mubr.bf16.gmra.mrb[0].mxu0 %v1532
        %v1591 = vpop.f32.mrb[0].mxu0
        %v1592 = vadd.f32 %v1432, %v1591
        %v1593 = vpop.f32.mrb[0].mxu0
        %v1594 = vadd.f32 %v1432, %v1593
        %v1595 = vpop.f32.mrb[0].mxu0
        %v1596 = vadd.f32 %v1437, %v1595
        %v1597 = vpop.f32.mrb[0].mxu0
        %v1598 = vadd.f32 %v1437, %v1597
        %1599 = vmatprep.mubr.bf16.mxu0 0
        %1600 = vmatmul.mubr.bf16.gmra.mrb[0].mxu0 %v1533
        %v1601 = vpop.f32.mrb[0].mxu0
        %v1602 = vadd.f32 %v1442, %v1601
        %v1603 = vpop.f32.mrb[0].mxu0
        %v1604 = vadd.f32 %v1442, %v1603
        %v1605 = vpop.f32.mrb[0].mxu0
        %v1606 = vadd.f32 %v1447, %v1605
        %v1607 = vpop.f32.mrb[0].mxu0
        %v1608 = vadd.f32 %v1447, %v1607
        %1609 = vmatprep.mubr.bf16.mxu0 0
        %1610 = vmatmul.mubr.bf16.gmra.mrb[0].mxu0 %v1534
        %v1611 = vpop.f32.mrb[0].mxu0
        %v1612 = vadd.f32 %v1452, %v1611
        %v1613 = vpop.f32.mrb[0].mxu0
        %v1614 = vadd.f32 %v1452, %v1613
        %v1615 = vpop.f32.mrb[0].mxu0
        %v1616 = vadd.f32 %v1457, %v1615
        %v1617 = vpop.f32.mrb[0].mxu0
        %v1618 = vadd.f32 %v1457, %v1617
        %1619 = vmatprep.mubr.bf16.mxu0 0
        %1620 = vmatmul.mubr.bf16.gmra.mrb[0].mxu0 %v1535
        %v1621 = vpop.f32.mrb[0].mxu0
        %v1622 = vadd.f32 %v1462, %v1621
        %v1623 = vpop.f32.mrb[0].mxu0
        %v1624 = vadd.f32 %v1462, %v1623
        %v1625 = vpop.f32.mrb[0].mxu0
        %v1626 = vadd.f32 %v1467, %v1625
        %v1627 = vpop.f32.mrb[0].mxu0
        %v1628 = vadd.f32 %v1467, %v1627
        %1629 = vmatprep.mubr.bf16.mxu0 0
        %1630 = vmatmul.mubr.bf16.gmra.mrb[0].mxu0 %v1536
        %v1631 = vpop.f32.mrb[0].mxu0
        %v1632 = vadd.f32 %v1472, %v1631
        %v1633 = vpop.f32.mrb[0].mxu0
        %v1634 = vadd.f32 %v1472, %v1633
        %v1635 = vpop.f32.mrb[0].mxu0
        %v1636 = vadd.f32 %v1477, %v1635
        %v1637 = vpop.f32.mrb[0].mxu0
        %v1638 = vadd.f32 %v1477, %v1637
        %1639 = vmatprep.mubr.bf16.mxu0 0
        %1640 = vmatmul.mubr.bf16.gmra.mrb[0].mxu0 %v1537
        %v1641 = vpop.f32.mrb[0].mxu0
        %v1642 = vadd.f32 %v1482, %v1641
        %v1643 = vpop.f32.mrb[0].mxu0
        %v1644 = vadd.f32 %v1482, %v1643
        %v1645 = vpop.f32.mrb[0].mxu0
        %v1646 = vadd.f32 %v1487, %v1645
        %v1647 = vpop.f32.mrb[0].mxu0
        %v1648 = vadd.f32 %v1487, %v1647
        %1649 = vmatprep.mubr.bf16.mxu0 0
        %1650 = vmatmul.mubr.bf16.gmra.mrb[0].mxu0 %v1538
        %v1651 = vpop.f32.mrb[0].mxu0
        %v1652 = vadd.f32 %v1492, %v1651
        %v1653 = vpop.f32.mrb[0].mxu0
        %v1654 = vadd.f32 %v1492, %v1653
        %v1655 = vpop.f32.mrb[0].mxu0
        %v1656 = vadd.f32 %v1497, %v1655
        %v1657 = vpop.f32.mrb[0].mxu0
        %v1658 = vadd.f32 %v1497, %v1657
        %1659 = vdwg.mxu0
        %1660 = vmatprep.subr.bf16.mxu0 %v1358
        %1661 = vmatpush1.bf16.msra.mxu0 %v1357
        %1662 = vmatprep.subr.bf16.mxu0 %v1362
        %1663 = vmatpush1.bf16.msra.mxu0 %v1361
        %1664 = vmatprep.subr.bf16.mxu0 %v1366
        %1665 = vmatpush1.bf16.msra.mxu0 %v1365
        %1666 = vmatprep.subr.bf16.mxu0 %v1370
        %1667 = vmatpush1.bf16.msra.mxu0 %v1369
        %1668 = vmatprep.subr.bf16.mxu0 %v1374
        %1669 = vmatpush1.bf16.msra.mxu0 %v1373
        %1670 = vmatprep.subr.bf16.mxu0 %v1378
        %1671 = vmatpush1.bf16.msra.mxu0 %v1377
        %1672 = vmatprep.subr.bf16.mxu0 %v1382
        %1673 = vmatpush1.bf16.msra.mxu0 %v1381
        %1674 = vmatprep.subr.bf16.mxu0 %v1386
        %1675 = vmatpush1.bf16.msra.mxu0 %v1385
        %1676 = vmatprep.subr.bf16.mxu0 0
        %1677 = vmatpush1.bf16.msra.mxu0 0
        %1678 = vmatprep.subr.bf16.mxu0 0
        %1679 = vmatpush1.bf16.msra.mxu0 0
        %1680 = vmatprep.subr.bf16.mxu0 0
        %1681 = vmatpush1.bf16.msra.mxu0 0
        %1682 = vmatprep.subr.bf16.mxu0 0
        %1683 = vmatpush1.bf16.msra.mxu0 0
        %1684 = vmatprep.subr.bf16.mxu0 0
        %1685 = vmatpush1.bf16.msra.mxu0 0
        %1686 = vmatprep.subr.bf16.mxu0 0
        %1687 = vmatpush1.bf16.msra.mxu0 0
        %1688 = vmatprep.subr.bf16.mxu0 0
        %1689 = vmatpush1.bf16.msra.mxu0 0
        %1690 = vmatprep.subr.bf16.mxu0 0
        %1691 = vmatpush1.bf16.msra.mxu0 0
        %1692 = vmatprep.mubr.bf16.mxu0 0
        %1693 = vmatmul.mubr.bf16.gmra.mrb[0].mxu0 %v1531
        %v1694 = vpop.f32.mrb[0].mxu0
        %v1695 = vadd.f32 %v1422, %v1694
        %v1696 = vpop.f32.mrb[0].mxu0
        %v1697 = vadd.f32 %v1422, %v1696
        %v1698 = vpop.f32.mrb[0].mxu0
        %v1699 = vadd.f32 %v1427, %v1698
        %v1700 = vpop.f32.mrb[0].mxu0
        %v1701 = vadd.f32 %v1427, %v1700
        %1702 = vmatprep.mubr.bf16.mxu0 0
        %1703 = vmatmul.mubr.bf16.gmra.mrb[0].mxu0 %v1532
        %v1704 = vpop.f32.mrb[0].mxu0
        %v1705 = vadd.f32 %v1432, %v1704
        %v1706 = vpop.f32.mrb[0].mxu0
        %v1707 = vadd.f32 %v1432, %v1706
        %v1708 = vpop.f32.mrb[0].mxu0
        %v1709 = vadd.f32 %v1437, %v1708
        %v1710 = vpop.f32.mrb[0].mxu0
        %v1711 = vadd.f32 %v1437, %v1710
        %1712 = vmatprep.mubr.bf16.mxu0 0
        %1713 = vmatmul.mubr.bf16.gmra.mrb[0].mxu0 %v1533
        %v1714 = vpop.f32.mrb[0].mxu0
        %v1715 = vadd.f32 %v1442, %v1714
        %v1716 = vpop.f32.mrb[0].mxu0
        %v1717 = vadd.f32 %v1442, %v1716
        %v1718 = vpop.f32.mrb[0].mxu0
        %v1719 = vadd.f32 %v1447, %v1718
        %v1720 = vpop.f32.mrb[0].mxu0
        %v1721 = vadd.f32 %v1447, %v1720
        %1722 = vmatprep.mubr.bf16.mxu0 0
        %1723 = vmatmul.mubr.bf16.gmra.mrb[0].mxu0 %v1534
        %v1724 = vpop.f32.mrb[0].mxu0
        %v1725 = vadd.f32 %v1452, %v1724
        %v1726 = vpop.f32.mrb[0].mxu0
        %v1727 = vadd.f32 %v1452, %v1726
        %v1728 = vpop.f32.mrb[0].mxu0
        %v1729 = vadd.f32 %v1457, %v1728
        %v1730 = vpop.f32.mrb[0].mxu0
        %v1731 = vadd.f32 %v1457, %v1730
        %1732 = vmatprep.mubr.bf16.mxu0 0
        %1733 = vmatmul.mubr.bf16.gmra.mrb[0].mxu0 %v1535
        %v1734 = vpop.f32.mrb[0].mxu0
        %v1735 = vadd.f32 %v1462, %v1734
        %v1736 = vpop.f32.mrb[0].mxu0
        %v1737 = vadd.f32 %v1462, %v1736
        %v1738 = vpop.f32.mrb[0].mxu0
        %v1739 = vadd.f32 %v1467, %v1738
        %v1740 = vpop.f32.mrb[0].mxu0
        %v1741 = vadd.f32 %v1467, %v1740
        %1742 = vmatprep.mubr.bf16.mxu0 0
        %1743 = vmatmul.mubr.bf16.gmra.mrb[0].mxu0 %v1536
        %v1744 = vpop.f32.mrb[0].mxu0
        %v1745 = vadd.f32 %v1472, %v1744
        %v1746 = vpop.f32.mrb[0].mxu0
        %v1747 = vadd.f32 %v1472, %v1746
        %v1748 = vpop.f32.mrb[0].mxu0
        %v1749 = vadd.f32 %v1477, %v1748
        %v1750 = vpop.f32.mrb[0].mxu0
        %v1751 = vadd.f32 %v1477, %v1750
        %1752 = vmatprep.mubr.bf16.mxu0 0
        %1753 = vmatmul.mubr.bf16.gmra.mrb[0].mxu0 %v1537
        %v1754 = vpop.f32.mrb[0].mxu0
        %v1755 = vadd.f32 %v1482, %v1754
        %v1756 = vpop.f32.mrb[0].mxu0
        %v1757 = vadd.f32 %v1482, %v1756
        %v1758 = vpop.f32.mrb[0].mxu0
        %v1759 = vadd.f32 %v1487, %v1758
        %v1760 = vpop.f32.mrb[0].mxu0
        %v1761 = vadd.f32 %v1487, %v1760
        %1762 = vmatprep.mubr.bf16.mxu0 0
        %1763 = vmatmul.mubr.bf16.gmra.mrb[0].mxu0 %v1538
        %v1764 = vpop.f32.mrb[0].mxu0
        %v1765 = vadd.f32 %v1492, %v1764
        %v1766 = vpop.f32.mrb[0].mxu0
        %v1767 = vadd.f32 %v1492, %v1766
        %v1768 = vpop.f32.mrb[0].mxu0
        %v1769 = vadd.f32 %v1497, %v1768
        %v1770 = vpop.f32.mrb[0].mxu0
        %v1771 = vadd.f32 %v1497, %v1770
        %1772 = vdwg.mxu0
        %v1773 = vmax.f32 %v1582, %v1586
        %v1774 = vmax.f32 %v1773, %v1592
        %v1775 = vmax.f32 %v1774, %v1596
        %v1776 = vmax.f32 %v1775, %v1602
        %v1777 = vmax.f32 %v1776, %v1606
        %v1778 = vmax.f32 %v1777, %v1612
        %v1779 = vmax.f32 %v1778, %v1616
        %v1780 = vmax.f32 %v1779, %v1622
        %v1781 = vmax.f32 %v1780, %v1626
        %v1782 = vmax.f32 %v1781, %v1632
        %v1783 = vmax.f32 %v1782, %v1636
        %v1784 = vmax.f32 %v1783, %v1642
        %v1785 = vmax.f32 %v1784, %v1646
        %v1786 = vmax.f32 %v1785, %v1652
        %v1787 = vmax.f32 %v1786, %v1656
        %v1788 = vrot.slane %v1787, 4
        %v1789 = vmax.f32 %v1787, %v1788
        %v1790 = vrot.slane %v1789, 2
        %v1791 = vmax.f32 %v1789, %v1790
        %v1792 = vrot.slane %v1791, 1
        %v1793 = vmax.f32 %v1791, %v1792
        %v1794 = vmax.f32 %v1584, %v1588
        %v1795 = vmax.f32 %v1794, %v1594
        %v1796 = vmax.f32 %v1795, %v1598
        %v1797 = vmax.f32 %v1796, %v1604
        %v1798 = vmax.f32 %v1797, %v1608
        %v1799 = vmax.f32 %v1798, %v1614
        %v1800 = vmax.f32 %v1799, %v1618
        %v1801 = vmax.f32 %v1800, %v1624
        %v1802 = vmax.f32 %v1801, %v1628
        %v1803 = vmax.f32 %v1802, %v1634
        %v1804 = vmax.f32 %v1803, %v1638
        %v1805 = vmax.f32 %v1804, %v1644
        %v1806 = vmax.f32 %v1805, %v1648
        %v1807 = vmax.f32 %v1806, %v1654
        %v1808 = vmax.f32 %v1807, %v1658
        %v1809 = vrot.slane %v1808, 4
        %v1810 = vmax.f32 %v1808, %v1809
        %v1811 = vrot.slane %v1810, 2
        %v1812 = vmax.f32 %v1810, %v1811
        %v1813 = vrot.slane %v1812, 1
        %v1814 = vmax.f32 %v1812, %v1813
        %v1815 = vmax.f32 %v1695, %v1699
        %v1816 = vmax.f32 %v1815, %v1705
        %v1817 = vmax.f32 %v1816, %v1709
        %v1818 = vmax.f32 %v1817, %v1715
        %v1819 = vmax.f32 %v1818, %v1719
        %v1820 = vmax.f32 %v1819, %v1725
        %v1821 = vmax.f32 %v1820, %v1729
        %v1822 = vmax.f32 %v1821, %v1735
        %v1823 = vmax.f32 %v1822, %v1739
        %v1824 = vmax.f32 %v1823, %v1745
        %v1825 = vmax.f32 %v1824, %v1749
        %v1826 = vmax.f32 %v1825, %v1755
        %v1827 = vmax.f32 %v1826, %v1759
        %v1828 = vmax.f32 %v1827, %v1765
        %v1829 = vmax.f32 %v1828, %v1769
        %v1830 = vrot.slane %v1829, 4
        %v1831 = vmax.f32 %v1829, %v1830
        %v1832 = vrot.slane %v1831, 2
        %v1833 = vmax.f32 %v1831, %v1832
        %v1834 = vrot.slane %v1833, 1
        %v1835 = vmax.f32 %v1833, %v1834
        %v1836 = vmax.f32 %v1697, %v1701
        %v1837 = vmax.f32 %v1836, %v1707
        %v1838 = vmax.f32 %v1837, %v1711
        %v1839 = vmax.f32 %v1838, %v1717
        %v1840 = vmax.f32 %v1839, %v1721
        %v1841 = vmax.f32 %v1840, %v1727
        %v1842 = vmax.f32 %v1841, %v1731
        %v1843 = vmax.f32 %v1842, %v1737
        %v1844 = vmax.f32 %v1843, %v1741
        %v1845 = vmax.f32 %v1844, %v1747
        %v1846 = vmax.f32 %v1845, %v1751
        %v1847 = vmax.f32 %v1846, %v1757
        %v1848 = vmax.f32 %v1847, %v1761
        %v1849 = vmax.f32 %v1848, %v1767
        %v1850 = vmax.f32 %v1849, %v1771
        %v1851 = vrot.slane %v1850, 4
        %v1852 = vmax.f32 %v1850, %v1851
        %v1853 = vrot.slane %v1852, 2
        %v1854 = vmax.f32 %v1852, %v1853
        %v1855 = vrot.slane %v1854, 1
        %v1856 = vmax.f32 %v1854, %v1855
        %v1857 = vsub.f32 %v1582, %v1793
        %v1858 = vsub.f32 %v1584, %v1814
        %v1859 = vsub.f32 %v1695, %v1835
        %v1860 = vsub.f32 %v1697, %v1856
        %v1861 = vsub.f32 %v1586, %v1793
        %v1862 = vsub.f32 %v1588, %v1814
        %v1863 = vsub.f32 %v1699, %v1835
        %v1864 = vsub.f32 %v1701, %v1856
        %v1865 = vsub.f32 %v1592, %v1793
        %v1866 = vsub.f32 %v1594, %v1814
        %v1867 = vsub.f32 %v1705, %v1835
        %v1868 = vsub.f32 %v1707, %v1856
        %v1869 = vsub.f32 %v1596, %v1793
        %v1870 = vsub.f32 %v1598, %v1814
        %v1871 = vsub.f32 %v1709, %v1835
        %v1872 = vsub.f32 %v1711, %v1856
        %v1873 = vsub.f32 %v1602, %v1793
        %v1874 = vsub.f32 %v1604, %v1814
        %v1875 = vsub.f32 %v1715, %v1835
        %v1876 = vsub.f32 %v1717, %v1856
        %v1877 = vsub.f32 %v1606, %v1793
        %v1878 = vsub.f32 %v1608, %v1814
        %v1879 = vsub.f32 %v1719, %v1835
        %v1880 = vsub.f32 %v1721, %v1856
        %v1881 = vsub.f32 %v1612, %v1793
        %v1882 = vsub.f32 %v1614, %v1814
        %v1883 = vsub.f32 %v1725, %v1835
        %v1884 = vsub.f32 %v1727, %v1856
        %v1885 = vsub.f32 %v1616, %v1793
        %v1886 = vsub.f32 %v1618, %v1814
        %v1887 = vsub.f32 %v1729, %v1835
        %v1888 = vsub.f32 %v1731, %v1856
        %v1889 = vsub.f32 %v1622, %v1793
        %v1890 = vsub.f32 %v1624, %v1814
        %v1891 = vsub.f32 %v1735, %v1835
        %v1892 = vsub.f32 %v1737, %v1856
        %v1893 = vsub.f32 %v1626, %v1793
        %v1894 = vsub.f32 %v1628, %v1814
        %v1895 = vsub.f32 %v1739, %v1835
        %v1896 = vsub.f32 %v1741, %v1856
        %v1897 = vsub.f32 %v1632, %v1793
        %v1898 = vsub.f32 %v1634, %v1814
        %v1899 = vsub.f32 %v1745, %v1835
        %v1900 = vsub.f32 %v1747, %v1856
        %v1901 = vsub.f32 %v1636, %v1793
        %v1902 = vsub.f32 %v1638, %v1814
        %v1903 = vsub.f32 %v1749, %v1835
        %v1904 = vsub.f32 %v1751, %v1856
        %v1905 = vsub.f32 %v1642, %v1793
        %v1906 = vsub.f32 %v1644, %v1814
        %v1907 = vsub.f32 %v1755, %v1835
        %v1908 = vsub.f32 %v1757, %v1856
        %v1909 = vsub.f32 %v1646, %v1793
        %v1910 = vsub.f32 %v1648, %v1814
        %v1911 = vsub.f32 %v1759, %v1835
        %v1912 = vsub.f32 %v1761, %v1856
        %v1913 = vsub.f32 %v1652, %v1793
        %v1914 = vsub.f32 %v1654, %v1814
        %v1915 = vsub.f32 %v1765, %v1835
        %v1916 = vsub.f32 %v1767, %v1856
        %v1917 = vsub.f32 %v1656, %v1793
        %v1918 = vsub.f32 %v1658, %v1814
        %v1919 = vsub.f32 %v1769, %v1835
        %v1920 = vsub.f32 %v1771, %v1856
        %v1921 = vmul.f32 %v1857, 1.442695
        %v1922 = vpow.pop %v1921
        %v1923 = vmul.f32 %v1858, 1.442695
        %v1924 = vpow.pop %v1923
        %v1925 = vmul.f32 %v1859, 1.442695
        %v1926 = vpow.pop %v1925
        %v1927 = vmul.f32 %v1860, 1.442695
        %v1928 = vpow.pop %v1927
        %v1929 = vmul.f32 %v1861, 1.442695
        %v1930 = vpow.pop %v1929
        %v1931 = vmul.f32 %v1862, 1.442695
        %v1932 = vpow.pop %v1931
        %v1933 = vmul.f32 %v1863, 1.442695
        %v1934 = vpow.pop %v1933
        %v1935 = vmul.f32 %v1864, 1.442695
        %v1936 = vpow.pop %v1935
        %v1937 = vmul.f32 %v1865, 1.442695
        %v1938 = vpow.pop %v1937
        %v1939 = vmul.f32 %v1866, 1.442695
        %v1940 = vpow.pop %v1939
        %v1941 = vmul.f32 %v1867, 1.442695
        %v1942 = vpow.pop %v1941
        %v1943 = vmul.f32 %v1868, 1.442695
        %v1944 = vpow.pop %v1943
        %v1945 = vmul.f32 %v1869, 1.442695
        %v1946 = vpow.pop %v1945
        %v1947 = vmul.f32 %v1870, 1.442695
        %v1948 = vpow.pop %v1947
        %v1949 = vmul.f32 %v1871, 1.442695
        %v1950 = vpow.pop %v1949
        %v1951 = vmul.f32 %v1872, 1.442695
        %v1952 = vpow.pop %v1951
        %v1953 = vmul.f32 %v1873, 1.442695
        %v1954 = vpow.pop %v1953
        %v1955 = vmul.f32 %v1874, 1.442695
        %v1956 = vpow.pop %v1955
        %v1957 = vmul.f32 %v1875, 1.442695
        %v1958 = vpow.pop %v1957
        %v1959 = vmul.f32 %v1876, 1.442695
        %v1960 = vpow.pop %v1959
        %v1961 = vmul.f32 %v1877, 1.442695
        %v1962 = vpow.pop %v1961
        %v1963 = vmul.f32 %v1878, 1.442695
        %v1964 = vpow.pop %v1963
        %v1965 = vmul.f32 %v1879, 1.442695
        %v1966 = vpow.pop %v1965
        %v1967 = vmul.f32 %v1880, 1.442695
        %v1968 = vpow.pop %v1967
        %v1969 = vmul.f32 %v1881, 1.442695
        %v1970 = vpow.pop %v1969
        %v1971 = vmul.f32 %v1882, 1.442695
        %v1972 = vpow.pop %v1971
        %v1973 = vmul.f32 %v1883, 1.442695
        %v1974 = vpow.pop %v1973
        %v1975 = vmul.f32 %v1884, 1.442695
        %v1976 = vpow.pop %v1975
        %v1977 = vmul.f32 %v1885, 1.442695
        %v1978 = vpow.pop %v1977
        %v1979 = vmul.f32 %v1886, 1.442695
        %v1980 = vpow.pop %v1979
        %v1981 = vmul.f32 %v1887, 1.442695
        %v1982 = vpow.pop %v1981
        %v1983 = vmul.f32 %v1888, 1.442695
        %v1984 = vpow.pop %v1983
        %v1985 = vmul.f32 %v1889, 1.442695
        %v1986 = vpow.pop %v1985
        %v1987 = vmul.f32 %v1890, 1.442695
        %v1988 = vpow.pop %v1987
        %v1989 = vmul.f32 %v1891, 1.442695
        %v1990 = vpow.pop %v1989
        %v1991 = vmul.f32 %v1892, 1.442695
        %v1992 = vpow.pop %v1991
        %v1993 = vmul.f32 %v1893, 1.442695
        %v1994 = vpow.pop %v1993
        %v1995 = vmul.f32 %v1894, 1.442695
        %v1996 = vpow.pop %v1995
        %v1997 = vmul.f32 %v1895, 1.442695
        %v1998 = vpow.pop %v1997
        %v1999 = vmul.f32 %v1896, 1.442695
        %v2000 = vpow.pop %v1999
        %v2001 = vmul.f32 %v1897, 1.442695
        %v2002 = vpow.pop %v2001
        %v2003 = vmul.f32 %v1898, 1.442695
        %v2004 = vpow.pop %v2003
        %v2005 = vmul.f32 %v1899, 1.442695
        %v2006 = vpow.pop %v2005
        %v2007 = vmul.f32 %v1900, 1.442695
        %v2008 = vpow.pop %v2007
        %v2009 = vmul.f32 %v1901, 1.442695
        %v2010 = vpow.pop %v2009
        %v2011 = vmul.f32 %v1902, 1.442695
        %v2012 = vpow.pop %v2011
        %v2013 = vmul.f32 %v1903, 1.442695
        %v2014 = vpow.pop %v2013
        %v2015 = vmul.f32 %v1904, 1.442695
        %v2016 = vpow.pop %v2015
        %v2017 = vmul.f32 %v1905, 1.442695
        %v2018 = vpow.pop %v2017
        %v2019 = vmul.f32 %v1906, 1.442695
        %v2020 = vpow.pop %v2019
        %v2021 = vmul.f32 %v1907, 1.442695
        %v2022 = vpow.pop %v2021
        %v2023 = vmul.f32 %v1908, 1.442695
        %v2024 = vpow.pop %v2023
        %v2025 = vmul.f32 %v1909, 1.442695
        %v2026 = vpow.pop %v2025
        %v2027 = vmul.f32 %v1910, 1.442695
        %v2028 = vpow.pop %v2027
        %v2029 = vmul.f32 %v1911, 1.442695
        %v2030 = vpow.pop %v2029
        %v2031 = vmul.f32 %v1912, 1.442695
        %v2032 = vpow.pop %v2031
        %v2033 = vmul.f32 %v1913, 1.442695
        %v2034 = vpow.pop %v2033
        %v2035 = vmul.f32 %v1914, 1.442695
        %v2036 = vpow.pop %v2035
        %v2037 = vmul.f32 %v1915, 1.442695
        %v2038 = vpow.pop %v2037
        %v2039 = vmul.f32 %v1916, 1.442695
        %v2040 = vpow.pop %v2039
        %v2041 = vmul.f32 %v1917, 1.442695
        %v2042 = vpow.pop %v2041
        %v2043 = vmul.f32 %v1918, 1.442695
        %v2044 = vpow.pop %v2043
        %v2045 = vmul.f32 %v1919, 1.442695
        %v2046 = vpow.pop %v2045
        %v2047 = vmul.f32 %v1920, 1.442695
        %v2048 = vpow.pop %v2047
        %v2049 = vadd.f32 %v1922, %v1930
        %v2050 = vadd.f32 %v2049, %v1938
        %v2051 = vadd.f32 %v2050, %v1946
        %v2052 = vadd.f32 %v2051, %v1954
        %v2053 = vadd.f32 %v2052, %v1962
        %v2054 = vadd.f32 %v2053, %v1970
        %v2055 = vadd.f32 %v2054, %v1978
        %v2056 = vadd.f32 %v2055, %v1986
        %v2057 = vadd.f32 %v2056, %v1994
        %v2058 = vadd.f32 %v2057, %v2002
        %v2059 = vadd.f32 %v2058, %v2010
        %v2060 = vadd.f32 %v2059, %v2018
        %v2061 = vadd.f32 %v2060, %v2026
        %v2062 = vadd.f32 %v2061, %v2034
        %v2063 = vadd.f32 %v2062, %v2042
        %v2064 = vrot.slane %v2063, 4
        %v2065 = vadd.f32 %v2063, %v2064
        %v2066 = vrot.slane %v2065, 2
        %v2067 = vadd.f32 %v2065, %v2066
        %v2068 = vrot.slane %v2067, 1
        %v2069 = vadd.f32 %v2067, %v2068
        %v2070 = vadd.f32 %v1924, %v1932
        %v2071 = vadd.f32 %v2070, %v1940
        %v2072 = vadd.f32 %v2071, %v1948
        %v2073 = vadd.f32 %v2072, %v1956
        %v2074 = vadd.f32 %v2073, %v1964
        %v2075 = vadd.f32 %v2074, %v1972
        %v2076 = vadd.f32 %v2075, %v1980
        %v2077 = vadd.f32 %v2076, %v1988
        %v2078 = vadd.f32 %v2077, %v1996
        %v2079 = vadd.f32 %v2078, %v2004
        %v2080 = vadd.f32 %v2079, %v2012
        %v2081 = vadd.f32 %v2080, %v2020
        %v2082 = vadd.f32 %v2081, %v2028
        %v2083 = vadd.f32 %v2082, %v2036
        %v2084 = vadd.f32 %v2083, %v2044
        %v2085 = vrot.slane %v2084, 4
        %v2086 = vadd.f32 %v2084, %v2085
        %v2087 = vrot.slane %v2086, 2
        %v2088 = vadd.f32 %v2086, %v2087
        %v2089 = vrot.slane %v2088, 1
        %v2090 = vadd.f32 %v2088, %v2089
        %v2091 = vadd.f32 %v1926, %v1934
        %v2092 = vadd.f32 %v2091, %v1942
        %v2093 = vadd.f32 %v2092, %v1950
        %v2094 = vadd.f32 %v2093, %v1958
        %v2095 = vadd.f32 %v2094, %v1966
        %v2096 = vadd.f32 %v2095, %v1974
        %v2097 = vadd.f32 %v2096, %v1982
        %v2098 = vadd.f32 %v2097, %v1990
        %v2099 = vadd.f32 %v2098, %v1998
        %v2100 = vadd.f32 %v2099, %v2006
        %v2101 = vadd.f32 %v2100, %v2014
        %v2102 = vadd.f32 %v2101, %v2022
        %v2103 = vadd.f32 %v2102, %v2030
        %v2104 = vadd.f32 %v2103, %v2038
        %v2105 = vadd.f32 %v2104, %v2046
        %v2106 = vrot.slane %v2105, 4
        %v2107 = vadd.f32 %v2105, %v2106
        %v2108 = vrot.slane %v2107, 2
        %v2109 = vadd.f32 %v2107, %v2108
        %v2110 = vrot.slane %v2109, 1
        %v2111 = vadd.f32 %v2109, %v2110
        %v2112 = vadd.f32 %v1928, %v1936
        %v2113 = vadd.f32 %v2112, %v1944
        %v2114 = vadd.f32 %v2113, %v1952
        %v2115 = vadd.f32 %v2114, %v1960
        %v2116 = vadd.f32 %v2115, %v1968
        %v2117 = vadd.f32 %v2116, %v1976
        %v2118 = vadd.f32 %v2117, %v1984
        %v2119 = vadd.f32 %v2118, %v1992
        %v2120 = vadd.f32 %v2119, %v2000
        %v2121 = vadd.f32 %v2120, %v2008
        %v2122 = vadd.f32 %v2121, %v2016
        %v2123 = vadd.f32 %v2122, %v2024
        %v2124 = vadd.f32 %v2123, %v2032
        %v2125 = vadd.f32 %v2124, %v2040
        %v2126 = vadd.f32 %v2125, %v2048
        %v2127 = vrot.slane %v2126, 4
        %v2128 = vadd.f32 %v2126, %v2127
        %v2129 = vrot.slane %v2128, 2
        %v2130 = vadd.f32 %v2128, %v2129
        %v2131 = vrot.slane %v2130, 1
        %v2132 = vadd.f32 %v2130, %v2131
        %v2133 = vrcp.pop %v2069
        %v2134 = vmul.f32 1.0, %v2133
        %v2135 = vrcp.pop %v2090
        %v2136 = vmul.f32 1.0, %v2135
        %v2137 = vrcp.pop %v2111
        %v2138 = vmul.f32 1.0, %v2137
        %v2139 = vrcp.pop %v2132
        %v2140 = vmul.f32 1.0, %v2139
        %v2141 = vmul.f32 %v1922, %v2134
        %v2142 = vmul.f32 %v1924, %v2136
        %v2143 = vmul.f32 %v1926, %v2138
        %v2144 = vmul.f32 %v1928, %v2140
        %v2145 = vmul.f32 %v1930, %v2134
        %v2146 = vmul.f32 %v1932, %v2136
        %v2147 = vmul.f32 %v1934, %v2138
        %v2148 = vmul.f32 %v1936, %v2140
        %v2149 = vmul.f32 %v1938, %v2134
        %v2150 = vmul.f32 %v1940, %v2136
        %v2151 = vmul.f32 %v1942, %v2138
        %v2152 = vmul.f32 %v1944, %v2140
        %v2153 = vmul.f32 %v1946, %v2134
        %v2154 = vmul.f32 %v1948, %v2136
        %v2155 = vmul.f32 %v1950, %v2138
        %v2156 = vmul.f32 %v1952, %v2140
        %v2157 = vmul.f32 %v1954, %v2134
        %v2158 = vmul.f32 %v1956, %v2136
        %v2159 = vmul.f32 %v1958, %v2138
        %v2160 = vmul.f32 %v1960, %v2140
        %v2161 = vmul.f32 %v1962, %v2134
        %v2162 = vmul.f32 %v1964, %v2136
        %v2163 = vmul.f32 %v1966, %v2138
        %v2164 = vmul.f32 %v1968, %v2140
        %v2165 = vmul.f32 %v1970, %v2134
        %v2166 = vmul.f32 %v1972, %v2136
        %v2167 = vmul.f32 %v1974, %v2138
        %v2168 = vmul.f32 %v1976, %v2140
        %v2169 = vmul.f32 %v1978, %v2134
        %v2170 = vmul.f32 %v1980, %v2136
        %v2171 = vmul.f32 %v1982, %v2138
        %v2172 = vmul.f32 %v1984, %v2140
        %v2173 = vmul.f32 %v1986, %v2134
        %v2174 = vmul.f32 %v1988, %v2136
        %v2175 = vmul.f32 %v1990, %v2138
        %v2176 = vmul.f32 %v1992, %v2140
        %v2177 = vmul.f32 %v1994, %v2134
        %v2178 = vmul.f32 %v1996, %v2136
        %v2179 = vmul.f32 %v1998, %v2138
        %v2180 = vmul.f32 %v2000, %v2140
        %v2181 = vmul.f32 %v2002, %v2134
        %v2182 = vmul.f32 %v2004, %v2136
        %v2183 = vmul.f32 %v2006, %v2138
        %v2184 = vmul.f32 %v2008, %v2140
        %v2185 = vmul.f32 %v2010, %v2134
        %v2186 = vmul.f32 %v2012, %v2136
        %v2187 = vmul.f32 %v2014, %v2138
        %v2188 = vmul.f32 %v2016, %v2140
        %v2189 = vmul.f32 %v2018, %v2134
        %v2190 = vmul.f32 %v2020, %v2136
        %v2191 = vmul.f32 %v2022, %v2138
        %v2192 = vmul.f32 %v2024, %v2140
        %v2193 = vmul.f32 %v2026, %v2134
        %v2194 = vmul.f32 %v2028, %v2136
        %v2195 = vmul.f32 %v2030, %v2138
        %v2196 = vmul.f32 %v2032, %v2140
        %v2197 = vmul.f32 %v2034, %v2134
        %v2198 = vmul.f32 %v2036, %v2136
        %v2199 = vmul.f32 %v2038, %v2138
        %v2200 = vmul.f32 %v2040, %v2140
        %v2201 = vmul.f32 %v2042, %v2134
        %v2202 = vmul.f32 %v2044, %v2136
        %v2203 = vmul.f32 %v2046, %v2138
        %v2204 = vmul.f32 %v2048, %v2140
        %2205 = vst [vmem:[%s765] sm:$0xff] %v2141
        %2206 = vst [vmem:[%s765 + $0x8] sm:$0xff] %v2142
        %2207 = vst [vmem:[%s765 + $0x10] sm:$0xff] %v2143
        %2208 = vst [vmem:[%s765 + $0x18] sm:$0xff] %v2144
        %2209 = vst [vmem:[%s765 + $0x20] sm:$0xff] %v2145
        %2210 = vst [vmem:[%s765 + $0x28] sm:$0xff] %v2146
        %2211 = vst [vmem:[%s765 + $0x30] sm:$0xff] %v2147
        %2212 = vst [vmem:[%s765 + $0x38] sm:$0xff] %v2148
        %2213 = vst [vmem:[%s765 + $0x40] sm:$0xff] %v2149
        %2214 = vst [vmem:[%s765 + $0x48] sm:$0xff] %v2150
        %2215 = vst [vmem:[%s765 + $0x50] sm:$0xff] %v2151
        %2216 = vst [vmem:[%s765 + $0x58] sm:$0xff] %v2152
        %2217 = vst [vmem:[%s765 + $0x60] sm:$0xff] %v2153
        %2218 = vst [vmem:[%s765 + $0x68] sm:$0xff] %v2154
        %2219 = vst [vmem:[%s765 + $0x70] sm:$0xff] %v2155
        %2220 = vst [vmem:[%s765 + $0x78] sm:$0xff] %v2156
        %2221 = vst [vmem:[%s765 + $0x80] sm:$0xff] %v2157
        %2222 = vst [vmem:[%s765 + $0x88] sm:$0xff] %v2158
        %2223 = vst [vmem:[%s765 + $0x90] sm:$0xff] %v2159
        %2224 = vst [vmem:[%s765 + $0x98] sm:$0xff] %v2160
        %2225 = vst [vmem:[%s765 + $0xa0] sm:$0xff] %v2161
        %2226 = vst [vmem:[%s765 + $0xa8] sm:$0xff] %v2162
        %2227 = vst [vmem:[%s765 + $0xb0] sm:$0xff] %v2163
        %2228 = vst [vmem:[%s765 + $0xb8] sm:$0xff] %v2164
        %2229 = vst [vmem:[%s765 + $0xc0] sm:$0xff] %v2165
        %2230 = vst [vmem:[%s765 + $0xc8] sm:$0xff] %v2166
        %2231 = vst [vmem:[%s765 + $0xd0] sm:$0xff] %v2167
        %2232 = vst [vmem:[%s765 + $0xd8] sm:$0xff] %v2168
        %2233 = vst [vmem:[%s765 + $0xe0] sm:$0xff] %v2169
        %2234 = vst [vmem:[%s765 + $0xe8] sm:$0xff] %v2170
        %2235 = vst [vmem:[%s765 + $0xf0] sm:$0xff] %v2171
        %2236 = vst [vmem:[%s765 + $0xf8] sm:$0xff] %v2172
        %2237 = vst [vmem:[%s765 + $0x100] sm:$0xff] %v2173
        %2238 = vst [vmem:[%s765 + $0x108] sm:$0xff] %v2174
        %2239 = vst [vmem:[%s765 + $0x110] sm:$0xff] %v2175
        %2240 = vst [vmem:[%s765 + $0x118] sm:$0xff] %v2176
        %2241 = vst [vmem:[%s765 + $0x120] sm:$0xff] %v2177
        %2242 = vst [vmem:[%s765 + $0x128] sm:$0xff] %v2178
        %2243 = vst [vmem:[%s765 + $0x130] sm:$0xff] %v2179
        %2244 = vst [vmem:[%s765 + $0x138] sm:$0xff] %v2180
        %2245 = vst [vmem:[%s765 + $0x140] sm:$0xff] %v2181
        %2246 = vst [vmem:[%s765 + $0x148] sm:$0xff] %v2182
        %2247 = vst [vmem:[%s765 + $0x150] sm:$0xff] %v2183
        %2248 = vst [vmem:[%s765 + $0x158] sm:$0xff] %v2184
        %2249 = vst [vmem:[%s765 + $0x160] sm:$0xff] %v2185
        %2250 = vst [vmem:[%s765 + $0x168] sm:$0xff] %v2186
        %2251 = vst [vmem:[%s765 + $0x170] sm:$0xff] %v2187
        %2252 = vst [vmem:[%s765 + $0x178] sm:$0xff] %v2188
        %2253 = vst [vmem:[%s765 + $0x180] sm:$0xff] %v2189
        %2254 = vst [vmem:[%s765 + $0x188] sm:$0xff] %v2190
        %2255 = vst [vmem:[%s765 + $0x190] sm:$0xff] %v2191
        %2256 = vst [vmem:[%s765 + $0x198] sm:$0xff] %v2192
        %2257 = vst [vmem:[%s765 + $0x1a0] sm:$0xff] %v2193
        %2258 = vst [vmem:[%s765 + $0x1a8] sm:$0xff] %v2194
        %2259 = vst [vmem:[%s765 + $0x1b0] sm:$0xff] %v2195
        %2260 = vst [vmem:[%s765 + $0x1b8] sm:$0xff] %v2196
        %2261 = vst [vmem:[%s765 + $0x1c0] sm:$0xff] %v2197
        %2262 = vst [vmem:[%s765 + $0x1c8] sm:$0xff] %v2198
        %2263 = vst [vmem:[%s765 + $0x1d0] sm:$0xff] %v2199
        %2264 = vst [vmem:[%s765 + $0x1d8] sm:$0xff] %v2200
        %2265 = vst [vmem:[%s765 + $0x1e0] sm:$0xff] %v2201
        %2266 = vst [vmem:[%s765 + $0x1e8] sm:$0xff] %v2202
        %2267 = vst [vmem:[%s765 + $0x1f0] sm:$0xff] %v2203
        %2268 = vst [vmem:[%s765 + $0x1f8] sm:$0xff] %v2204
        %s2269 = sand.u32 %s150, 1
        %s2270 = sand.u32 %s150, 1
        %s2271 = smul.addr %s2270, 512
        %s2272 = scalar_lea.vmem [#allocation3], %s2271
        // Predicated region
        $region107: #{tpu_custom_call.1} parent=101 // pred_check
          %p2273 = pneg %p160
        $region108: #{tpu_custom_call.1} parent=101 // pred_check_branch
          %2275 = sbr.rel (%p2273) target = $region110
        $region109: #{tpu_custom_call.1} parent=101 // pred_region
          %s2276 = smul.u32 4, %s21
          %s2277 = ssub.s32 5, %s2276
          %p2278 = scmp.lt.s32.totalorder %s2277, 4
          %s2279 = scalar_select %p2278, %s2277, 4
          %s2280 = smul.u32 2048, %s2279
          %p2281 = scmp.ne.s32.totalorder 0, %s2280
          %s2282 = smul.addr %s20, 80
          %s2283 = sadd.s32 %s2276, %s2282
          %s2284 = smul.addr %s2283, 8
          %s2285 = scalar_lea.vmem %s5, %s2284
          %s2286 = smul.u32 %s2279, 8
          // Predicated region
          $region111: #{tpu_custom_call.1} parent=109 // pred_check
            %p2287 = pneg %p2281
          $region112: #{tpu_custom_call.1} parent=109 // pred_check_branch
            %2289 = sbr.rel (%p2287) target = $region114
          $region113: #{tpu_custom_call.1} parent=109 // pred_region
            %p2290 = scmp.lt.u32.totalorder %s2286, 8
            %p2291 = pneg %p2290
            // Predicated region
            $region115: #{tpu_custom_call.1} parent=113 // pred_check
              _
            $region116: #{tpu_custom_call.1} parent=113 // pred_check_branch
              %2293 = sbr.rel (%p2290) target = $region118
            $region117: #{tpu_custom_call.1} parent=113 // pred_region
              %s2338 = sand.u32 %s2286, 7
              %p2339 = scmp.eq.s32.totalorder %s2338, 0
              // Predicated region
              $region130: #{tpu_custom_call.1} parent=117 // pred_check
                %p2340 = pneg %p2339
              $region131: #{tpu_custom_call.1} parent=117 // pred_check_branch
                %2342 = sbr.rel (%p2340) target = $region133
              $region132: #{tpu_custom_call.1} parent=117 // pred_region
                %s2343 = sshrl.u32 %s2286, 3
                %s2344 = sshrl.u32 %s2343, 2
                // While loop
                $region134: #{tpu_custom_call.1} parent=132 // loop_pre_header
                  _
                $region135: #{tpu_custom_call.1} parent=132 // loop_header
                  %s2348 = sphi 0, %s2350
                  %p2349 = scmp.ge.s32.totalorder %s2348, %s2344
                  %s2353 = sphi 0, %s2486
                  %s2354 = sphi %s2272, %s2489
                  %s2355 = sphi %s2285, %s2490
                $region136: #{tpu_custom_call.1} parent=132 // loop_header_branch
                  %2352 = sbr.rel (%p2349) target = $region140
                $region137: #{tpu_custom_call.1} parent=132 // loop_body
                  %v2356 = vld [vmem:[%s2354] sm:$0xff]
                  %2357 = vst [vmem:[%s2355] sm:$0xff] %v2356
                  %v2358 = vld [vmem:[%s2354 + $0x8] sm:$0xff]
                  %2359 = vst [vmem:[%s2355 + $0x8] sm:$0xff] %v2358
                  %v2360 = vld [vmem:[%s2354 + $0x10] sm:$0xff]
                  %2361 = vst [vmem:[%s2355 + $0x10] sm:$0xff] %v2360
                  %v2362 = vld [vmem:[%s2354 + $0x18] sm:$0xff]
                  %2363 = vst [vmem:[%s2355 + $0x18] sm:$0xff] %v2362
                  %v2364 = vld [vmem:[%s2354 + $0x20] sm:$0xff]
                  %2365 = vst [vmem:[%s2355 + $0x28] sm:$0xff] %v2364
                  %v2366 = vld [vmem:[%s2354 + $0x28] sm:$0xff]
                  %2367 = vst [vmem:[%s2355 + $0x30] sm:$0xff] %v2366
                  %v2368 = vld [vmem:[%s2354 + $0x30] sm:$0xff]
                  %2369 = vst [vmem:[%s2355 + $0x38] sm:$0xff] %v2368
                  %v2370 = vld [vmem:[%s2354 + $0x38] sm:$0xff]
                  %2371 = vst [vmem:[%s2355 + $0x40] sm:$0xff] %v2370
                  %v2372 = vld [vmem:[%s2354 + $0x40] sm:$0xff]
                  %2373 = vst [vmem:[%s2355 + $0x50] sm:$0xff] %v2372
                  %v2374 = vld [vmem:[%s2354 + $0x48] sm:$0xff]
                  %2375 = vst [vmem:[%s2355 + $0x58] sm:$0xff] %v2374
                  %v2376 = vld [vmem:[%s2354 + $0x50] sm:$0xff]
                  %2377 = vst [vmem:[%s2355 + $0x60] sm:$0xff] %v2376
                  %v2378 = vld [vmem:[%s2354 + $0x58] sm:$0xff]
                  %2379 = vst [vmem:[%s2355 + $0x68] sm:$0xff] %v2378
                  %v2380 = vld [vmem:[%s2354 + $0x60] sm:$0xff]
                  %2381 = vst [vmem:[%s2355 + $0x78] sm:$0xff] %v2380
                  %v2382 = vld [vmem:[%s2354 + $0x68] sm:$0xff]
                  %2383 = vst [vmem:[%s2355 + $0x80] sm:$0xff] %v2382
                  %v2384 = vld [vmem:[%s2354 + $0x70] sm:$0xff]
                  %2385 = vst [vmem:[%s2355 + $0x88] sm:$0xff] %v2384
                  %v2386 = vld [vmem:[%s2354 + $0x78] sm:$0xff]
                  %2387 = vst [vmem:[%s2355 + $0x90] sm:$0xff] %v2386
                  %v2388 = vld [vmem:[%s2354 + $0x80] sm:$0xff]
                  %2389 = vst [vmem:[%s2355 + $0xa0] sm:$0xff] %v2388
                  %v2390 = vld [vmem:[%s2354 + $0x88] sm:$0xff]
                  %2391 = vst [vmem:[%s2355 + $0xa8] sm:$0xff] %v2390
                  %v2392 = vld [vmem:[%s2354 + $0x90] sm:$0xff]
                  %2393 = vst [vmem:[%s2355 + $0xb0] sm:$0xff] %v2392
                  %v2394 = vld [vmem:[%s2354 + $0x98] sm:$0xff]
                  %2395 = vst [vmem:[%s2355 + $0xb8] sm:$0xff] %v2394
                  %v2396 = vld [vmem:[%s2354 + $0xa0] sm:$0xff]
                  %2397 = vst [vmem:[%s2355 + $0xc8] sm:$0xff] %v2396
                  %v2398 = vld [vmem:[%s2354 + $0xa8] sm:$0xff]
                  %2399 = vst [vmem:[%s2355 + $0xd0] sm:$0xff] %v2398
                  %v2400 = vld [vmem:[%s2354 + $0xb0] sm:$0xff]
                  %2401 = vst [vmem:[%s2355 + $0xd8] sm:$0xff] %v2400
                  %v2402 = vld [vmem:[%s2354 + $0xb8] sm:$0xff]
                  %2403 = vst [vmem:[%s2355 + $0xe0] sm:$0xff] %v2402
                  %v2404 = vld [vmem:[%s2354 + $0xc0] sm:$0xff]
                  %2405 = vst [vmem:[%s2355 + $0xf0] sm:$0xff] %v2404
                  %v2406 = vld [vmem:[%s2354 + $0xc8] sm:$0xff]
                  %2407 = vst [vmem:[%s2355 + $0xf8] sm:$0xff] %v2406
                  %v2408 = vld [vmem:[%s2354 + $0xd0] sm:$0xff]
                  %2409 = vst [vmem:[%s2355 + $0x100] sm:$0xff] %v2408
                  %v2410 = vld [vmem:[%s2354 + $0xd8] sm:$0xff]
                  %2411 = vst [vmem:[%s2355 + $0x108] sm:$0xff] %v2410
                  %v2412 = vld [vmem:[%s2354 + $0xe0] sm:$0xff]
                  %2413 = vst [vmem:[%s2355 + $0x118] sm:$0xff] %v2412
                  %v2414 = vld [vmem:[%s2354 + $0xe8] sm:$0xff]
                  %2415 = vst [vmem:[%s2355 + $0x120] sm:$0xff] %v2414
                  %v2416 = vld [vmem:[%s2354 + $0xf0] sm:$0xff]
                  %2417 = vst [vmem:[%s2355 + $0x128] sm:$0xff] %v2416
                  %v2418 = vld [vmem:[%s2354 + $0xf8] sm:$0xff]
                  %2419 = vst [vmem:[%s2355 + $0x130] sm:$0xff] %v2418
                  %v2420 = vld [vmem:[%s2354 + $0x100] sm:$0xff]
                  %2421 = vst [vmem:[%s2355 + $0x140] sm:$0xff] %v2420
                  %v2422 = vld [vmem:[%s2354 + $0x108] sm:$0xff]
                  %2423 = vst [vmem:[%s2355 + $0x148] sm:$0xff] %v2422
                  %v2424 = vld [vmem:[%s2354 + $0x110] sm:$0xff]
                  %2425 = vst [vmem:[%s2355 + $0x150] sm:$0xff] %v2424
                  %v2426 = vld [vmem:[%s2354 + $0x118] sm:$0xff]
                  %2427 = vst [vmem:[%s2355 + $0x158] sm:$0xff] %v2426
                  %v2428 = vld [vmem:[%s2354 + $0x120] sm:$0xff]
                  %2429 = vst [vmem:[%s2355 + $0x168] sm:$0xff] %v2428
                  %v2430 = vld [vmem:[%s2354 + $0x128] sm:$0xff]
                  %2431 = vst [vmem:[%s2355 + $0x170] sm:$0xff] %v2430
                  %v2432 = vld [vmem:[%s2354 + $0x130] sm:$0xff]
                  %2433 = vst [vmem:[%s2355 + $0x178] sm:$0xff] %v2432
                  %v2434 = vld [vmem:[%s2354 + $0x138] sm:$0xff]
                  %2435 = vst [vmem:[%s2355 + $0x180] sm:$0xff] %v2434
                  %v2436 = vld [vmem:[%s2354 + $0x140] sm:$0xff]
                  %2437 = vst [vmem:[%s2355 + $0x190] sm:$0xff] %v2436
                  %v2438 = vld [vmem:[%s2354 + $0x148] sm:$0xff]
                  %2439 = vst [vmem:[%s2355 + $0x198] sm:$0xff] %v2438
                  %v2440 = vld [vmem:[%s2354 + $0x150] sm:$0xff]
                  %2441 = vst [vmem:[%s2355 + $0x1a0] sm:$0xff] %v2440
                  %v2442 = vld [vmem:[%s2354 + $0x158] sm:$0xff]
                  %2443 = vst [vmem:[%s2355 + $0x1a8] sm:$0xff] %v2442
                  %v2444 = vld [vmem:[%s2354 + $0x160] sm:$0xff]
                  %2445 = vst [vmem:[%s2355 + $0x1b8] sm:$0xff] %v2444
                  %v2446 = vld [vmem:[%s2354 + $0x168] sm:$0xff]
                  %2447 = vst [vmem:[%s2355 + $0x1c0] sm:$0xff] %v2446
                  %v2448 = vld [vmem:[%s2354 + $0x170] sm:$0xff]
                  %2449 = vst [vmem:[%s2355 + $0x1c8] sm:$0xff] %v2448
                  %v2450 = vld [vmem:[%s2354 + $0x178] sm:$0xff]
                  %2451 = vst [vmem:[%s2355 + $0x1d0] sm:$0xff] %v2450
                  %v2452 = vld [vmem:[%s2354 + $0x180] sm:$0xff]
                  %2453 = vst [vmem:[%s2355 + $0x1e0] sm:$0xff] %v2452
                  %v2454 = vld [vmem:[%s2354 + $0x188] sm:$0xff]
                  %2455 = vst [vmem:[%s2355 + $0x1e8] sm:$0xff] %v2454
                  %v2456 = vld [vmem:[%s2354 + $0x190] sm:$0xff]
                  %2457 = vst [vmem:[%s2355 + $0x1f0] sm:$0xff] %v2456
                  %v2458 = vld [vmem:[%s2354 + $0x198] sm:$0xff]
                  %2459 = vst [vmem:[%s2355 + $0x1f8] sm:$0xff] %v2458
                  %v2460 = vld [vmem:[%s2354 + $0x1a0] sm:$0xff]
                  %2461 = vst [vmem:[%s2355 + $0x208] sm:$0xff] %v2460
                  %v2462 = vld [vmem:[%s2354 + $0x1a8] sm:$0xff]
                  %2463 = vst [vmem:[%s2355 + $0x210] sm:$0xff] %v2462
                  %v2464 = vld [vmem:[%s2354 + $0x1b0] sm:$0xff]
                  %2465 = vst [vmem:[%s2355 + $0x218] sm:$0xff] %v2464
                  %v2466 = vld [vmem:[%s2354 + $0x1b8] sm:$0xff]
                  %2467 = vst [vmem:[%s2355 + $0x220] sm:$0xff] %v2466
                  %v2468 = vld [vmem:[%s2354 + $0x1c0] sm:$0xff]
                  %2469 = vst [vmem:[%s2355 + $0x230] sm:$0xff] %v2468
                  %v2470 = vld [vmem:[%s2354 + $0x1c8] sm:$0xff]
                  %2471 = vst [vmem:[%s2355 + $0x238] sm:$0xff] %v2470
                  %v2472 = vld [vmem:[%s2354 + $0x1d0] sm:$0xff]
                  %2473 = vst [vmem:[%s2355 + $0x240] sm:$0xff] %v2472
                  %v2474 = vld [vmem:[%s2354 + $0x1d8] sm:$0xff]
                  %2475 = vst [vmem:[%s2355 + $0x248] sm:$0xff] %v2474
                  %v2476 = vld [vmem:[%s2354 + $0x1e0] sm:$0xff]
                  %2477 = vst [vmem:[%s2355 + $0x258] sm:$0xff] %v2476
                  %v2478 = vld [vmem:[%s2354 + $0x1e8] sm:$0xff]
                  %2479 = vst [vmem:[%s2355 + $0x260] sm:$0xff] %v2478
                  %v2480 = vld [vmem:[%s2354 + $0x1f0] sm:$0xff]
                  %2481 = vst [vmem:[%s2355 + $0x268] sm:$0xff] %v2480
                  %v2482 = vld [vmem:[%s2354 + $0x1f8] sm:$0xff]
                  %2483 = vst [vmem:[%s2355 + $0x270] sm:$0xff] %v2482
                  %s2484 = sadd.s32 1, %s2353
                  %p2485 = scmp.ge.s32.totalorder %s2484, %s2344
                  %s2486 = scalar_select %p2485, 0, %s2484
                  %s2487 = smul.u32 %s2486, 32
                  %s2488 = smul.u32 %s2486, 32
                  %s2489 = scalar_lea.vmem %s2272, %s2487 [#allocation3]
                  %s2490 = scalar_lea.vmem %s2285, %s2488
                $region138: #{tpu_custom_call.1} parent=132 // loop_footer
                  %s2350 = sadd.s32 %s2348, 1
                $region139: #{tpu_custom_call.1} parent=132 // loop_footer_branch
                  %2347 = sbr.rel target = $region135
                $region140: #{tpu_custom_call.1} parent=132 // loop_exit
                  _
                %s2491 = sshrl.u32 %s2343, 2
                %s2492 = sand.u32 %s2343, 3
                %s2493 = smul.u32 %s2491, 4
                %s2494 = smul.u32 128, %s2493
                %s2495 = sshra.s32 %s2494, 4
                %s2496 = scalar_lea.vmem %s2272, %s2495 [#allocation3]
                %s2497 = smul.u32 128, %s2493
                %s2498 = sshra.s32 %s2497, 4
                %s2499 = scalar_lea.vmem %s2285, %s2498
                // While loop
                $region141: #{tpu_custom_call.1} parent=132 // loop_pre_header
                  _
                $region142: #{tpu_custom_call.1} parent=132 // loop_header
                  %s2503 = sphi 0, %s2505
                  %p2504 = scmp.ge.s32.totalorder %s2503, %s2492
                  %s2508 = sphi 0, %s2545
                  %s2509 = sphi %s2496, %s2548
                  %s2510 = sphi %s2499, %s2549
                $region143: #{tpu_custom_call.1} parent=132 // loop_header_branch
                  %2507 = sbr.rel (%p2504) target = $region147
                $region144: #{tpu_custom_call.1} parent=132 // loop_body
                  %v2511 = vld [vmem:[%s2509] sm:$0xff]
                  %2512 = vst [vmem:[%s2510] sm:$0xff] %v2511
                  %v2513 = vld [vmem:[%s2509 + $0x20] sm:$0xff]
                  %2514 = vst [vmem:[%s2510 + $0x28] sm:$0xff] %v2513
                  %v2515 = vld [vmem:[%s2509 + $0x40] sm:$0xff]
                  %2516 = vst [vmem:[%s2510 + $0x50] sm:$0xff] %v2515
                  %v2517 = vld [vmem:[%s2509 + $0x60] sm:$0xff]
                  %2518 = vst [vmem:[%s2510 + $0x78] sm:$0xff] %v2517
                  %v2519 = vld [vmem:[%s2509 + $0x80] sm:$0xff]
                  %2520 = vst [vmem:[%s2510 + $0xa0] sm:$0xff] %v2519
                  %v2521 = vld [vmem:[%s2509 + $0xa0] sm:$0xff]
                  %2522 = vst [vmem:[%s2510 + $0xc8] sm:$0xff] %v2521
                  %v2523 = vld [vmem:[%s2509 + $0xc0] sm:$0xff]
                  %2524 = vst [vmem:[%s2510 + $0xf0] sm:$0xff] %v2523
                  %v2525 = vld [vmem:[%s2509 + $0xe0] sm:$0xff]
                  %2526 = vst [vmem:[%s2510 + $0x118] sm:$0xff] %v2525
                  %v2527 = vld [vmem:[%s2509 + $0x100] sm:$0xff]
                  %2528 = vst [vmem:[%s2510 + $0x140] sm:$0xff] %v2527
                  %v2529 = vld [vmem:[%s2509 + $0x120] sm:$0xff]
                  %2530 = vst [vmem:[%s2510 + $0x168] sm:$0xff] %v2529
                  %v2531 = vld [vmem:[%s2509 + $0x140] sm:$0xff]
                  %2532 = vst [vmem:[%s2510 + $0x190] sm:$0xff] %v2531
                  %v2533 = vld [vmem:[%s2509 + $0x160] sm:$0xff]
                  %2534 = vst [vmem:[%s2510 + $0x1b8] sm:$0xff] %v2533
                  %v2535 = vld [vmem:[%s2509 + $0x180] sm:$0xff]
                  %2536 = vst [vmem:[%s2510 + $0x1e0] sm:$0xff] %v2535
                  %v2537 = vld [vmem:[%s2509 + $0x1a0] sm:$0xff]
                  %2538 = vst [vmem:[%s2510 + $0x208] sm:$0xff] %v2537
                  %v2539 = vld [vmem:[%s2509 + $0x1c0] sm:$0xff]
                  %2540 = vst [vmem:[%s2510 + $0x230] sm:$0xff] %v2539
                  %v2541 = vld [vmem:[%s2509 + $0x1e0] sm:$0xff]
                  %2542 = vst [vmem:[%s2510 + $0x258] sm:$0xff] %v2541
                  %s2543 = sadd.s32 1, %s2508
                  %p2544 = scmp.ge.s32.totalorder %s2543, %s2492
                  %s2545 = scalar_select %p2544, 0, %s2543
                  %s2546 = smul.u32 %s2545, 8
                  %s2547 = smul.u32 %s2545, 8
                  %s2548 = scalar_lea.vmem %s2496, %s2546 [#allocation3]
                  %s2549 = scalar_lea.vmem %s2499, %s2547
                $region145: #{tpu_custom_call.1} parent=132 // loop_footer
                  %s2505 = sadd.s32 %s2503, 1
                $region146: #{tpu_custom_call.1} parent=132 // loop_footer_branch
                  %2502 = sbr.rel target = $region142
                $region147: #{tpu_custom_call.1} parent=132 // loop_exit
                  _
              $region133: #{tpu_custom_call.1} parent=117 // pred_fallthru
                _
              %p2550 = pneg %p2339
              // Predicated region
              $region148: #{tpu_custom_call.1} parent=117 // pred_check
                _
              $region149: #{tpu_custom_call.1} parent=117 // pred_check_branch
                %2552 = sbr.rel (%p2339) target = $region151
              $region150: #{tpu_custom_call.1} parent=117 // pred_region
                %s2553 = sand.u32 %s2286, 7
                %s2554 = ssub.s32 %s2286, %s2553
                %s2555 = scalar_lea.vmem %s2272, %s2554 [#allocation3]
                %s2556 = ssub.s32 %s2286, %s2553
                %s2557 = scalar_lea.vmem %s2285, %s2556
                %s2558 = sshrl.u32 %s2286, 3
                %s2559 = sshrl.u32 %s2558, 2
                // While loop
                $region152: #{tpu_custom_call.1} parent=150 // loop_pre_header
                  _
                $region153: #{tpu_custom_call.1} parent=150 // loop_header
                  %s2563 = sphi 0, %s2565
                  %p2564 = scmp.ge.s32.totalorder %s2563, %s2559
                  %s2568 = sphi 0, %s2701
                  %s2569 = sphi %s2272, %s2704
                  %s2570 = sphi %s2285, %s2705
                $region154: #{tpu_custom_call.1} parent=150 // loop_header_branch
                  %2567 = sbr.rel (%p2564) target = $region158
                $region155: #{tpu_custom_call.1} parent=150 // loop_body
                  %v2571 = vld [vmem:[%s2569] sm:$0xff]
                  %2572 = vst [vmem:[%s2570] sm:$0xff] %v2571
                  %v2573 = vld [vmem:[%s2569 + $0x8] sm:$0xff]
                  %2574 = vst [vmem:[%s2570 + $0x8] sm:$0xff] %v2573
                  %v2575 = vld [vmem:[%s2569 + $0x10] sm:$0xff]
                  %2576 = vst [vmem:[%s2570 + $0x10] sm:$0xff] %v2575
                  %v2577 = vld [vmem:[%s2569 + $0x18] sm:$0xff]
                  %2578 = vst [vmem:[%s2570 + $0x18] sm:$0xff] %v2577
                  %v2579 = vld [vmem:[%s2569 + $0x20] sm:$0xff]
                  %2580 = vst [vmem:[%s2570 + $0x28] sm:$0xff] %v2579
                  %v2581 = vld [vmem:[%s2569 + $0x28] sm:$0xff]
                  %2582 = vst [vmem:[%s2570 + $0x30] sm:$0xff] %v2581
                  %v2583 = vld [vmem:[%s2569 + $0x30] sm:$0xff]
                  %2584 = vst [vmem:[%s2570 + $0x38] sm:$0xff] %v2583
                  %v2585 = vld [vmem:[%s2569 + $0x38] sm:$0xff]
                  %2586 = vst [vmem:[%s2570 + $0x40] sm:$0xff] %v2585
                  %v2587 = vld [vmem:[%s2569 + $0x40] sm:$0xff]
                  %2588 = vst [vmem:[%s2570 + $0x50] sm:$0xff] %v2587
                  %v2589 = vld [vmem:[%s2569 + $0x48] sm:$0xff]
                  %2590 = vst [vmem:[%s2570 + $0x58] sm:$0xff] %v2589
                  %v2591 = vld [vmem:[%s2569 + $0x50] sm:$0xff]
                  %2592 = vst [vmem:[%s2570 + $0x60] sm:$0xff] %v2591
                  %v2593 = vld [vmem:[%s2569 + $0x58] sm:$0xff]
                  %2594 = vst [vmem:[%s2570 + $0x68] sm:$0xff] %v2593
                  %v2595 = vld [vmem:[%s2569 + $0x60] sm:$0xff]
                  %2596 = vst [vmem:[%s2570 + $0x78] sm:$0xff] %v2595
                  %v2597 = vld [vmem:[%s2569 + $0x68] sm:$0xff]
                  %2598 = vst [vmem:[%s2570 + $0x80] sm:$0xff] %v2597
                  %v2599 = vld [vmem:[%s2569 + $0x70] sm:$0xff]
                  %2600 = vst [vmem:[%s2570 + $0x88] sm:$0xff] %v2599
                  %v2601 = vld [vmem:[%s2569 + $0x78] sm:$0xff]
                  %2602 = vst [vmem:[%s2570 + $0x90] sm:$0xff] %v2601
                  %v2603 = vld [vmem:[%s2569 + $0x80] sm:$0xff]
                  %2604 = vst [vmem:[%s2570 + $0xa0] sm:$0xff] %v2603
                  %v2605 = vld [vmem:[%s2569 + $0x88] sm:$0xff]
                  %2606 = vst [vmem:[%s2570 + $0xa8] sm:$0xff] %v2605
                  %v2607 = vld [vmem:[%s2569 + $0x90] sm:$0xff]
                  %2608 = vst [vmem:[%s2570 + $0xb0] sm:$0xff] %v2607
                  %v2609 = vld [vmem:[%s2569 + $0x98] sm:$0xff]
                  %2610 = vst [vmem:[%s2570 + $0xb8] sm:$0xff] %v2609
                  %v2611 = vld [vmem:[%s2569 + $0xa0] sm:$0xff]
                  %2612 = vst [vmem:[%s2570 + $0xc8] sm:$0xff] %v2611
                  %v2613 = vld [vmem:[%s2569 + $0xa8] sm:$0xff]
                  %2614 = vst [vmem:[%s2570 + $0xd0] sm:$0xff] %v2613
                  %v2615 = vld [vmem:[%s2569 + $0xb0] sm:$0xff]
                  %2616 = vst [vmem:[%s2570 + $0xd8] sm:$0xff] %v2615
                  %v2617 = vld [vmem:[%s2569 + $0xb8] sm:$0xff]
                  %2618 = vst [vmem:[%s2570 + $0xe0] sm:$0xff] %v2617
                  %v2619 = vld [vmem:[%s2569 + $0xc0] sm:$0xff]
                  %2620 = vst [vmem:[%s2570 + $0xf0] sm:$0xff] %v2619
                  %v2621 = vld [vmem:[%s2569 + $0xc8] sm:$0xff]
                  %2622 = vst [vmem:[%s2570 + $0xf8] sm:$0xff] %v2621
                  %v2623 = vld [vmem:[%s2569 + $0xd0] sm:$0xff]
                  %2624 = vst [vmem:[%s2570 + $0x100] sm:$0xff] %v2623
                  %v2625 = vld [vmem:[%s2569 + $0xd8] sm:$0xff]
                  %2626 = vst [vmem:[%s2570 + $0x108] sm:$0xff] %v2625
                  %v2627 = vld [vmem:[%s2569 + $0xe0] sm:$0xff]
                  %2628 = vst [vmem:[%s2570 + $0x118] sm:$0xff] %v2627
                  %v2629 = vld [vmem:[%s2569 + $0xe8] sm:$0xff]
                  %2630 = vst [vmem:[%s2570 + $0x120] sm:$0xff] %v2629
                  %v2631 = vld [vmem:[%s2569 + $0xf0] sm:$0xff]
                  %2632 = vst [vmem:[%s2570 + $0x128] sm:$0xff] %v2631
                  %v2633 = vld [vmem:[%s2569 + $0xf8] sm:$0xff]
                  %2634 = vst [vmem:[%s2570 + $0x130] sm:$0xff] %v2633
                  %v2635 = vld [vmem:[%s2569 + $0x100] sm:$0xff]
                  %2636 = vst [vmem:[%s2570 + $0x140] sm:$0xff] %v2635
                  %v2637 = vld [vmem:[%s2569 + $0x108] sm:$0xff]
                  %2638 = vst [vmem:[%s2570 + $0x148] sm:$0xff] %v2637
                  %v2639 = vld [vmem:[%s2569 + $0x110] sm:$0xff]
                  %2640 = vst [vmem:[%s2570 + $0x150] sm:$0xff] %v2639
                  %v2641 = vld [vmem:[%s2569 + $0x118] sm:$0xff]
                  %2642 = vst [vmem:[%s2570 + $0x158] sm:$0xff] %v2641
                  %v2643 = vld [vmem:[%s2569 + $0x120] sm:$0xff]
                  %2644 = vst [vmem:[%s2570 + $0x168] sm:$0xff] %v2643
                  %v2645 = vld [vmem:[%s2569 + $0x128] sm:$0xff]
                  %2646 = vst [vmem:[%s2570 + $0x170] sm:$0xff] %v2645
                  %v2647 = vld [vmem:[%s2569 + $0x130] sm:$0xff]
                  %2648 = vst [vmem:[%s2570 + $0x178] sm:$0xff] %v2647
                  %v2649 = vld [vmem:[%s2569 + $0x138] sm:$0xff]
                  %2650 = vst [vmem:[%s2570 + $0x180] sm:$0xff] %v2649
                  %v2651 = vld [vmem:[%s2569 + $0x140] sm:$0xff]
                  %2652 = vst [vmem:[%s2570 + $0x190] sm:$0xff] %v2651
                  %v2653 = vld [vmem:[%s2569 + $0x148] sm:$0xff]
                  %2654 = vst [vmem:[%s2570 + $0x198] sm:$0xff] %v2653
                  %v2655 = vld [vmem:[%s2569 + $0x150] sm:$0xff]
                  %2656 = vst [vmem:[%s2570 + $0x1a0] sm:$0xff] %v2655
                  %v2657 = vld [vmem:[%s2569 + $0x158] sm:$0xff]
                  %2658 = vst [vmem:[%s2570 + $0x1a8] sm:$0xff] %v2657
                  %v2659 = vld [vmem:[%s2569 + $0x160] sm:$0xff]
                  %2660 = vst [vmem:[%s2570 + $0x1b8] sm:$0xff] %v2659
                  %v2661 = vld [vmem:[%s2569 + $0x168] sm:$0xff]
                  %2662 = vst [vmem:[%s2570 + $0x1c0] sm:$0xff] %v2661
                  %v2663 = vld [vmem:[%s2569 + $0x170] sm:$0xff]
                  %2664 = vst [vmem:[%s2570 + $0x1c8] sm:$0xff] %v2663
                  %v2665 = vld [vmem:[%s2569 + $0x178] sm:$0xff]
                  %2666 = vst [vmem:[%s2570 + $0x1d0] sm:$0xff] %v2665
                  %v2667 = vld [vmem:[%s2569 + $0x180] sm:$0xff]
                  %2668 = vst [vmem:[%s2570 + $0x1e0] sm:$0xff] %v2667
                  %v2669 = vld [vmem:[%s2569 + $0x188] sm:$0xff]
                  %2670 = vst [vmem:[%s2570 + $0x1e8] sm:$0xff] %v2669
                  %v2671 = vld [vmem:[%s2569 + $0x190] sm:$0xff]
                  %2672 = vst [vmem:[%s2570 + $0x1f0] sm:$0xff] %v2671
                  %v2673 = vld [vmem:[%s2569 + $0x198] sm:$0xff]
                  %2674 = vst [vmem:[%s2570 + $0x1f8] sm:$0xff] %v2673
                  %v2675 = vld [vmem:[%s2569 + $0x1a0] sm:$0xff]
                  %2676 = vst [vmem:[%s2570 + $0x208] sm:$0xff] %v2675
                  %v2677 = vld [vmem:[%s2569 + $0x1a8] sm:$0xff]
                  %2678 = vst [vmem:[%s2570 + $0x210] sm:$0xff] %v2677
                  %v2679 = vld [vmem:[%s2569 + $0x1b0] sm:$0xff]
                  %2680 = vst [vmem:[%s2570 + $0x218] sm:$0xff] %v2679
                  %v2681 = vld [vmem:[%s2569 + $0x1b8] sm:$0xff]
                  %2682 = vst [vmem:[%s2570 + $0x220] sm:$0xff] %v2681
                  %v2683 = vld [vmem:[%s2569 + $0x1c0] sm:$0xff]
                  %2684 = vst [vmem:[%s2570 + $0x230] sm:$0xff] %v2683
                  %v2685 = vld [vmem:[%s2569 + $0x1c8] sm:$0xff]
                  %2686 = vst [vmem:[%s2570 + $0x238] sm:$0xff] %v2685
                  %v2687 = vld [vmem:[%s2569 + $0x1d0] sm:$0xff]
                  %2688 = vst [vmem:[%s2570 + $0x240] sm:$0xff] %v2687
                  %v2689 = vld [vmem:[%s2569 + $0x1d8] sm:$0xff]
                  %2690 = vst [vmem:[%s2570 + $0x248] sm:$0xff] %v2689
                  %v2691 = vld [vmem:[%s2569 + $0x1e0] sm:$0xff]
                  %2692 = vst [vmem:[%s2570 + $0x258] sm:$0xff] %v2691
                  %v2693 = vld [vmem:[%s2569 + $0x1e8] sm:$0xff]
                  %2694 = vst [vmem:[%s2570 + $0x260] sm:$0xff] %v2693
                  %v2695 = vld [vmem:[%s2569 + $0x1f0] sm:$0xff]
                  %2696 = vst [vmem:[%s2570 + $0x268] sm:$0xff] %v2695
                  %v2697 = vld [vmem:[%s2569 + $0x1f8] sm:$0xff]
                  %2698 = vst [vmem:[%s2570 + $0x270] sm:$0xff] %v2697
                  %s2699 = sadd.s32 1, %s2568
                  %p2700 = scmp.ge.s32.totalorder %s2699, %s2559
                  %s2701 = scalar_select %p2700, 0, %s2699
                  %s2702 = smul.u32 %s2701, 32
                  %s2703 = smul.u32 %s2701, 32
                  %s2704 = scalar_lea.vmem %s2272, %s2702 [#allocation3]
                  %s2705 = scalar_lea.vmem %s2285, %s2703
                $region156: #{tpu_custom_call.1} parent=150 // loop_footer
                  %s2565 = sadd.s32 %s2563, 1
                $region157: #{tpu_custom_call.1} parent=150 // loop_footer_branch
                  %2562 = sbr.rel target = $region153
                $region158: #{tpu_custom_call.1} parent=150 // loop_exit
                  _
                %s2706 = sshrl.u32 %s2558, 2
                %s2707 = sand.u32 %s2558, 3
                %s2708 = smul.u32 %s2706, 4
                %s2709 = smul.u32 128, %s2708
                %s2710 = sshra.s32 %s2709, 4
                %s2711 = scalar_lea.vmem %s2272, %s2710 [#allocation3]
                %s2712 = smul.u32 128, %s2708
                %s2713 = sshra.s32 %s2712, 4
                %s2714 = scalar_lea.vmem %s2285, %s2713
                // While loop
                $region159: #{tpu_custom_call.1} parent=150 // loop_pre_header
                  _
                $region160: #{tpu_custom_call.1} parent=150 // loop_header
                  %s2718 = sphi 0, %s2720
                  %p2719 = scmp.ge.s32.totalorder %s2718, %s2707
                  %s2723 = sphi 0, %s2760
                  %s2724 = sphi %s2711, %s2763
                  %s2725 = sphi %s2714, %s2764
                $region161: #{tpu_custom_call.1} parent=150 // loop_header_branch
                  %2722 = sbr.rel (%p2719) target = $region165
                $region162: #{tpu_custom_call.1} parent=150 // loop_body
                  %v2726 = vld [vmem:[%s2724] sm:$0xff]
                  %2727 = vst [vmem:[%s2725] sm:$0xff] %v2726
                  %v2728 = vld [vmem:[%s2724 + $0x20] sm:$0xff]
                  %2729 = vst [vmem:[%s2725 + $0x28] sm:$0xff] %v2728
                  %v2730 = vld [vmem:[%s2724 + $0x40] sm:$0xff]
                  %2731 = vst [vmem:[%s2725 + $0x50] sm:$0xff] %v2730
                  %v2732 = vld [vmem:[%s2724 + $0x60] sm:$0xff]
                  %2733 = vst [vmem:[%s2725 + $0x78] sm:$0xff] %v2732
                  %v2734 = vld [vmem:[%s2724 + $0x80] sm:$0xff]
                  %2735 = vst [vmem:[%s2725 + $0xa0] sm:$0xff] %v2734
                  %v2736 = vld [vmem:[%s2724 + $0xa0] sm:$0xff]
                  %2737 = vst [vmem:[%s2725 + $0xc8] sm:$0xff] %v2736
                  %v2738 = vld [vmem:[%s2724 + $0xc0] sm:$0xff]
                  %2739 = vst [vmem:[%s2725 + $0xf0] sm:$0xff] %v2738
                  %v2740 = vld [vmem:[%s2724 + $0xe0] sm:$0xff]
                  %2741 = vst [vmem:[%s2725 + $0x118] sm:$0xff] %v2740
                  %v2742 = vld [vmem:[%s2724 + $0x100] sm:$0xff]
                  %2743 = vst [vmem:[%s2725 + $0x140] sm:$0xff] %v2742
                  %v2744 = vld [vmem:[%s2724 + $0x120] sm:$0xff]
                  %2745 = vst [vmem:[%s2725 + $0x168] sm:$0xff] %v2744
                  %v2746 = vld [vmem:[%s2724 + $0x140] sm:$0xff]
                  %2747 = vst [vmem:[%s2725 + $0x190] sm:$0xff] %v2746
                  %v2748 = vld [vmem:[%s2724 + $0x160] sm:$0xff]
                  %2749 = vst [vmem:[%s2725 + $0x1b8] sm:$0xff] %v2748
                  %v2750 = vld [vmem:[%s2724 + $0x180] sm:$0xff]
                  %2751 = vst [vmem:[%s2725 + $0x1e0] sm:$0xff] %v2750
                  %v2752 = vld [vmem:[%s2724 + $0x1a0] sm:$0xff]
                  %2753 = vst [vmem:[%s2725 + $0x208] sm:$0xff] %v2752
                  %v2754 = vld [vmem:[%s2724 + $0x1c0] sm:$0xff]
                  %2755 = vst [vmem:[%s2725 + $0x230] sm:$0xff] %v2754
                  %v2756 = vld [vmem:[%s2724 + $0x1e0] sm:$0xff]
                  %2757 = vst [vmem:[%s2725 + $0x258] sm:$0xff] %v2756
                  %s2758 = sadd.s32 1, %s2723
                  %p2759 = scmp.ge.s32.totalorder %s2758, %s2707
                  %s2760 = scalar_select %p2759, 0, %s2758
                  %s2761 = smul.u32 %s2760, 8
                  %s2762 = smul.u32 %s2760, 8
                  %s2763 = scalar_lea.vmem %s2711, %s2761 [#allocation3]
                  %s2764 = scalar_lea.vmem %s2714, %s2762
                $region163: #{tpu_custom_call.1} parent=150 // loop_footer
                  %s2720 = sadd.s32 %s2718, 1
                $region164: #{tpu_custom_call.1} parent=150 // loop_footer_branch
                  %2717 = sbr.rel target = $region160
                $region165: #{tpu_custom_call.1} parent=150 // loop_exit
                  _
                %s2765 = sshllo.u32 0, %s2553
                loop: start=0, step=1, limit=1
                $region166: #{tpu_custom_call.1} parent=150 // loop_pre_header
                  _
                $region167: #{tpu_custom_call.1} parent=150 // loop_header
                  %s2767 = sphi 0, %s2771
                  %p2768 = scmp.ge.s32.totalorder %s2767, 1
                  %s2772 = sphi %s2555, %s2555
                  %s2773 = sphi %s2557, %s2557
                $region168: #{tpu_custom_call.1} parent=150 // loop_header_branch
                  %2770 = sbr.rel (%p2768) target = $region172
                $region169: #{tpu_custom_call.1} parent=150 // loop_body
                  %v2774 = vld [vmem:[%s2772] sm:%s2765]
                  %2775 = vst [vmem:[%s2773] sm:%s2765] %v2774
                  %v2776 = vld [vmem:[%s2772 + $0x20] sm:%s2765]
                  %2777 = vst [vmem:[%s2773 + $0x28] sm:%s2765] %v2776
                  %v2778 = vld [vmem:[%s2772 + $0x40] sm:%s2765]
                  %2779 = vst [vmem:[%s2773 + $0x50] sm:%s2765] %v2778
                  %v2780 = vld [vmem:[%s2772 + $0x60] sm:%s2765]
                  %2781 = vst [vmem:[%s2773 + $0x78] sm:%s2765] %v2780
                  %v2782 = vld [vmem:[%s2772 + $0x80] sm:%s2765]
                  %2783 = vst [vmem:[%s2773 + $0xa0] sm:%s2765] %v2782
                  %v2784 = vld [vmem:[%s2772 + $0xa0] sm:%s2765]
                  %2785 = vst [vmem:[%s2773 + $0xc8] sm:%s2765] %v2784
                  %v2786 = vld [vmem:[%s2772 + $0xc0] sm:%s2765]
                  %2787 = vst [vmem:[%s2773 + $0xf0] sm:%s2765] %v2786
                  %v2788 = vld [vmem:[%s2772 + $0xe0] sm:%s2765]
                  %2789 = vst [vmem:[%s2773 + $0x118] sm:%s2765] %v2788
                  %v2790 = vld [vmem:[%s2772 + $0x100] sm:%s2765]
                  %2791 = vst [vmem:[%s2773 + $0x140] sm:%s2765] %v2790
                  %v2792 = vld [vmem:[%s2772 + $0x120] sm:%s2765]
                  %2793 = vst [vmem:[%s2773 + $0x168] sm:%s2765] %v2792
                  %v2794 = vld [vmem:[%s2772 + $0x140] sm:%s2765]
                  %2795 = vst [vmem:[%s2773 + $0x190] sm:%s2765] %v2794
                  %v2796 = vld [vmem:[%s2772 + $0x160] sm:%s2765]
                  %2797 = vst [vmem:[%s2773 + $0x1b8] sm:%s2765] %v2796
                  %v2798 = vld [vmem:[%s2772 + $0x180] sm:%s2765]
                  %2799 = vst [vmem:[%s2773 + $0x1e0] sm:%s2765] %v2798
                  %v2800 = vld [vmem:[%s2772 + $0x1a0] sm:%s2765]
                  %2801 = vst [vmem:[%s2773 + $0x208] sm:%s2765] %v2800
                  %v2802 = vld [vmem:[%s2772 + $0x1c0] sm:%s2765]
                  %2803 = vst [vmem:[%s2773 + $0x230] sm:%s2765] %v2802
                  %v2804 = vld [vmem:[%s2772 + $0x1e0] sm:%s2765]
                  %2805 = vst [vmem:[%s2773 + $0x258] sm:%s2765] %v2804
                $region170: #{tpu_custom_call.1} parent=150 // loop_footer
                  %s2771 = sadd.s32 1, %s2767
                $region171: #{tpu_custom_call.1} parent=150 // loop_footer_branch
                  %2766 = sbr.rel target = $region167
                $region172: #{tpu_custom_call.1} parent=150 // loop_exit
                  _
              $region151: #{tpu_custom_call.1} parent=117 // pred_fallthru
                _
            $region118: #{tpu_custom_call.1} parent=113 // pred_fallthru
              _
            // Predicated region
            $region119: #{tpu_custom_call.1} parent=113 // pred_check
              %p2294 = pneg %p2290
            $region120: #{tpu_custom_call.1} parent=113 // pred_check_branch
              %2296 = sbr.rel (%p2294) target = $region122
            $region121: #{tpu_custom_call.1} parent=113 // pred_region
              %s2297 = sshllo.u32 0, %s2286
              loop: start=0, step=1, limit=1
              $region123: #{tpu_custom_call.1} parent=121 // loop_pre_header
                _
              $region124: #{tpu_custom_call.1} parent=121 // loop_header
                %s2299 = sphi 0, %s2303
                %p2300 = scmp.ge.s32.totalorder %s2299, 1
                %s2304 = sphi %s2272, %s2272
                %s2305 = sphi %s2285, %s2285
              $region125: #{tpu_custom_call.1} parent=121 // loop_header_branch
                %2302 = sbr.rel (%p2300) target = $region129
              $region126: #{tpu_custom_call.1} parent=121 // loop_body
                %v2306 = vld [vmem:[%s2304] sm:%s2297]
                %2307 = vst [vmem:[%s2305] sm:%s2297] %v2306
                %v2308 = vld [vmem:[%s2304 + $0x20] sm:%s2297]
                %2309 = vst [vmem:[%s2305 + $0x28] sm:%s2297] %v2308
                %v2310 = vld [vmem:[%s2304 + $0x40] sm:%s2297]
                %2311 = vst [vmem:[%s2305 + $0x50] sm:%s2297] %v2310
                %v2312 = vld [vmem:[%s2304 + $0x60] sm:%s2297]
                %2313 = vst [vmem:[%s2305 + $0x78] sm:%s2297] %v2312
                %v2314 = vld [vmem:[%s2304 + $0x80] sm:%s2297]
                %2315 = vst [vmem:[%s2305 + $0xa0] sm:%s2297] %v2314
                %v2316 = vld [vmem:[%s2304 + $0xa0] sm:%s2297]
                %2317 = vst [vmem:[%s2305 + $0xc8] sm:%s2297] %v2316
                %v2318 = vld [vmem:[%s2304 + $0xc0] sm:%s2297]
                %2319 = vst [vmem:[%s2305 + $0xf0] sm:%s2297] %v2318
                %v2320 = vld [vmem:[%s2304 + $0xe0] sm:%s2297]
                %2321 = vst [vmem:[%s2305 + $0x118] sm:%s2297] %v2320
                %v2322 = vld [vmem:[%s2304 + $0x100] sm:%s2297]
                %2323 = vst [vmem:[%s2305 + $0x140] sm:%s2297] %v2322
                %v2324 = vld [vmem:[%s2304 + $0x120] sm:%s2297]
                %2325 = vst [vmem:[%s2305 + $0x168] sm:%s2297] %v2324
                %v2326 = vld [vmem:[%s2304 + $0x140] sm:%s2297]
                %2327 = vst [vmem:[%s2305 + $0x190] sm:%s2297] %v2326
                %v2328 = vld [vmem:[%s2304 + $0x160] sm:%s2297]
                %2329 = vst [vmem:[%s2305 + $0x1b8] sm:%s2297] %v2328
                %v2330 = vld [vmem:[%s2304 + $0x180] sm:%s2297]
                %2331 = vst [vmem:[%s2305 + $0x1e0] sm:%s2297] %v2330
                %v2332 = vld [vmem:[%s2304 + $0x1a0] sm:%s2297]
                %2333 = vst [vmem:[%s2305 + $0x208] sm:%s2297] %v2332
                %v2334 = vld [vmem:[%s2304 + $0x1c0] sm:%s2297]
                %2335 = vst [vmem:[%s2305 + $0x230] sm:%s2297] %v2334
                %v2336 = vld [vmem:[%s2304 + $0x1e0] sm:%s2297]
                %2337 = vst [vmem:[%s2305 + $0x258] sm:%s2297] %v2336
              $region127: #{tpu_custom_call.1} parent=121 // loop_footer
                %s2303 = sadd.s32 1, %s2299
              $region128: #{tpu_custom_call.1} parent=121 // loop_footer_branch
                %2298 = sbr.rel target = $region124
              $region129: #{tpu_custom_call.1} parent=121 // loop_exit
                _
            $region122: #{tpu_custom_call.1} parent=113 // pred_fallthru
              _
          $region114: #{tpu_custom_call.1} parent=109 // pred_fallthru
            _
          %2806 = vnop
        $region110: #{tpu_custom_call.1} parent=101 // pred_fallthru
          _
      $region102: #{tpu_custom_call.1} parent=5 // pred_fallthru
        _
      %p2807 = scmp.le.s32.totalorder 2, %s11
      // Predicated region
      $region173: #{tpu_custom_call.1} parent=5 // pred_check
        %p2808 = pneg %p2807
      $region174: #{tpu_custom_call.1} parent=5 // pred_check_branch
        %2810 = sbr.rel (%p2808) target = $region176
      $region175: #{tpu_custom_call.1} parent=5 // pred_region
        %s2811 = ssub.s32 %s11, 2
        // Predicated region
        $region177: #{tpu_custom_call.1} parent=175 // pred_check
          %p2812 = pneg %p166
        $region178: #{tpu_custom_call.1} parent=175 // pred_check_branch
          %2814 = sbr.rel (%p2812) target = $region180
        $region179: #{tpu_custom_call.1} parent=175 // pred_region
          %s2815 = sand.u32 %s151, 1
          %s2816 = sand.u32 %s151, 1
          %s2817 = smul.addr %s2816, 512
          %s2818 = scalar_lea.vmem [#allocation3], %s2817
        $region180: #{tpu_custom_call.1} parent=175 // pred_fallthru
          _
      $region176: #{tpu_custom_call.1} parent=5 // pred_fallthru
        _
    $region6: #{tpu_custom_call.1} parent=1 // loop_footer
      %s15 = sadd.s32 1, %s11
    $region7: #{tpu_custom_call.1} parent=1 // loop_footer_branch
      %10 = sbr.rel target = $region3
    $region8: #{tpu_custom_call.1} parent=1 // loop_exit
      _

</llo_original>
